<compile_context>
chip_gen: v6e
topology: v6e:2x2x1
jax: 0.10.0
libtpu: 0.0.40
codegen_flags: <defaults>
</compile_context>

<pallas_src>
import jax
import jax.numpy as jnp
import numpy as np
from jax.experimental import pallas as pl
from jax.experimental.pallas import tpu as pltpu

Z_DIM = 64
DIM = 2000
OUT_DIM = 2

DIM_PAD = 2048      # next multiple of 128 >= 2000
OUT_PAD = 8         # tiny pad for the 2-wide head (full-array lane dim)
PANEL = 512         # column-panel width streamed for layers 2 and 3
NP = DIM_PAD // PANEL
M_TILE = 128        # batch tile once the batch grows past this


def _gen_kernel(x_ref, w1_ref, b1_ref, w23_ref, b23_ref, w4_ref, b4_ref,
                o_ref, h_a, h_b):
    """Fused 4-layer MLP.

    Grid = (batch_tile, l in {0,1}, p in [0, NP)).  Step (i, l, p) computes
    column panel p of layer l+2; layer 1 runs at (l, p) == (0, 0) and layer 4
    at the last step of each batch tile.  w23_ref / b23_ref are the
    BlockSpec-pipelined (2048, PANEL) weight panel and its bias slice.
    Activations ping-pong between h_a and h_b (f32 VMEM scratch).
    """
    l = pl.program_id(1)
    p = pl.program_id(2)

    # ---- Layer 1 (once per batch tile): h_a = relu(x @ w1 + b1) -------------
    @pl.when(jnp.logical_and(l == 0, p == 0))
    def _():
        a = jnp.dot(x_ref[...].astype(jnp.bfloat16), w1_ref[...],
                    preferred_element_type=jnp.float32)
        h_a[...] = jnp.maximum(a + b1_ref[...], 0.0)

    # ---- Layers 2/3: one PANEL-wide column panel per grid step --------------
    # l == 0: read h_a (layer-1 output), write panels of h_b.
    # l == 1: read h_b (layer-2 output), write panels of h_a.
    src = jnp.where(l == 0, h_a[...], h_b[...])
    acc = jnp.dot(src.astype(jnp.bfloat16), w23_ref[...],
                  preferred_element_type=jnp.float32)
    v = jnp.maximum(acc + b23_ref[...], 0.0)

    # Static, lane-aligned panel stores selected by pl.when (no dynamic
    # lane-dim slicing).
    for layer, dst in ((0, h_b), (1, h_a)):
        for q in range(NP):
            @pl.when(jnp.logical_and(l == layer, p == q))
            def _(dst=dst, q=q):
                dst[:, q * PANEL:(q + 1) * PANEL] = v

    # ---- Layer 4 (after the last layer-3 panel): out = h3 @ w4 + b4 ---------
    @pl.when(jnp.logical_and(l == 1, p == NP - 1))
    def _():
        out = jnp.dot(h_a[...].astype(jnp.bfloat16), w4_ref[...],
                      preferred_element_type=jnp.float32)
        o_ref[...] = (out + b4_ref[...]).astype(o_ref.dtype)


def gen_forward_pallas(noise, packed):
    """Pallas forward pass.  noise: (B, 64) f32 -> (B, 2) f32."""
    M, K = noise.shape
    assert K == Z_DIM

    # Pad the batch to a sublane multiple; tile it only if it is large.
    if M <= M_TILE:
        m_pad = max(8, -(-M // 8) * 8)
        tm = m_pad
    else:
        m_pad = -(-M // M_TILE) * M_TILE
        tm = M_TILE
    x = noise if m_pad == M else jnp.pad(noise, ((0, m_pad - M), (0, 0)))

    # Small arrays stay VMEM-resident for the whole call; w2/w3 are streamed.
    vmem = pl.BlockSpec(memory_space=pltpu.MemorySpace.VMEM)

    out = pl.pallas_call(
        _gen_kernel,
        out_shape=jax.ShapeDtypeStruct((m_pad, OUT_PAD), jnp.float32),
        grid_spec=pltpu.PrefetchScalarGridSpec(
            num_scalar_prefetch=0,
            grid=(m_pad // tm, 2, NP),
            in_specs=[
                pl.BlockSpec((tm, Z_DIM), lambda i, l, p: (i, 0)),   # x
                vmem,                                                # w1 (bf16)
                vmem,                                                # b1 (f32)
                # Stacked w2/w3, streamed as (2048, PANEL) column panels;
                # Pallas double-buffers the DMA so it overlaps the MXU work.
                pl.BlockSpec((None, DIM_PAD, PANEL),
                             lambda i, l, p: (l, 0, p)),             # w23 (bf16)
                pl.BlockSpec((None, 1, PANEL),
                             lambda i, l, p: (l, 0, p)),             # b23 (f32)
                vmem,                                                # w4 (bf16)
                vmem,                                                # b4 (f32)
            ],
            out_specs=pl.BlockSpec((tm, OUT_PAD), lambda i, l, p: (i, 0)),
            scratch_shapes=[
                pltpu.VMEM((tm, DIM_PAD), jnp.float32),   # h_a
                pltpu.VMEM((tm, DIM_PAD), jnp.float32),   # h_b
            ],
        ),
        compiler_params=pltpu.CompilerParams(
            # Layers/panels are sequential; batch-parallel megacore would just
            # duplicate the weight stream at small M, so keep it arbitrary.
            dimension_semantics=("arbitrary", "arbitrary", "arbitrary"),
            # ~5 MiB actually used (2 MiB panel x 2 buffers + residents +
            # scratch); 32 MiB clears v5e/v6e scoped defaults and leaves
            # headroom on v7x's 64 MiB physical VMEM.
            vmem_limit_bytes=32 * 1024 * 1024,
        ),
    )(x, packed["w1"], packed["b1"], packed["w23"], packed["b23"],
      packed["w4"], packed["b4"])

    return out[:M, :OUT_DIM]


gen_forward = jax.jit(gen_forward_pallas)


# ----------------------------- parameters -----------------------------------

def _init_linear(key, fan_in, fan_out):
    """PyTorch nn.Linear default init: U(-1/sqrt(fan_in), 1/sqrt(fan_in))."""
    kw, kb = jax.random.split(key)
    bound = 1.0 / np.sqrt(fan_in)
    # stored as (in_features, out_features) so forward is x @ w + b.
    w = jax.random.uniform(kw, (fan_in, fan_out), jnp.float32, -bound, bound)
    b = jax.random.uniform(kb, (fan_out,), jnp.float32, -bound, bound)
    return w, b


def _pad2(a, rows, cols):
    return jnp.pad(a, ((0, rows - a.shape[0]), (0, cols - a.shape[1])))


def _pad_bias(a, n):
    return jnp.pad(a, (0, n - a.shape[0])).reshape(1, n)


def pack_params(params):
    """Pad / stack / bf16-cast the weights into the layout the kernel streams."""
    bf = jnp.bfloat16
    w2p = _pad2(params["w2"], DIM_PAD, DIM_PAD).astype(bf)
    w3p = _pad2(params["w3"], DIM_PAD, DIM_PAD).astype(bf)
    return dict(
        w1=_pad2(params["w1"], Z_DIM, DIM_PAD).astype(bf),
        b1=_pad_bias(params["b1"], DIM_PAD),
        w23=jnp.stack([w2p, w3p]),                              # (2,2048,2048) bf16
        b23=jnp.stack([_pad_bias(params["b2"], DIM_PAD),
                       _pad_bias(params["b3"], DIM_PAD)]),      # (2,1,2048) f32
        w4=_pad2(params["w4"], DIM_PAD, OUT_PAD).astype(bf),
        b4=_pad_bias(params["b4"], OUT_PAD),
    )


def init_gen_params(key):
    k1, k2, k3, k4 = jax.random.split(key, 4)
    w1, b1 = _init_linear(k1, Z_DIM, DIM)
    w2, b2 = _init_linear(k2, DIM, DIM)
    w3, b3 = _init_linear(k3, DIM, DIM)
    w4, b4 = _init_linear(k4, DIM, OUT_DIM)
    params = dict(w1=w1, b1=b1, w2=w2, b2=b2, w3=w3, b3=b3, w4=w4, b4=b4)
    return params, pack_params(params)


# ------------------------------ references ----------------------------------

def gen_forward_ref_f32(noise, params):
    """Pure-JAX f32 reference matching the PyTorch module."""
    h = jnp.maximum(noise @ params["w1"] + params["b1"], 0.0)
    h = jnp.maximum(h @ params["w2"] + params["b2"], 0.0)
    h = jnp.maximum(h @ params["w3"] + params["b3"], 0.0)
    return h @ params["w4"] + params["b4"]


def gen_forward_ref_bf16(noise, params):
    """Reference with the kernel's numerics: bf16 operands, f32 accumulation."""
    bf = jnp.bfloat16

    def lin(h, w, b):
        return jnp.dot(h.astype(bf), w.astype(bf),
                       preferred_element_type=jnp.float32) + b

    h = jnp.maximum(lin(noise, params["w1"], params["b1"]), 0.0)
    h = jnp.maximum(lin(h, params["w2"], params["b2"]), 0.0)
    h = jnp.maximum(lin(h, params["w3"], params["b3"]), 0.0)
    return lin(h, params["w4"], params["b4"])


if __name__ == "__main__":
    key = jax.random.PRNGKey(0)
    k_param, k_noise = jax.random.split(key)

    params, packed = init_gen_params(k_param)

    batch = 8
    noise = jax.random.normal(k_noise, (batch, Z_DIM), jnp.float32)

    out = jax.block_until_ready(gen_forward(noise, packed))

    ref_bf16 = gen_forward_ref_bf16(noise, params)
    ref_f32 = gen_forward_ref_f32(noise, params)

    # Exact-algorithm check (bf16 operands, f32 accumulation, same as kernel).
    np.testing.assert_allclose(np.asarray(out), np.asarray(ref_bf16),
                               rtol=1e-3, atol=1e-3)
    # Loose check against the full-f32 module semantics (bf16 weight storage
    # introduces ~0.5%/layer operand rounding, as anticipated in the review).
    np.testing.assert_allclose(np.asarray(out), np.asarray(ref_f32),
                               rtol=5e-2, atol=5e-2)

    print("KERNEL_OK")
</pallas_src>

<mosaic_0001>
module attributes {stable_mosaic.version = 11 : i64} {
  func.func @_gen_kernel(%arg0: i32, %arg1: i32, %arg2: i32, %arg3: memref<8x64xf32, #tpu.memory_space<vmem>>, %arg4: memref<64x2048xbf16, #tpu.memory_space<vmem>>, %arg5: memref<1x2048xf32, #tpu.memory_space<vmem>>, %arg6: memref<1x2048x512xbf16, #tpu.memory_space<vmem>>, %arg7: memref<1x1x512xf32, #tpu.memory_space<vmem>>, %arg8: memref<2048x8xbf16, #tpu.memory_space<vmem>>, %arg9: memref<1x8xf32, #tpu.memory_space<vmem>>, %arg10: memref<8x8xf32, #tpu.memory_space<vmem>>, %arg11: memref<8x2048xf32, #tpu.memory_space<vmem>>, %arg12: memref<8x2048xf32, #tpu.memory_space<vmem>>) attributes {dimension_semantics = [#tpu.dimension_semantics<arbitrary>, #tpu.dimension_semantics<arbitrary>, #tpu.dimension_semantics<arbitrary>], iteration_bounds = array<i64: 1, 2, 4>, scalar_prefetch = 0 : i64, scratch_operands = 2 : i64, tpu.core_type = #tpu.core_type<tc>, window_params = [{transform_indices = @transform_0, window_bounds = array<i64: 8, 64>}, {pipeline_mode = #tpu.pipeline_mode<synchronous>, transform_indices = @transform_1, window_bounds = array<i64: 64, 2048>}, {pipeline_mode = #tpu.pipeline_mode<synchronous>, transform_indices = @transform_2, window_bounds = array<i64: 1, 2048>}, {transform_indices = @transform_3, window_bounds = array<i64: 1, 2048, 512>}, {transform_indices = @transform_4, window_bounds = array<i64: 1, 1, 512>}, {pipeline_mode = #tpu.pipeline_mode<synchronous>, transform_indices = @transform_5, window_bounds = array<i64: 2048, 8>}, {pipeline_mode = #tpu.pipeline_mode<synchronous>, transform_indices = @transform_6, window_bounds = array<i64: 1, 8>}, {transform_indices = @transform_7, window_bounds = array<i64: 8, 8>}]} {
    %c0_i32 = arith.constant 0 : i32
    %0 = arith.cmpi eq, %arg1, %c0_i32 : i32
    %c0_i32_0 = arith.constant 0 : i32
    %1 = arith.cmpi eq, %arg2, %c0_i32_0 : i32
    %2 = arith.andi %0, %1 : i1
    %3 = arith.extui %2 : i1 to i32
    %c0_i32_1 = arith.constant 0 : i32
    %4 = arith.cmpi ne, %3, %c0_i32_1 : i32
    scf.if %4 {
      %c0_37 = arith.constant 0 : index
      %c0_38 = arith.constant 0 : index
      %64 = vector.load %arg3[%c0_37, %c0_38] : memref<8x64xf32, #tpu.memory_space<vmem>>, vector<8x64xf32>
      %65 = arith.truncf %64 : vector<8x64xf32> to vector<8x64xbf16>
      %c0_39 = arith.constant 0 : index
      %c0_40 = arith.constant 0 : index
      %66 = vector.load %arg4[%c0_39, %c0_40] : memref<64x2048xbf16, #tpu.memory_space<vmem>>, vector<64x2048xbf16>
      %cst_41 = arith.constant dense<0.000000e+00> : vector<8x2048xf32>
      %67 = tpu.matmul %65, %66, %cst_41 {dimension_numbers = #tpu.dot_dimension_numbers<[1], [0], [0], [1], [0, 0, 1, 1], [], []>} : vector<8x64xbf16>, vector<64x2048xbf16>, vector<8x2048xf32> -> vector<8x2048xf32>
      %c0_42 = arith.constant 0 : index
      %c0_43 = arith.constant 0 : index
      %68 = vector.load %arg5[%c0_42, %c0_43] : memref<1x2048xf32, #tpu.memory_space<vmem>>, vector<1x2048xf32>
      %69 = vector.broadcast %68 : vector<1x2048xf32> to vector<8x2048xf32>
      %70 = arith.addf %67, %69 : vector<8x2048xf32>
      %cst_44 = arith.constant 0.000000e+00 : f32
      %71 = vector.broadcast %cst_44 : f32 to vector<8x2048xf32>
      %72 = arith.maximumf %70, %71 : vector<8x2048xf32>
      %c0_45 = arith.constant 0 : index
      %c0_46 = arith.constant 0 : index
      %73 = vector.load %arg11[%c0_45, %c0_46] : memref<8x2048xf32, #tpu.memory_space<vmem>>, vector<8x2048xf32>
      tpu.vector_store %arg11[%c0_45, %c0_46], %72 {strides = array<i32>} : memref<8x2048xf32, #tpu.memory_space<vmem>>, vector<8x2048xf32>,
    } else {
    }
    %c0_i32_2 = arith.constant 0 : i32
    %5 = arith.cmpi eq, %arg1, %c0_i32_2 : i32
    %c0 = arith.constant 0 : index
    %c0_3 = arith.constant 0 : index
    %6 = vector.load %arg11[%c0, %c0_3] : memref<8x2048xf32, #tpu.memory_space<vmem>>, vector<8x2048xf32>
    %c0_4 = arith.constant 0 : index
    %c0_5 = arith.constant 0 : index
    %7 = vector.load %arg12[%c0_4, %c0_5] : memref<8x2048xf32, #tpu.memory_space<vmem>>, vector<8x2048xf32>
    %8 = arith.select %5, %6, %7 : vector<8x2048xf32>
    %9 = arith.truncf %8 : vector<8x2048xf32> to vector<8x2048xbf16>
    %c0_6 = arith.constant 0 : index
    %c0_7 = arith.constant 0 : index
    %c0_8 = arith.constant 0 : index
    %10 = vector.load %arg6[%c0_6, %c0_7, %c0_8] : memref<1x2048x512xbf16, #tpu.memory_space<vmem>>, vector<1x2048x512xbf16>
    %11 = vector.shape_cast %10 : vector<1x2048x512xbf16> to vector<2048x512xbf16>
    %cst = arith.constant dense<0.000000e+00> : vector<8x512xf32>
    %12 = tpu.matmul %9, %11, %cst {dimension_numbers = #tpu.dot_dimension_numbers<[1], [0], [0], [1], [0, 0, 1, 1], [], []>} : vector<8x2048xbf16>, vector<2048x512xbf16>, vector<8x512xf32> -> vector<8x512xf32>
    %c0_9 = arith.constant 0 : index
    %c0_10 = arith.constant 0 : index
    %c0_11 = arith.constant 0 : index
    %13 = vector.load %arg7[%c0_9, %c0_10, %c0_11] : memref<1x1x512xf32, #tpu.memory_space<vmem>>, vector<1x1x512xf32>
    %14 = vector.shape_cast %13 : vector<1x1x512xf32> to vector<1x512xf32>
    %15 = vector.broadcast %14 : vector<1x512xf32> to vector<8x512xf32>
    %16 = arith.addf %12, %15 : vector<8x512xf32>
    %cst_12 = arith.constant 0.000000e+00 : f32
    %17 = vector.broadcast %cst_12 : f32 to vector<8x512xf32>
    %18 = arith.maximumf %16, %17 : vector<8x512xf32>
    %c0_i32_13 = arith.constant 0 : i32
    %19 = arith.cmpi eq, %arg1, %c0_i32_13 : i32
    %c0_i32_14 = arith.constant 0 : i32
    %20 = arith.cmpi eq, %arg2, %c0_i32_14 : i32
    %21 = arith.andi %19, %20 : i1
    %22 = arith.extui %21 : i1 to i32
    %c0_i32_15 = arith.constant 0 : i32
    %23 = arith.cmpi ne, %22, %c0_i32_15 : i32
    scf.if %23 {
      %c0_37 = arith.constant 0 : index
      %c0_38 = arith.constant 0 : index
      %64 = vector.load %arg12[%c0_37, %c0_38] : memref<8x2048xf32, #tpu.memory_space<vmem>>, vector<8x512xf32>
      tpu.vector_store %arg12[%c0_37, %c0_38], %18 {strides = array<i32>} : memref<8x2048xf32, #tpu.memory_space<vmem>>, vector<8x512xf32>,
    } else {
    }
    %c0_i32_16 = arith.constant 0 : i32
    %24 = arith.cmpi eq, %arg1, %c0_i32_16 : i32
    %c1_i32 = arith.constant 1 : i32
    %25 = arith.cmpi eq, %arg2, %c1_i32 : i32
    %26 = arith.andi %24, %25 : i1
    %27 = arith.extui %26 : i1 to i32
    %c0_i32_17 = arith.constant 0 : i32
    %28 = arith.cmpi ne, %27, %c0_i32_17 : i32
    scf.if %28 {
      %c0_37 = arith.constant 0 : index
      %c512 = arith.constant 512 : index
      %64 = vector.load %arg12[%c0_37, %c512] : memref<8x2048xf32, #tpu.memory_space<vmem>>, vector<8x512xf32>
      tpu.vector_store %arg12[%c0_37, %c512], %18 {strides = array<i32>} : memref<8x2048xf32, #tpu.memory_space<vmem>>, vector<8x512xf32>,
    } else {
    }
    %c0_i32_18 = arith.constant 0 : i32
    %29 = arith.cmpi eq, %arg1, %c0_i32_18 : i32
    %c2_i32 = arith.constant 2 : i32
    %30 = arith.cmpi eq, %arg2, %c2_i32 : i32
    %31 = arith.andi %29, %30 : i1
    %32 = arith.extui %31 : i1 to i32
    %c0_i32_19 = arith.constant 0 : i32
    %33 = arith.cmpi ne, %32, %c0_i32_19 : i32
    scf.if %33 {
      %c0_37 = arith.constant 0 : index
      %c1024 = arith.constant 1024 : index
      %64 = vector.load %arg12[%c0_37, %c1024] : memref<8x2048xf32, #tpu.memory_space<vmem>>, vector<8x512xf32>
      tpu.vector_store %arg12[%c0_37, %c1024], %18 {strides = array<i32>} : memref<8x2048xf32, #tpu.memory_space<vmem>>, vector<8x512xf32>,
    } else {
    }
    %c0_i32_20 = arith.constant 0 : i32
    %34 = arith.cmpi eq, %arg1, %c0_i32_20 : i32
    %c3_i32 = arith.constant 3 : i32
    %35 = arith.cmpi eq, %arg2, %c3_i32 : i32
    %36 = arith.andi %34, %35 : i1
    %37 = arith.extui %36 : i1 to i32
    %c0_i32_21 = arith.constant 0 : i32
    %38 = arith.cmpi ne, %37, %c0_i32_21 : i32
    scf.if %38 {
      %c0_37 = arith.constant 0 : index
      %c1536 = arith.constant 1536 : index
      %64 = vector.load %arg12[%c0_37, %c1536] : memref<8x2048xf32, #tpu.memory_space<vmem>>, vector<8x512xf32>
      tpu.vector_store %arg12[%c0_37, %c1536], %18 {strides = array<i32>} : memref<8x2048xf32, #tpu.memory_space<vmem>>, vector<8x512xf32>,
    } else {
    }
    %c1_i32_22 = arith.constant 1 : i32
    %39 = arith.cmpi eq, %arg1, %c1_i32_22 : i32
    %c0_i32_23 = arith.constant 0 : i32
    %40 = arith.cmpi eq, %arg2, %c0_i32_23 : i32
    %41 = arith.andi %39, %40 : i1
    %42 = arith.extui %41 : i1 to i32
    %c0_i32_24 = arith.constant 0 : i32
    %43 = arith.cmpi ne, %42, %c0_i32_24 : i32
    scf.if %43 {
      %c0_37 = arith.constant 0 : index
      %c0_38 = arith.constant 0 : index
      %64 = vector.load %arg11[%c0_37, %c0_38] : memref<8x2048xf32, #tpu.memory_space<vmem>>, vector<8x512xf32>
      tpu.vector_store %arg11[%c0_37, %c0_38], %18 {strides = array<i32>} : memref<8x2048xf32, #tpu.memory_space<vmem>>, vector<8x512xf32>,
    } else {
    }
    %c1_i32_25 = arith.constant 1 : i32
    %44 = arith.cmpi eq, %arg1, %c1_i32_25 : i32
    %c1_i32_26 = arith.constant 1 : i32
    %45 = arith.cmpi eq, %arg2, %c1_i32_26 : i32
    %46 = arith.andi %44, %45 : i1
    %47 = arith.extui %46 : i1 to i32
    %c0_i32_27 = arith.constant 0 : i32
    %48 = arith.cmpi ne, %47, %c0_i32_27 : i32
    scf.if %48 {
      %c0_37 = arith.constant 0 : index
      %c512 = arith.constant 512 : index
      %64 = vector.load %arg11[%c0_37, %c512] : memref<8x2048xf32, #tpu.memory_space<vmem>>, vector<8x512xf32>
      tpu.vector_store %arg11[%c0_37, %c512], %18 {strides = array<i32>} : memref<8x2048xf32, #tpu.memory_space<vmem>>, vector<8x512xf32>,
    } else {
    }
    %c1_i32_28 = arith.constant 1 : i32
    %49 = arith.cmpi eq, %arg1, %c1_i32_28 : i32
    %c2_i32_29 = arith.constant 2 : i32
    %50 = arith.cmpi eq, %arg2, %c2_i32_29 : i32
    %51 = arith.andi %49, %50 : i1
    %52 = arith.extui %51 : i1 to i32
    %c0_i32_30 = arith.constant 0 : i32
    %53 = arith.cmpi ne, %52, %c0_i32_30 : i32
    scf.if %53 {
      %c0_37 = arith.constant 0 : index
      %c1024 = arith.constant 1024 : index
      %64 = vector.load %arg11[%c0_37, %c1024] : memref<8x2048xf32, #tpu.memory_space<vmem>>, vector<8x512xf32>
      tpu.vector_store %arg11[%c0_37, %c1024], %18 {strides = array<i32>} : memref<8x2048xf32, #tpu.memory_space<vmem>>, vector<8x512xf32>,
    } else {
    }
    %c1_i32_31 = arith.constant 1 : i32
    %54 = arith.cmpi eq, %arg1, %c1_i32_31 : i32
    %c3_i32_32 = arith.constant 3 : i32
    %55 = arith.cmpi eq, %arg2, %c3_i32_32 : i32
    %56 = arith.andi %54, %55 : i1
    %57 = arith.extui %56 : i1 to i32
    %c0_i32_33 = arith.constant 0 : i32
    %58 = arith.cmpi ne, %57, %c0_i32_33 : i32
    scf.if %58 {
      %c0_37 = arith.constant 0 : index
      %c1536 = arith.constant 1536 : index
      %64 = vector.load %arg11[%c0_37, %c1536] : memref<8x2048xf32, #tpu.memory_space<vmem>>, vector<8x512xf32>
      tpu.vector_store %arg11[%c0_37, %c1536], %18 {strides = array<i32>} : memref<8x2048xf32, #tpu.memory_space<vmem>>, vector<8x512xf32>,
    } else {
    }
    %c1_i32_34 = arith.constant 1 : i32
    %59 = arith.cmpi eq, %arg1, %c1_i32_34 : i32
    %c3_i32_35 = arith.constant 3 : i32
    %60 = arith.cmpi eq, %arg2, %c3_i32_35 : i32
    %61 = arith.andi %59, %60 : i1
    %62 = arith.extui %61 : i1 to i32
    %c0_i32_36 = arith.constant 0 : i32
    %63 = arith.cmpi ne, %62, %c0_i32_36 : i32
    scf.if %63 {
      %c0_37 = arith.constant 0 : index
      %c0_38 = arith.constant 0 : index
      %64 = vector.load %arg11[%c0_37, %c0_38] : memref<8x2048xf32, #tpu.memory_space<vmem>>, vector<8x2048xf32>
      %65 = arith.truncf %64 : vector<8x2048xf32> to vector<8x2048xbf16>
      %c0_39 = arith.constant 0 : index
      %c0_40 = arith.constant 0 : index
      %66 = vector.load %arg8[%c0_39, %c0_40] : memref<2048x8xbf16, #tpu.memory_space<vmem>>, vector<2048x8xbf16>
      %cst_41 = arith.constant dense<0.000000e+00> : vector<8x8xf32>
      %67 = tpu.matmul %65, %66, %cst_41 {dimension_numbers = #tpu.dot_dimension_numbers<[1], [0], [0], [1], [0, 0, 1, 1], [], []>} : vector<8x2048xbf16>, vector<2048x8xbf16>, vector<8x8xf32> -> vector<8x8xf32>
      %c0_42 = arith.constant 0 : index
      %c0_43 = arith.constant 0 : index
      %68 = vector.load %arg9[%c0_42, %c0_43] : memref<1x8xf32, #tpu.memory_space<vmem>>, vector<1x8xf32>
      %69 = vector.broadcast %68 : vector<1x8xf32> to vector<8x8xf32>
      %70 = arith.addf %67, %69 : vector<8x8xf32>
      %c0_44 = arith.constant 0 : index
      %c0_45 = arith.constant 0 : index
      %71 = vector.load %arg10[%c0_44, %c0_45] : memref<8x8xf32, #tpu.memory_space<vmem>>, vector<8x8xf32>
      tpu.vector_store %arg10[%c0_44, %c0_45], %70 {strides = array<i32>} : memref<8x8xf32, #tpu.memory_space<vmem>>, vector<8x8xf32>,
    } else {
    }
    return
  }
  func.func @transform_0(%arg0: i32, %arg1: i32, %arg2: i32) -> (i32, i32) {
    %c0_i32 = arith.constant 0 : i32
    %c0_i32_0 = arith.constant 0 : i32
    return %arg0, %c0_i32 : i32, i32
  }
  func.func @transform_1(%arg0: i32, %arg1: i32, %arg2: i32) -> (i32, i32) {
    %c0_i32 = arith.constant 0 : i32
    %c0_i32_0 = arith.constant 0 : i32
    %c0_i32_1 = arith.constant 0 : i32
    return %c0_i32, %c0_i32_0 : i32, i32
  }
  func.func @transform_2(%arg0: i32, %arg1: i32, %arg2: i32) -> (i32, i32) {
    %c0_i32 = arith.constant 0 : i32
    %c0_i32_0 = arith.constant 0 : i32
    %c0_i32_1 = arith.constant 0 : i32
    return %c0_i32, %c0_i32_0 : i32, i32
  }
  func.func @transform_3(%arg0: i32, %arg1: i32, %arg2: i32) -> (i32, i32, i32) {
    %c0_i32 = arith.constant 0 : i32
    %c0_i32_0 = arith.constant 0 : i32
    return %arg1, %c0_i32, %arg2 : i32, i32, i32
  }
  func.func @transform_4(%arg0: i32, %arg1: i32, %arg2: i32) -> (i32, i32, i32) {
    %c0_i32 = arith.constant 0 : i32
    %c0_i32_0 = arith.constant 0 : i32
    return %arg1, %c0_i32, %arg2 : i32, i32, i32
  }
  func.func @transform_5(%arg0: i32, %arg1: i32, %arg2: i32) -> (i32, i32) {
    %c0_i32 = arith.constant 0 : i32
    %c0_i32_0 = arith.constant 0 : i32
    %c0_i32_1 = arith.constant 0 : i32
    return %c0_i32, %c0_i32_0 : i32, i32
  }
  func.func @transform_6(%arg0: i32, %arg1: i32, %arg2: i32) -> (i32, i32) {
    %c0_i32 = arith.constant 0 : i32
    %c0_i32_0 = arith.constant 0 : i32
    %c0_i32_1 = arith.constant 0 : i32
    return %c0_i32, %c0_i32_0 : i32, i32
  }
  func.func @transform_7(%arg0: i32, %arg1: i32, %arg2: i32) -> (i32, i32) {
    %c0_i32 = arith.constant 0 : i32
    %c0_i32_0 = arith.constant 0 : i32
    return %arg0, %c0_i32 : i32, i32
  }
}

</mosaic_0001>

<llo_original>
// kernel: gen_forward_pallas.1
$region0: #{gen_forward_pallas.1}
  #allocation0 [shape = 'u32[]', space=smem, size = 0x4, offset = 0x4, fixed_abs, tag = 'smem constant byte address 0x4 - core index']
  #allocation1 [shape = 'u32[144,128]{1,0:T(1,128)}', space=vmem, size = 0x12000, scoped, tag = 'internal scratch']
  #allocation2 [shape = 'f32[8,2048]{1,0:T(8,128)}', space=vmem, size = 0x10000, scoped, tag = 'scratch operand']
  #allocation3 [shape = 'f32[8,2048]{1,0:T(8,128)}', space=vmem, size = 0x10000, scoped, tag = 'scratch operand']
  %s0 = inlined_call_operand.hbm [shape: f32[8,64], index: 0, kind: input, shape index: {}]
  %s1 = inlined_call_operand.hbm [shape: bf16[64,2048], index: 1, kind: input, shape index: {}]
  %s2 = inlined_call_operand.hbm [shape: f32[1,2048], index: 2, kind: input, shape index: {}]
  %s3 = inlined_call_operand.hbm [shape: bf16[2,2048,2048], index: 3, kind: input, shape index: {}]
  %s4 = inlined_call_operand.hbm [shape: f32[2,1,2048], index: 4, kind: input, shape index: {}]
  %s5 = inlined_call_operand.vmem [shape: bf16[2048,8], index: 5, kind: input, shape index: {}]
  %s6 = inlined_call_operand.hbm [shape: f32[1,8], index: 6, kind: input, shape index: {}]
  %s7 = inlined_call_operand.vmem [shape: f32[8,8], index: 7, kind: output, shape index: {}]
  %s8 = sld [smem:[#allocation0]]
  $region121: #{gen_forward_pallas.1} parent=0
    _
  %s10 = ssub.s32 1, %s8
  %s11 = scalar_select 0, %s10, %s8
  $region1: #{gen_forward_pallas.1} parent=0
    #allocation4 [shape = 'u8[4096]{0}', space=vmem, size = 0x1000, scoped, tag = 'input window, operand 0, single buffered']
    #allocation5 [shape = 's32[2]{0}', space=sflag, size = 0x8, scoped, tag = 'scoped memory for gen_forward_pallas.1']
    #allocation6 [shape = 'u8[262144]{0}', space=vmem, size = 0x40000, scoped, tag = 'input window, operand 1, single buffered']
    #allocation7 [shape = 's32[1]{0}', space=sflag, size = 0x4, scoped, tag = 'scoped memory for gen_forward_pallas.1']
    #allocation8 [shape = 'u8[8192]{0}', space=vmem, size = 0x2000, scoped, tag = 'input window, operand 2, single buffered']
    #allocation9 [shape = 'u8[4194304]{0}', space=vmem, size = 0x400000, scoped, tag = 'input window, operand 3']
    #allocation10 [shape = 's32[2]{0}', space=sflag, size = 0x8, scoped, tag = 'scoped memory for gen_forward_pallas.1']
    #allocation11 [shape = 'u8[4096]{0}', space=vmem, size = 0x1000, scoped, tag = 'input window, operand 4']
    #allocation12 [shape = 'u8[512]{0}', space=vmem, size = 0x400, scoped, tag = 'input window, operand 6, single buffered']
    #allocation13 [shape = 's32[1]{0}', space=sflag, size = 0x4, scoped, tag = 'scoped memory for gen_forward_pallas.1']
    %12 = vsyncpa [#allocation5], 0
    %13 = vsyncpa [#allocation7], 0
    %14 = vsyncpa [#allocation10], 0
    %s15 = scalar_lea.sflag [#allocation10], 1
    %16 = vsyncpa %s15, 0
    %17 = vsyncpa [#allocation13], 0
    loop: start=0, step=1, limit=10
    $region2: #{gen_forward_pallas.1} parent=1 // loop_pre_header
      _
    $region3: #{gen_forward_pallas.1} parent=1 // loop_header
      %s19 = sphi 0, %s23
      %p20 = scmp.ge.s32.totalorder %s19, 10
      %s26 = sphi 0, %s45
      %s27 = sphi 0, %s41
      %s28 = sphi 0, %s37
      %s29 = sphi 0, %s26
      %s30 = sphi 0, %s27
      %s31 = sphi 0, %s28
      %s32 = sphi 0, %s29
      %s33 = sphi 0, %s30
      %s34 = sphi 0, %s31
      %s48 = sphi 0, %s50
      %s51 = sphi 0, %s48
      %s52 = sphi 0, %s51
      %s68 = sphi 0, %s52
      %s72 = sphi 0, %s72
      %s74 = sphi 0, %s72
      %s75 = sphi 0, %s74
      %s89 = sphi 0, %s75
      %s93 = sphi 0, %s93
      %s95 = sphi 0, %s93
      %s96 = sphi 0, %s95
      %s110 = sphi 0, %s96
      %s118 = sphi 0, %s120
      %s121 = sphi 0, %s118
      %s122 = sphi 0, %s121
      %s138 = sphi 0, %s122
      %s146 = sphi 0, %s148
      %s149 = sphi 0, %s146
      %s150 = sphi 0, %s149
      %s166 = sphi 0, %s150
      %s170 = sphi 0, %s170
      %s172 = sphi 0, %s170
      %s173 = sphi 0, %s172
      %s187 = sphi 0, %s173
      %s191 = sphi 0, %s191
      %s193 = sphi 0, %s191
      %s194 = sphi 0, %s193
      %s208 = sphi 0, %s194
      %s214 = sphi 0, %s216
      %s217 = sphi 0, %s214
      %s218 = sphi 0, %s217
      %s234 = sphi 0, %s218
    $region4: #{gen_forward_pallas.1} parent=1 // loop_header_branch
      %22 = sbr.rel (%p20) target = $region8
    $region5: #{gen_forward_pallas.1} parent=1 // loop_body
      %s24 = ssub.s32 %s19, 1
      %s25 = ssub.s32 %s19, 2
      %s35 = sadd.s32 1, %s28
      %p36 = scmp.ge.s32.totalorder %s35, 4
      %s37 = scalar_select %p36, 0, %s35
      %s38 = sadd.s32 1, %s27
      %s39 = scalar_select %p36, %s38, %s27
      %p40 = scmp.ge.s32.totalorder %s39, 2
      %s41 = scalar_select %p40, 0, %s39
      %s42 = sadd.s32 1, %s26
      %s43 = scalar_select %p40, %s42, %s26
      %p44 = scmp.ge.s32.totalorder %s43, 1
      %s45 = scalar_select %p44, 0, %s43
      %s46 = ssub.s32 %s26, %s45
      %p47 = scmp.eq.s32.totalorder %s46, 0
      %s49 = sadd.s32 %s48, 1
      %s50 = scalar_select %p47, %s48, %s49
      %p53 = pneg %p47
      %p54 = scmp.eq.s32.totalorder %s19, 7
      %p55 = por %p53, %p54
      %p56 = scmp.ne.s32.totalorder %s48, %s51
      %p57 = scmp.eq.s32.totalorder %s19, 0
      %p58 = por %p56, %p57
      %p59 = scmp.ne.s32.totalorder %s48, %s51
      %p60 = scmp.eq.s32.totalorder %s24, 7
      %p61 = por %p59, %p60
      %p62 = scmp.ne.s32.totalorder %s51, %s52
      %p63 = scmp.eq.s32.totalorder %s24, 0
      %p64 = por %p62, %p63
      %p65 = scmp.ne.s32.totalorder %s51, %s52
      %p66 = scmp.eq.s32.totalorder %s25, 7
      %p67 = por %p65, %p66
      %p69 = scmp.ne.s32.totalorder %s52, %s68
      %p70 = scmp.eq.s32.totalorder %s25, 0
      %p71 = por %p69, %p70
      %s73 = sadd.s32 %s72, 1
      %p76 = scmp.eq.s32.totalorder %s19, 7
      %p77 = scmp.ne.s32.totalorder %s72, %s74
      %p78 = scmp.eq.s32.totalorder %s19, 0
      %p79 = por %p77, %p78
      %p80 = scmp.ne.s32.totalorder %s72, %s74
      %p81 = scmp.eq.s32.totalorder %s24, 7
      %p82 = por %p80, %p81
      %p83 = scmp.ne.s32.totalorder %s74, %s75
      %p84 = scmp.eq.s32.totalorder %s24, 0
      %p85 = por %p83, %p84
      %p86 = scmp.ne.s32.totalorder %s74, %s75
      %p87 = scmp.eq.s32.totalorder %s25, 7
      %p88 = por %p86, %p87
      %p90 = scmp.ne.s32.totalorder %s75, %s89
      %p91 = scmp.eq.s32.totalorder %s25, 0
      %p92 = por %p90, %p91
      %s94 = sadd.s32 %s93, 1
      %p97 = scmp.eq.s32.totalorder %s19, 7
      %p98 = scmp.ne.s32.totalorder %s93, %s95
      %p99 = scmp.eq.s32.totalorder %s19, 0
      %p100 = por %p98, %p99
      %p101 = scmp.ne.s32.totalorder %s93, %s95
      %p102 = scmp.eq.s32.totalorder %s24, 7
      %p103 = por %p101, %p102
      %p104 = scmp.ne.s32.totalorder %s95, %s96
      %p105 = scmp.eq.s32.totalorder %s24, 0
      %p106 = por %p104, %p105
      %p107 = scmp.ne.s32.totalorder %s95, %s96
      %p108 = scmp.eq.s32.totalorder %s25, 7
      %p109 = por %p107, %p108
      %p111 = scmp.ne.s32.totalorder %s96, %s110
      %p112 = scmp.eq.s32.totalorder %s25, 0
      %p113 = por %p111, %p112
      %s114 = ssub.s32 %s27, %s41
      %s115 = ssub.s32 %s28, %s37
      %s116 = sor.u32 %s114, %s115
      %p117 = scmp.eq.s32.totalorder %s116, 0
      %s119 = sadd.s32 %s118, 1
      %s120 = scalar_select %p117, %s118, %s119
      %p123 = pneg %p117
      %p124 = scmp.eq.s32.totalorder %s19, 7
      %p125 = por %p123, %p124
      %p126 = scmp.ne.s32.totalorder %s118, %s121
      %p127 = scmp.eq.s32.totalorder %s19, 0
      %p128 = por %p126, %p127
      %p129 = scmp.ne.s32.totalorder %s118, %s121
      %p130 = scmp.eq.s32.totalorder %s24, 7
      %p131 = por %p129, %p130
      %p132 = scmp.ne.s32.totalorder %s121, %s122
      %p133 = scmp.eq.s32.totalorder %s24, 0
      %p134 = por %p132, %p133
      %p135 = scmp.ne.s32.totalorder %s121, %s122
      %p136 = scmp.eq.s32.totalorder %s25, 7
      %p137 = por %p135, %p136
      %p139 = scmp.ne.s32.totalorder %s122, %s138
      %p140 = scmp.eq.s32.totalorder %s25, 0
      %p141 = por %p139, %p140
      %s142 = ssub.s32 %s27, %s41
      %s143 = ssub.s32 %s28, %s37
      %s144 = sor.u32 %s142, %s143
      %p145 = scmp.eq.s32.totalorder %s144, 0
      %s147 = sadd.s32 %s146, 1
      %s148 = scalar_select %p145, %s146, %s147
      %p151 = pneg %p145
      %p152 = scmp.eq.s32.totalorder %s19, 7
      %p153 = por %p151, %p152
      %p154 = scmp.ne.s32.totalorder %s146, %s149
      %p155 = scmp.eq.s32.totalorder %s19, 0
      %p156 = por %p154, %p155
      %p157 = scmp.ne.s32.totalorder %s146, %s149
      %p158 = scmp.eq.s32.totalorder %s24, 7
      %p159 = por %p157, %p158
      %p160 = scmp.ne.s32.totalorder %s149, %s150
      %p161 = scmp.eq.s32.totalorder %s24, 0
      %p162 = por %p160, %p161
      %p163 = scmp.ne.s32.totalorder %s149, %s150
      %p164 = scmp.eq.s32.totalorder %s25, 7
      %p165 = por %p163, %p164
      %p167 = scmp.ne.s32.totalorder %s150, %s166
      %p168 = scmp.eq.s32.totalorder %s25, 0
      %p169 = por %p167, %p168
      %s171 = sadd.s32 %s170, 1
      %p174 = scmp.eq.s32.totalorder %s19, 7
      %p175 = scmp.ne.s32.totalorder %s170, %s172
      %p176 = scmp.eq.s32.totalorder %s19, 0
      %p177 = por %p175, %p176
      %p178 = scmp.ne.s32.totalorder %s170, %s172
      %p179 = scmp.eq.s32.totalorder %s24, 7
      %p180 = por %p178, %p179
      %p181 = scmp.ne.s32.totalorder %s172, %s173
      %p182 = scmp.eq.s32.totalorder %s24, 0
      %p183 = por %p181, %p182
      %p184 = scmp.ne.s32.totalorder %s172, %s173
      %p185 = scmp.eq.s32.totalorder %s25, 7
      %p186 = por %p184, %p185
      %p188 = scmp.ne.s32.totalorder %s173, %s187
      %p189 = scmp.eq.s32.totalorder %s25, 0
      %p190 = por %p188, %p189
      %s192 = sadd.s32 %s191, 1
      %p195 = scmp.eq.s32.totalorder %s19, 7
      %p196 = scmp.ne.s32.totalorder %s191, %s193
      %p197 = scmp.eq.s32.totalorder %s19, 0
      %p198 = por %p196, %p197
      %p199 = scmp.ne.s32.totalorder %s191, %s193
      %p200 = scmp.eq.s32.totalorder %s24, 7
      %p201 = por %p199, %p200
      %p202 = scmp.ne.s32.totalorder %s193, %s194
      %p203 = scmp.eq.s32.totalorder %s24, 0
      %p204 = por %p202, %p203
      %p205 = scmp.ne.s32.totalorder %s193, %s194
      %p206 = scmp.eq.s32.totalorder %s25, 7
      %p207 = por %p205, %p206
      %p209 = scmp.ne.s32.totalorder %s194, %s208
      %p210 = scmp.eq.s32.totalorder %s25, 0
      %p211 = por %p209, %p210
      %s212 = ssub.s32 %s26, %s45
      %p213 = scmp.eq.s32.totalorder %s212, 0
      %s215 = sadd.s32 %s214, 1
      %s216 = scalar_select %p213, %s214, %s215
      %p219 = pneg %p213
      %p220 = scmp.eq.s32.totalorder %s19, 7
      %p221 = por %p219, %p220
      %p222 = scmp.ne.s32.totalorder %s214, %s217
      %p223 = scmp.eq.s32.totalorder %s19, 0
      %p224 = por %p222, %p223
      %p225 = scmp.ne.s32.totalorder %s214, %s217
      %p226 = scmp.eq.s32.totalorder %s24, 7
      %p227 = por %p225, %p226
      %p228 = scmp.ne.s32.totalorder %s217, %s218
      %p229 = scmp.eq.s32.totalorder %s24, 0
      %p230 = por %p228, %p229
      %p231 = scmp.ne.s32.totalorder %s217, %s218
      %p232 = scmp.eq.s32.totalorder %s25, 7
      %p233 = por %p231, %p232
      %p235 = scmp.ne.s32.totalorder %s218, %s234
      %p236 = scmp.eq.s32.totalorder %s25, 0
      %p237 = por %p235, %p236
      %p238 = scmp.le.s32.totalorder 1, %s19
      %p239 = scmp.lt.s32.totalorder %s19, 9
      %p240 = pnand %p238, %p239
      %p241 = pneg %p240
      // Predicated region
      $region9: #{gen_forward_pallas.1} parent=5 // pred_check
        _
      $region10: #{gen_forward_pallas.1} parent=5 // pred_check_branch
        %243 = sbr.rel (%p240) target = $region12
      $region11: #{gen_forward_pallas.1} parent=5 // pred_region
        %s244 = ssub.s32 %s19, 1
        // Predicated region
        $region13: #{gen_forward_pallas.1} parent=11 // pred_check
          %p245 = pneg %p64
        $region14: #{gen_forward_pallas.1} parent=11 // pred_check_branch
          %247 = sbr.rel (%p245) target = $region16
        $region15: #{gen_forward_pallas.1} parent=11 // pred_region
          %s249 = ssub.s32 128, 128
          %250 = vsyncadd [#allocation5], %s249
          %s251 = smul.addr %s29, 128
          %s252 = scalar_lea.hbm %s0, %s251
          %s254 = sshll.u32 [#allocation4], 4
          %s255 = int_to_ptr.vmem [resolvable:$true] %s254
          %257 = dma.hbm_to_vmem [thread:$0]  %s252, 128, %s255, [#allocation5]
        $region16: #{gen_forward_pallas.1} parent=11 // pred_fallthru
          _
        // Predicated region
        $region17: #{gen_forward_pallas.1} parent=11 // pred_check
          %p258 = pneg %p85
        $region18: #{gen_forward_pallas.1} parent=11 // pred_check_branch
          %260 = sbr.rel (%p258) target = $region20
        $region19: #{gen_forward_pallas.1} parent=11 // pred_region
          %s262 = ssub.s32 8192, 8192
          %263 = vsyncadd [#allocation7], %s262
          %s264 = sshll.u32 [#allocation6], 4
          %s265 = int_to_ptr.vmem [resolvable:$true] %s264
          %270 = dma.hbm_to_vmem [thread:$0]  %s1, 8192, %s265, [#allocation7], 1024, 1024, 64
        $region20: #{gen_forward_pallas.1} parent=11 // pred_fallthru
          _
        // Predicated region
        $region21: #{gen_forward_pallas.1} parent=11 // pred_check
          %p271 = pneg %p106
        $region22: #{gen_forward_pallas.1} parent=11 // pred_check_branch
          %273 = sbr.rel (%p271) target = $region24
        $region23: #{gen_forward_pallas.1} parent=11 // pred_region
          %s275 = ssub.s32 256, 256
          %276 = vsyncadd [#allocation7], %s275
          %s278 = sshll.u32 [#allocation8], 4
          %s279 = int_to_ptr.vmem [resolvable:$true] %s278
          %281 = dma.hbm_to_vmem [thread:$0]  %s2, 256, %s279, [#allocation7]
        $region24: #{gen_forward_pallas.1} parent=11 // pred_fallthru
          _
        // Predicated region
        $region25: #{gen_forward_pallas.1} parent=11 // pred_check
          %p282 = pneg %p183
        $region26: #{gen_forward_pallas.1} parent=11 // pred_check_branch
          %284 = sbr.rel (%p282) target = $region28
        $region27: #{gen_forward_pallas.1} parent=11 // pred_region
          _
        $region28: #{gen_forward_pallas.1} parent=11 // pred_fallthru
          _
        // Predicated region
        $region29: #{gen_forward_pallas.1} parent=11 // pred_check
          %p285 = pneg %p204
        $region30: #{gen_forward_pallas.1} parent=11 // pred_check_branch
          %287 = sbr.rel (%p285) target = $region32
        $region31: #{gen_forward_pallas.1} parent=11 // pred_region
          %s289 = ssub.s32 16, 16
          %290 = vsyncadd [#allocation13], %s289
          %s292 = sshll.u32 [#allocation12], 4
          %s293 = int_to_ptr.vmem [resolvable:$true] %s292
          %295 = dma.hbm_to_vmem [thread:$0]  %s6, 16, %s293, [#allocation13]
        $region32: #{gen_forward_pallas.1} parent=11 // pred_fallthru
          _
      $region12: #{gen_forward_pallas.1} parent=5 // pred_fallthru
        _
      %p296 = scmp.lt.s32.totalorder %s19, 8
      // Predicated region
      $region33: #{gen_forward_pallas.1} parent=5 // pred_check
        %p297 = pneg %p296
      $region34: #{gen_forward_pallas.1} parent=5 // pred_check_branch
        %299 = sbr.rel (%p297) target = $region36
      $region35: #{gen_forward_pallas.1} parent=5 // pred_region
        // Predicated region
        $region37: #{gen_forward_pallas.1} parent=35 // pred_check
          %p300 = pneg %p128
        $region38: #{gen_forward_pallas.1} parent=35 // pred_check_branch
          %302 = sbr.rel (%p300) target = $region40
        $region39: #{gen_forward_pallas.1} parent=35 // pred_region
          %s303 = sand.u32 %s19, 1
          %s304 = scalar_lea.sflag [#allocation10], %s303
          %s305 = sand.u32 %s118, 1
          %s306 = smul.addr %s305, 4096
          %s307 = scalar_lea.vmem [#allocation9], %s306
          %s308 = smul.u32 4, %s28
          %s310 = ssub.s32 65536, 65536
          %311 = vsyncadd %s304, %s310
          %s312 = smul.addr %s27, 4096
          %s313 = sadd.s32 %s308, %s312
          %s314 = smul.addr %s313, 64
          %s315 = scalar_lea.hbm %s3, %s314
          %s316 = sshll.u32 %s307, 4
          %s317 = int_to_ptr.vmem [resolvable:$true] %s316
          %322 = dma.hbm_to_vmem [thread:$0]  %s315, 65536, %s317, %s304, 1024, 256, 16
        $region40: #{gen_forward_pallas.1} parent=35 // pred_fallthru
          _
        // Predicated region
        $region41: #{gen_forward_pallas.1} parent=35 // pred_check
          %p323 = pneg %p156
        $region42: #{gen_forward_pallas.1} parent=35 // pred_check_branch
          %325 = sbr.rel (%p323) target = $region44
        $region43: #{gen_forward_pallas.1} parent=35 // pred_region
          %s326 = sand.u32 %s19, 1
          %s327 = scalar_lea.sflag [#allocation10], %s326
          %s328 = sand.u32 %s146, 1
          %s329 = smul.addr %s328, 4
          %s330 = scalar_lea.vmem [#allocation11], %s329
          %s331 = smul.u32 4, %s28
          %s333 = ssub.s32 64, 64
          %334 = vsyncadd %s327, %s333
          %s335 = smul.addr %s27, 16
          %s336 = sadd.s32 %s331, %s335
          %s337 = smul.addr %s336, 16
          %s338 = scalar_lea.hbm %s4, %s337
          %s340 = sshll.u32 %s330, 4
          %s341 = int_to_ptr.vmem [resolvable:$true] %s340
          %343 = dma.hbm_to_vmem [thread:$0]  %s338, 64, %s341, %s327
        $region44: #{gen_forward_pallas.1} parent=35 // pred_fallthru
          _
      $region36: #{gen_forward_pallas.1} parent=5 // pred_fallthru
        _
      %p344 = scmp.le.s32.totalorder 1, %s19
      %p345 = scmp.lt.s32.totalorder %s19, 9
      %p346 = pnand %p344, %p345
      %p347 = pneg %p346
      // Predicated region
      $region45: #{gen_forward_pallas.1} parent=5 // pred_check
        _
      $region46: #{gen_forward_pallas.1} parent=5 // pred_check_branch
        %349 = sbr.rel (%p346) target = $region48
      $region47: #{gen_forward_pallas.1} parent=5 // pred_region
        %s350 = ssub.s32 %s19, 1
        // Predicated region
        $region49: #{gen_forward_pallas.1} parent=47 // pred_check
          %p351 = pneg %p64
        $region50: #{gen_forward_pallas.1} parent=47 // pred_check_branch
          %353 = sbr.rel (%p351) target = $region52
        $region51: #{gen_forward_pallas.1} parent=47 // pred_region
          %354 = dma.done [#allocation5], 128
        $region52: #{gen_forward_pallas.1} parent=47 // pred_fallthru
          _
        // Predicated region
        $region53: #{gen_forward_pallas.1} parent=47 // pred_check
          %p355 = pneg %p85
        $region54: #{gen_forward_pallas.1} parent=47 // pred_check_branch
          %357 = sbr.rel (%p355) target = $region56
        $region55: #{gen_forward_pallas.1} parent=47 // pred_region
          %358 = dma.done [#allocation7], 8192
        $region56: #{gen_forward_pallas.1} parent=47 // pred_fallthru
          _
        // Predicated region
        $region57: #{gen_forward_pallas.1} parent=47 // pred_check
          %p359 = pneg %p106
        $region58: #{gen_forward_pallas.1} parent=47 // pred_check_branch
          %361 = sbr.rel (%p359) target = $region60
        $region59: #{gen_forward_pallas.1} parent=47 // pred_region
          %362 = dma.done [#allocation7], 256
        $region60: #{gen_forward_pallas.1} parent=47 // pred_fallthru
          _
        %s363 = sand.u32 %s24, 1
        %s364 = scalar_lea.sflag [#allocation10], %s363
        %s365 = sand.u32 %s121, 1
        %s366 = smul.addr %s365, 4096
        %s367 = scalar_lea.vmem [#allocation9], %s366
        // Predicated region
        $region61: #{gen_forward_pallas.1} parent=47 // pred_check
          %p368 = pneg %p134
        $region62: #{gen_forward_pallas.1} parent=47 // pred_check_branch
          %370 = sbr.rel (%p368) target = $region64
        $region63: #{gen_forward_pallas.1} parent=47 // pred_region
          %371 = dma.done %s364, 65536
        $region64: #{gen_forward_pallas.1} parent=47 // pred_fallthru
          _
        %s372 = sand.u32 %s24, 1
        %s373 = scalar_lea.sflag [#allocation10], %s372
        %s374 = sand.u32 %s149, 1
        %s375 = smul.addr %s374, 4
        %s376 = scalar_lea.vmem [#allocation11], %s375
        // Predicated region
        $region65: #{gen_forward_pallas.1} parent=47 // pred_check
          %p377 = pneg %p162
        $region66: #{gen_forward_pallas.1} parent=47 // pred_check_branch
          %379 = sbr.rel (%p377) target = $region68
        $region67: #{gen_forward_pallas.1} parent=47 // pred_region
          %380 = dma.done %s373, 64
        $region68: #{gen_forward_pallas.1} parent=47 // pred_fallthru
          _
        // Predicated region
        $region69: #{gen_forward_pallas.1} parent=47 // pred_check
          %p381 = pneg %p204
        $region70: #{gen_forward_pallas.1} parent=47 // pred_check_branch
          %383 = sbr.rel (%p381) target = $region72
        $region71: #{gen_forward_pallas.1} parent=47 // pred_region
          %384 = dma.done [#allocation13], 16
        $region72: #{gen_forward_pallas.1} parent=47 // pred_fallthru
          _
        %p385 = pneg %p64
        %p386 = pneg %p61
        %p387 = pneg %p85
        %p388 = pneg %p82
        %p389 = pneg %p106
        %p390 = pneg %p103
        %s391 = sand.u32 %s24, 1
        %s392 = scalar_lea.sflag [#allocation10], %s391
        %s393 = sand.u32 %s121, 1
        %s394 = smul.addr %s393, 4096
        %s395 = scalar_lea.vmem [#allocation9], %s394
        %p396 = pneg %p134
        %p397 = pneg %p131
        %s398 = sand.u32 %s24, 1
        %s399 = scalar_lea.sflag [#allocation10], %s398
        %s400 = sand.u32 %s149, 1
        %s401 = smul.addr %s400, 4
        %s402 = scalar_lea.vmem [#allocation11], %s401
        %p403 = pneg %p162
        %p404 = pneg %p159
        %p405 = pneg %p183
        %p406 = pneg %p180
        %p407 = pneg %p204
        %p408 = pneg %p201
        %p409 = pneg %p230
        %p410 = pneg %p227
        %p411 = scmp.lt.s32.totalorder %s29, 0
        %s412 = scalar_select %p411, %s29, 0
        %s413 = smul.addr %s412, 8
        %s414 = scalar_lea.vmem %s7, %s413
        %s415 = smul.u32 4, %s31
        %s416 = smul.u32 4, %s31
        %p417 = scmp.lt.s32.totalorder %s29, 0
        %s418 = scalar_select %p417, %s29, 0
        %s419 = smul.addr %s418, 8
        %s420 = scalar_lea.vmem %s7, %s419
        %p422 = scmp.eq.s32.totalorder %s30, 0
        %p423 = scmp.eq.s32.totalorder %s31, 0
        %p424 = pnand %p422, %p423
        %p425 = pneg %p424
        // Predicated region
        $region73: #{gen_forward_pallas.1} parent=47 // pred_check
          _
        $region74: #{gen_forward_pallas.1} parent=47 // pred_check_branch
          %427 = sbr.rel (%p424) target = $region76
        $region75: #{gen_forward_pallas.1} parent=47 // pred_region
          %v428 = vld [vmem:[#allocation4] sm:$0xff]
          %v429 = vpack.c.bf16 %v428, %v428
          %v430 = vld [vmem:[#allocation6] sm:$0xff]
          %v431 = vld [vmem:[#allocation6 + $0x8] sm:$0xff]
          %v432 = vld [vmem:[#allocation6 + $0x10] sm:$0xff]
          %v433 = vld [vmem:[#allocation6 + $0x18] sm:$0xff]
          %v434 = vld [vmem:[#allocation6 + $0x20] sm:$0xff]
          %v435 = vld [vmem:[#allocation6 + $0x28] sm:$0xff]
          %v436 = vld [vmem:[#allocation6 + $0x30] sm:$0xff]
          %v437 = vld [vmem:[#allocation6 + $0x38] sm:$0xff]
          %v438 = vld [vmem:[#allocation6 + $0x40] sm:$0xff]
          %v439 = vld [vmem:[#allocation6 + $0x48] sm:$0xff]
          %v440 = vld [vmem:[#allocation6 + $0x50] sm:$0xff]
          %v441 = vld [vmem:[#allocation6 + $0x58] sm:$0xff]
          %v442 = vld [vmem:[#allocation6 + $0x60] sm:$0xff]
          %v443 = vld [vmem:[#allocation6 + $0x68] sm:$0xff]
          %v444 = vld [vmem:[#allocation6 + $0x70] sm:$0xff]
          %v445 = vld [vmem:[#allocation6 + $0x78] sm:$0xff]
          %v446 = vld [vmem:[#allocation6 + $0x80] sm:$0xff]
          %v447 = vld [vmem:[#allocation6 + $0x88] sm:$0xff]
          %v448 = vld [vmem:[#allocation6 + $0x90] sm:$0xff]
          %v449 = vld [vmem:[#allocation6 + $0x98] sm:$0xff]
          %v450 = vld [vmem:[#allocation6 + $0xa0] sm:$0xff]
          %v451 = vld [vmem:[#allocation6 + $0xa8] sm:$0xff]
          %v452 = vld [vmem:[#allocation6 + $0xb0] sm:$0xff]
          %v453 = vld [vmem:[#allocation6 + $0xb8] sm:$0xff]
          %v454 = vld [vmem:[#allocation6 + $0xc0] sm:$0xff]
          %v455 = vld [vmem:[#allocation6 + $0xc8] sm:$0xff]
          %v456 = vld [vmem:[#allocation6 + $0xd0] sm:$0xff]
          %v457 = vld [vmem:[#allocation6 + $0xd8] sm:$0xff]
          %v458 = vld [vmem:[#allocation6 + $0xe0] sm:$0xff]
          %v459 = vld [vmem:[#allocation6 + $0xe8] sm:$0xff]
          %v460 = vld [vmem:[#allocation6 + $0xf0] sm:$0xff]
          %v461 = vld [vmem:[#allocation6 + $0xf8] sm:$0xff]
          %v462 = vld [vmem:[#allocation6 + $0x100] sm:$0xff]
          %v463 = vld [vmem:[#allocation6 + $0x108] sm:$0xff]
          %v464 = vld [vmem:[#allocation6 + $0x110] sm:$0xff]
          %v465 = vld [vmem:[#allocation6 + $0x118] sm:$0xff]
          %v466 = vld [vmem:[#allocation6 + $0x120] sm:$0xff]
          %v467 = vld [vmem:[#allocation6 + $0x128] sm:$0xff]
          %v468 = vld [vmem:[#allocation6 + $0x130] sm:$0xff]
          %v469 = vld [vmem:[#allocation6 + $0x138] sm:$0xff]
          %v470 = vld [vmem:[#allocation6 + $0x140] sm:$0xff]
          %v471 = vld [vmem:[#allocation6 + $0x148] sm:$0xff]
          %v472 = vld [vmem:[#allocation6 + $0x150] sm:$0xff]
          %v473 = vld [vmem:[#allocation6 + $0x158] sm:$0xff]
          %v474 = vld [vmem:[#allocation6 + $0x160] sm:$0xff]
          %v475 = vld [vmem:[#allocation6 + $0x168] sm:$0xff]
          %v476 = vld [vmem:[#allocation6 + $0x170] sm:$0xff]
          %v477 = vld [vmem:[#allocation6 + $0x178] sm:$0xff]
          %v478 = vld [vmem:[#allocation6 + $0x180] sm:$0xff]
          %v479 = vld [vmem:[#allocation6 + $0x188] sm:$0xff]
          %v480 = vld [vmem:[#allocation6 + $0x190] sm:$0xff]
          %v481 = vld [vmem:[#allocation6 + $0x198] sm:$0xff]
          %v482 = vld [vmem:[#allocation6 + $0x1a0] sm:$0xff]
          %v483 = vld [vmem:[#allocation6 + $0x1a8] sm:$0xff]
          %v484 = vld [vmem:[#allocation6 + $0x1b0] sm:$0xff]
          %v485 = vld [vmem:[#allocation6 + $0x1b8] sm:$0xff]
          %v486 = vld [vmem:[#allocation6 + $0x1c0] sm:$0xff]
          %v487 = vld [vmem:[#allocation6 + $0x1c8] sm:$0xff]
          %v488 = vld [vmem:[#allocation6 + $0x1d0] sm:$0xff]
          %v489 = vld [vmem:[#allocation6 + $0x1d8] sm:$0xff]
          %v490 = vld [vmem:[#allocation6 + $0x1e0] sm:$0xff]
          %v491 = vld [vmem:[#allocation6 + $0x1e8] sm:$0xff]
          %v492 = vld [vmem:[#allocation6 + $0x1f0] sm:$0xff]
          %v493 = vld [vmem:[#allocation6 + $0x1f8] sm:$0xff]
          %v494 = vld [vmem:[#allocation8] sm:$0xff]
          %v495 = vld [vmem:[#allocation8 + $0x8] sm:$0xff]
          %v498 = vlaneseq
          %v499 = vshrl.u32 %v498, 7
          %v500 = vsub.s32 0, %v499
          %v501 = vrot.slane %v494, %v500
          %v502 = vlaneseq
          %v503 = vshrl.u32 %v502, 7
          %v504 = vsub.s32 1, %v503
          %v505 = vrot.slane %v494, %v504
          %v506 = vlaneseq
          %v507 = vshrl.u32 %v506, 7
          %v508 = vsub.s32 2, %v507
          %v509 = vrot.slane %v494, %v508
          %v510 = vlaneseq
          %v511 = vshrl.u32 %v510, 7
          %v512 = vsub.s32 3, %v511
          %v513 = vrot.slane %v494, %v512
          %v514 = vlaneseq
          %v515 = vshrl.u32 %v514, 7
          %v516 = vsub.s32 4, %v515
          %v517 = vrot.slane %v494, %v516
          %v518 = vlaneseq
          %v519 = vshrl.u32 %v518, 7
          %v520 = vsub.s32 5, %v519
          %v521 = vrot.slane %v494, %v520
          %v522 = vlaneseq
          %v523 = vshrl.u32 %v522, 7
          %v524 = vsub.s32 6, %v523
          %v525 = vrot.slane %v494, %v524
          %v526 = vlaneseq
          %v527 = vshrl.u32 %v526, 7
          %v528 = vsub.s32 7, %v527
          %v529 = vrot.slane %v494, %v528
          %v530 = vlaneseq
          %v531 = vshrl.u32 %v530, 7
          %v532 = vsub.s32 0, %v531
          %v533 = vrot.slane %v495, %v532
          %v534 = vlaneseq
          %v535 = vshrl.u32 %v534, 7
          %v536 = vsub.s32 1, %v535
          %v537 = vrot.slane %v495, %v536
          %v538 = vlaneseq
          %v539 = vshrl.u32 %v538, 7
          %v540 = vsub.s32 2, %v539
          %v541 = vrot.slane %v495, %v540
          %v542 = vlaneseq
          %v543 = vshrl.u32 %v542, 7
          %v544 = vsub.s32 3, %v543
          %v545 = vrot.slane %v495, %v544
          %v546 = vlaneseq
          %v547 = vshrl.u32 %v546, 7
          %v548 = vsub.s32 4, %v547
          %v549 = vrot.slane %v495, %v548
          %v550 = vlaneseq
          %v551 = vshrl.u32 %v550, 7
          %v552 = vsub.s32 5, %v551
          %v553 = vrot.slane %v495, %v552
          %v554 = vlaneseq
          %v555 = vshrl.u32 %v554, 7
          %v556 = vsub.s32 6, %v555
          %v557 = vrot.slane %v495, %v556
          %v558 = vlaneseq
          %v559 = vshrl.u32 %v558, 7
          %v560 = vsub.s32 7, %v559
          %v561 = vrot.slane %v495, %v560
          %v642 = vunpack.c.l.b16 %v430
          %v643 = vunpack.c.h.b16 %v430
          %v644 = vunpack.c.l.b16 %v431
          %v645 = vunpack.c.h.b16 %v431
          %v646 = vunpack.c.l.b16 %v432
          %v647 = vunpack.c.h.b16 %v432
          %v648 = vunpack.c.l.b16 %v433
          %v649 = vunpack.c.h.b16 %v433
          %v650 = vunpack.c.l.b16 %v434
          %v651 = vunpack.c.h.b16 %v434
          %v652 = vunpack.c.l.b16 %v435
          %v653 = vunpack.c.h.b16 %v435
          %v654 = vunpack.c.l.b16 %v436
          %v655 = vunpack.c.h.b16 %v436
          %v656 = vunpack.c.l.b16 %v437
          %v657 = vunpack.c.h.b16 %v437
          %v658 = vunpack.c.l.b16 %v438
          %v659 = vunpack.c.h.b16 %v438
          %v660 = vunpack.c.l.b16 %v439
          %v661 = vunpack.c.h.b16 %v439
          %v662 = vunpack.c.l.b16 %v440
          %v663 = vunpack.c.h.b16 %v440
          %v664 = vunpack.c.l.b16 %v441
          %v665 = vunpack.c.h.b16 %v441
          %v666 = vunpack.c.l.b16 %v442
          %v667 = vunpack.c.h.b16 %v442
          %v668 = vunpack.c.l.b16 %v443
          %v669 = vunpack.c.h.b16 %v443
          %v670 = vunpack.c.l.b16 %v444
          %v671 = vunpack.c.h.b16 %v444
          %v672 = vunpack.c.l.b16 %v445
          %v673 = vunpack.c.h.b16 %v445
          %v674 = vunpack.c.l.b16 %v446
          %v675 = vunpack.c.h.b16 %v446
          %v676 = vunpack.c.l.b16 %v447
          %v677 = vunpack.c.h.b16 %v447
          %v678 = vunpack.c.l.b16 %v448
          %v679 = vunpack.c.h.b16 %v448
          %v680 = vunpack.c.l.b16 %v449
          %v681 = vunpack.c.h.b16 %v449
          %v682 = vunpack.c.l.b16 %v450
          %v683 = vunpack.c.h.b16 %v450
          %v684 = vunpack.c.l.b16 %v451
          %v685 = vunpack.c.h.b16 %v451
          %v686 = vunpack.c.l.b16 %v452
          %v687 = vunpack.c.h.b16 %v452
          %v688 = vunpack.c.l.b16 %v453
          %v689 = vunpack.c.h.b16 %v453
          %v690 = vunpack.c.l.b16 %v454
          %v691 = vunpack.c.h.b16 %v454
          %v692 = vunpack.c.l.b16 %v455
          %v693 = vunpack.c.h.b16 %v455
          %v694 = vunpack.c.l.b16 %v456
          %v695 = vunpack.c.h.b16 %v456
          %v696 = vunpack.c.l.b16 %v457
          %v697 = vunpack.c.h.b16 %v457
          %v698 = vunpack.c.l.b16 %v458
          %v699 = vunpack.c.h.b16 %v458
          %v700 = vunpack.c.l.b16 %v459
          %v701 = vunpack.c.h.b16 %v459
          %v702 = vunpack.c.l.b16 %v460
          %v703 = vunpack.c.h.b16 %v460
          %v704 = vunpack.c.l.b16 %v461
          %v705 = vunpack.c.h.b16 %v461
          %v706 = vunpack.c.l.b16 %v462
          %v707 = vunpack.c.h.b16 %v462
          %v708 = vunpack.c.l.b16 %v463
          %v709 = vunpack.c.h.b16 %v463
          %v710 = vunpack.c.l.b16 %v464
          %v711 = vunpack.c.h.b16 %v464
          %v712 = vunpack.c.l.b16 %v465
          %v713 = vunpack.c.h.b16 %v465
          %v714 = vunpack.c.l.b16 %v466
          %v715 = vunpack.c.h.b16 %v466
          %v716 = vunpack.c.l.b16 %v467
          %v717 = vunpack.c.h.b16 %v467
          %v718 = vunpack.c.l.b16 %v468
          %v719 = vunpack.c.h.b16 %v468
          %v720 = vunpack.c.l.b16 %v469
          %v721 = vunpack.c.h.b16 %v469
          %v722 = vunpack.c.l.b16 %v470
          %v723 = vunpack.c.h.b16 %v470
          %v724 = vunpack.c.l.b16 %v471
          %v725 = vunpack.c.h.b16 %v471
          %v726 = vunpack.c.l.b16 %v472
          %v727 = vunpack.c.h.b16 %v472
          %v728 = vunpack.c.l.b16 %v473
          %v729 = vunpack.c.h.b16 %v473
          %v730 = vunpack.c.l.b16 %v474
          %v731 = vunpack.c.h.b16 %v474
          %v732 = vunpack.c.l.b16 %v475
          %v733 = vunpack.c.h.b16 %v475
          %v734 = vunpack.c.l.b16 %v476
          %v735 = vunpack.c.h.b16 %v476
          %v736 = vunpack.c.l.b16 %v477
          %v737 = vunpack.c.h.b16 %v477
          %v738 = vunpack.c.l.b16 %v478
          %v739 = vunpack.c.h.b16 %v478
          %v740 = vunpack.c.l.b16 %v479
          %v741 = vunpack.c.h.b16 %v479
          %v742 = vunpack.c.l.b16 %v480
          %v743 = vunpack.c.h.b16 %v480
          %v744 = vunpack.c.l.b16 %v481
          %v745 = vunpack.c.h.b16 %v481
          %v746 = vunpack.c.l.b16 %v482
          %v747 = vunpack.c.h.b16 %v482
          %v748 = vunpack.c.l.b16 %v483
          %v749 = vunpack.c.h.b16 %v483
          %v750 = vunpack.c.l.b16 %v484
          %v751 = vunpack.c.h.b16 %v484
          %v752 = vunpack.c.l.b16 %v485
          %v753 = vunpack.c.h.b16 %v485
          %v754 = vunpack.c.l.b16 %v486
          %v755 = vunpack.c.h.b16 %v486
          %v756 = vunpack.c.l.b16 %v487
          %v757 = vunpack.c.h.b16 %v487
          %v758 = vunpack.c.l.b16 %v488
          %v759 = vunpack.c.h.b16 %v488
          %v760 = vunpack.c.l.b16 %v489
          %v761 = vunpack.c.h.b16 %v489
          %v762 = vunpack.c.l.b16 %v490
          %v763 = vunpack.c.h.b16 %v490
          %v764 = vunpack.c.l.b16 %v491
          %v765 = vunpack.c.h.b16 %v491
          %v766 = vunpack.c.l.b16 %v492
          %v767 = vunpack.c.h.b16 %v492
          %v768 = vunpack.c.l.b16 %v493
          %v769 = vunpack.c.h.b16 %v493
          %v770 = vpack.c.b16 %v658, %v642
          %v771 = vpack.c.b16 %v659, %v643
          %v772 = vpack.c.b16 %v660, %v644
          %v773 = vpack.c.b16 %v661, %v645
          %v774 = vpack.c.b16 %v662, %v646
          %v775 = vpack.c.b16 %v663, %v647
          %v776 = vpack.c.b16 %v664, %v648
          %v777 = vpack.c.b16 %v665, %v649
          %v778 = vpack.c.b16 %v666, %v650
          %v779 = vpack.c.b16 %v667, %v651
          %v780 = vpack.c.b16 %v668, %v652
          %v781 = vpack.c.b16 %v669, %v653
          %v782 = vpack.c.b16 %v670, %v654
          %v783 = vpack.c.b16 %v671, %v655
          %v784 = vpack.c.b16 %v672, %v656
          %v785 = vpack.c.b16 %v673, %v657
          %v786 = vpack.c.b16 %v690, %v674
          %v787 = vpack.c.b16 %v691, %v675
          %v788 = vpack.c.b16 %v692, %v676
          %v789 = vpack.c.b16 %v693, %v677
          %v790 = vpack.c.b16 %v694, %v678
          %v791 = vpack.c.b16 %v695, %v679
          %v792 = vpack.c.b16 %v696, %v680
          %v793 = vpack.c.b16 %v697, %v681
          %v794 = vpack.c.b16 %v698, %v682
          %v795 = vpack.c.b16 %v699, %v683
          %v796 = vpack.c.b16 %v700, %v684
          %v797 = vpack.c.b16 %v701, %v685
          %v798 = vpack.c.b16 %v702, %v686
          %v799 = vpack.c.b16 %v703, %v687
          %v800 = vpack.c.b16 %v704, %v688
          %v801 = vpack.c.b16 %v705, %v689
          %v802 = vpack.c.b16 %v722, %v706
          %v803 = vpack.c.b16 %v723, %v707
          %v804 = vpack.c.b16 %v724, %v708
          %v805 = vpack.c.b16 %v725, %v709
          %v806 = vpack.c.b16 %v726, %v710
          %v807 = vpack.c.b16 %v727, %v711
          %v808 = vpack.c.b16 %v728, %v712
          %v809 = vpack.c.b16 %v729, %v713
          %v810 = vpack.c.b16 %v730, %v714
          %v811 = vpack.c.b16 %v731, %v715
          %v812 = vpack.c.b16 %v732, %v716
          %v813 = vpack.c.b16 %v733, %v717
          %v814 = vpack.c.b16 %v734, %v718
          %v815 = vpack.c.b16 %v735, %v719
          %v816 = vpack.c.b16 %v736, %v720
          %v817 = vpack.c.b16 %v737, %v721
          %v818 = vpack.c.b16 %v754, %v738
          %v819 = vpack.c.b16 %v755, %v739
          %v820 = vpack.c.b16 %v756, %v740
          %v821 = vpack.c.b16 %v757, %v741
          %v822 = vpack.c.b16 %v758, %v742
          %v823 = vpack.c.b16 %v759, %v743
          %v824 = vpack.c.b16 %v760, %v744
          %v825 = vpack.c.b16 %v761, %v745
          %v826 = vpack.c.b16 %v762, %v746
          %v827 = vpack.c.b16 %v763, %v747
          %v828 = vpack.c.b16 %v764, %v748
          %v829 = vpack.c.b16 %v765, %v749
          %v830 = vpack.c.b16 %v766, %v750
          %v831 = vpack.c.b16 %v767, %v751
          %v832 = vpack.c.b16 %v768, %v752
          %v833 = vpack.c.b16 %v769, %v753
          %vm898 = vcmask 523264
          %v900 = vsel %vm898, %v429, 0
          %902 = vmatprep.subr.bf16.mxu0 0
          %903 = vmatpush1.bf16.msra.mxu0 0
          %904 = vmatprep.subr.bf16.mxu0 0
          %905 = vmatpush1.bf16.msra.mxu0 0
          %906 = vmatprep.subr.bf16.mxu0 0
          %907 = vmatpush1.bf16.msra.mxu0 0
          %908 = vmatprep.subr.bf16.mxu0 0
          %909 = vmatpush1.bf16.msra.mxu0 0
          %910 = vmatprep.subr.bf16.mxu0 %v819
          %911 = vmatpush1.bf16.msra.mxu0 %v818
          %912 = vmatprep.subr.bf16.mxu0 %v803
          %913 = vmatpush1.bf16.msra.mxu0 %v802
          %914 = vmatprep.subr.bf16.mxu0 %v787
          %915 = vmatpush1.bf16.msra.mxu0 %v786
          %916 = vmatprep.subr.bf16.mxu0 %v771
          %917 = vmatpush1.bf16.msra.mxu0 %v770
          %918 = vmatprep.subr.bf16.mxu0 0
          %919 = vmatpush2.bf16.msra.mxu0 0
          %920 = vmatprep.subr.bf16.mxu0 0
          %921 = vmatpush2.bf16.msra.mxu0 0
          %922 = vmatprep.subr.bf16.mxu0 0
          %923 = vmatpush2.bf16.msra.mxu0 0
          %924 = vmatprep.subr.bf16.mxu0 0
          %925 = vmatpush2.bf16.msra.mxu0 0
          %926 = vmatprep.subr.bf16.mxu0 0
          %927 = vmatpush2.bf16.msra.mxu0 0
          %928 = vmatprep.subr.bf16.mxu0 0
          %929 = vmatpush2.bf16.msra.mxu0 0
          %930 = vmatprep.subr.bf16.mxu0 0
          %931 = vmatpush2.bf16.msra.mxu0 0
          %932 = vmatprep.subr.bf16.mxu0 0
          %933 = vmatpush2.bf16.msra.mxu0 0
          %934 = vmatprep.mubr.bf16.mxu0 0
          %935 = vmatmul.mubr.bf16.gmra.mxu0 %v900
          %v936 = vpop.f32.mrf.mxu0
          %v937 = vadd.f32 %v501, %v936
          %v938 = vpop.f32.mrf.mxu0
          %v939 = vadd.f32 %v505, %v938
          %v940 = vpop.f32.mrf.mxu0
          %v941 = vpop.f32.mrf.mxu0
          %942 = vdwg.mxu0
          %943 = vmatprep.subr.bf16.mxu0 0
          %944 = vmatpush1.bf16.msra.mxu0 0
          %945 = vmatprep.subr.bf16.mxu0 0
          %946 = vmatpush1.bf16.msra.mxu0 0
          %947 = vmatprep.subr.bf16.mxu0 0
          %948 = vmatpush1.bf16.msra.mxu0 0
          %949 = vmatprep.subr.bf16.mxu0 0
          %950 = vmatpush1.bf16.msra.mxu0 0
          %951 = vmatprep.subr.bf16.mxu0 %v821
          %952 = vmatpush1.bf16.msra.mxu0 %v820
          %953 = vmatprep.subr.bf16.mxu0 %v805
          %954 = vmatpush1.bf16.msra.mxu0 %v804
          %955 = vmatprep.subr.bf16.mxu0 %v789
          %956 = vmatpush1.bf16.msra.mxu0 %v788
          %957 = vmatprep.subr.bf16.mxu0 %v773
          %958 = vmatpush1.bf16.msra.mxu0 %v772
          %959 = vmatprep.subr.bf16.mxu0 0
          %960 = vmatpush2.bf16.msra.mxu0 0
          %961 = vmatprep.subr.bf16.mxu0 0
          %962 = vmatpush2.bf16.msra.mxu0 0
          %963 = vmatprep.subr.bf16.mxu0 0
          %964 = vmatpush2.bf16.msra.mxu0 0
          %965 = vmatprep.subr.bf16.mxu0 0
          %966 = vmatpush2.bf16.msra.mxu0 0
          %967 = vmatprep.subr.bf16.mxu0 0
          %968 = vmatpush2.bf16.msra.mxu0 0
          %969 = vmatprep.subr.bf16.mxu0 0
          %970 = vmatpush2.bf16.msra.mxu0 0
          %971 = vmatprep.subr.bf16.mxu0 0
          %972 = vmatpush2.bf16.msra.mxu0 0
          %973 = vmatprep.subr.bf16.mxu0 0
          %974 = vmatpush2.bf16.msra.mxu0 0
          %975 = vmatprep.mubr.bf16.mxu0 0
          %976 = vmatmul.mubr.bf16.gmra.mxu0 %v900
          %v977 = vpop.f32.mrf.mxu0
          %v978 = vadd.f32 %v509, %v977
          %v979 = vpop.f32.mrf.mxu0
          %v980 = vadd.f32 %v513, %v979
          %v981 = vpop.f32.mrf.mxu0
          %v982 = vpop.f32.mrf.mxu0
          %983 = vdwg.mxu0
          %984 = vmatprep.subr.bf16.mxu0 0
          %985 = vmatpush1.bf16.msra.mxu0 0
          %986 = vmatprep.subr.bf16.mxu0 0
          %987 = vmatpush1.bf16.msra.mxu0 0
          %988 = vmatprep.subr.bf16.mxu0 0
          %989 = vmatpush1.bf16.msra.mxu0 0
          %990 = vmatprep.subr.bf16.mxu0 0
          %991 = vmatpush1.bf16.msra.mxu0 0
          %992 = vmatprep.subr.bf16.mxu0 %v823
          %993 = vmatpush1.bf16.msra.mxu0 %v822
          %994 = vmatprep.subr.bf16.mxu0 %v807
          %995 = vmatpush1.bf16.msra.mxu0 %v806
          %996 = vmatprep.subr.bf16.mxu0 %v791
          %997 = vmatpush1.bf16.msra.mxu0 %v790
          %998 = vmatprep.subr.bf16.mxu0 %v775
          %999 = vmatpush1.bf16.msra.mxu0 %v774
          %1000 = vmatprep.subr.bf16.mxu0 0
          %1001 = vmatpush2.bf16.msra.mxu0 0
          %1002 = vmatprep.subr.bf16.mxu0 0
          %1003 = vmatpush2.bf16.msra.mxu0 0
          %1004 = vmatprep.subr.bf16.mxu0 0
          %1005 = vmatpush2.bf16.msra.mxu0 0
          %1006 = vmatprep.subr.bf16.mxu0 0
          %1007 = vmatpush2.bf16.msra.mxu0 0
          %1008 = vmatprep.subr.bf16.mxu0 0
          %1009 = vmatpush2.bf16.msra.mxu0 0
          %1010 = vmatprep.subr.bf16.mxu0 0
          %1011 = vmatpush2.bf16.msra.mxu0 0
          %1012 = vmatprep.subr.bf16.mxu0 0
          %1013 = vmatpush2.bf16.msra.mxu0 0
          %1014 = vmatprep.subr.bf16.mxu0 0
          %1015 = vmatpush2.bf16.msra.mxu0 0
          %1016 = vmatprep.mubr.bf16.mxu0 0
          %1017 = vmatmul.mubr.bf16.gmra.mxu0 %v900
          %v1018 = vpop.f32.mrf.mxu0
          %v1019 = vadd.f32 %v517, %v1018
          %v1020 = vpop.f32.mrf.mxu0
          %v1021 = vadd.f32 %v521, %v1020
          %v1022 = vpop.f32.mrf.mxu0
          %v1023 = vpop.f32.mrf.mxu0
          %1024 = vdwg.mxu0
          %1025 = vmatprep.subr.bf16.mxu0 0
          %1026 = vmatpush1.bf16.msra.mxu0 0
          %1027 = vmatprep.subr.bf16.mxu0 0
          %1028 = vmatpush1.bf16.msra.mxu0 0
          %1029 = vmatprep.subr.bf16.mxu0 0
          %1030 = vmatpush1.bf16.msra.mxu0 0
          %1031 = vmatprep.subr.bf16.mxu0 0
          %1032 = vmatpush1.bf16.msra.mxu0 0
          %1033 = vmatprep.subr.bf16.mxu0 %v825
          %1034 = vmatpush1.bf16.msra.mxu0 %v824
          %1035 = vmatprep.subr.bf16.mxu0 %v809
          %1036 = vmatpush1.bf16.msra.mxu0 %v808
          %1037 = vmatprep.subr.bf16.mxu0 %v793
          %1038 = vmatpush1.bf16.msra.mxu0 %v792
          %1039 = vmatprep.subr.bf16.mxu0 %v777
          %1040 = vmatpush1.bf16.msra.mxu0 %v776
          %1041 = vmatprep.subr.bf16.mxu0 0
          %1042 = vmatpush2.bf16.msra.mxu0 0
          %1043 = vmatprep.subr.bf16.mxu0 0
          %1044 = vmatpush2.bf16.msra.mxu0 0
          %1045 = vmatprep.subr.bf16.mxu0 0
          %1046 = vmatpush2.bf16.msra.mxu0 0
          %1047 = vmatprep.subr.bf16.mxu0 0
          %1048 = vmatpush2.bf16.msra.mxu0 0
          %1049 = vmatprep.subr.bf16.mxu0 0
          %1050 = vmatpush2.bf16.msra.mxu0 0
          %1051 = vmatprep.subr.bf16.mxu0 0
          %1052 = vmatpush2.bf16.msra.mxu0 0
          %1053 = vmatprep.subr.bf16.mxu0 0
          %1054 = vmatpush2.bf16.msra.mxu0 0
          %1055 = vmatprep.subr.bf16.mxu0 0
          %1056 = vmatpush2.bf16.msra.mxu0 0
          %1057 = vmatprep.mubr.bf16.mxu0 0
          %1058 = vmatmul.mubr.bf16.gmra.mxu0 %v900
          %v1059 = vpop.f32.mrf.mxu0
          %v1060 = vadd.f32 %v525, %v1059
          %v1061 = vpop.f32.mrf.mxu0
          %v1062 = vadd.f32 %v529, %v1061
          %v1063 = vpop.f32.mrf.mxu0
          %v1064 = vpop.f32.mrf.mxu0
          %1065 = vdwg.mxu0
          %1066 = vmatprep.subr.bf16.mxu0 0
          %1067 = vmatpush1.bf16.msra.mxu0 0
          %1068 = vmatprep.subr.bf16.mxu0 0
          %1069 = vmatpush1.bf16.msra.mxu0 0
          %1070 = vmatprep.subr.bf16.mxu0 0
          %1071 = vmatpush1.bf16.msra.mxu0 0
          %1072 = vmatprep.subr.bf16.mxu0 0
          %1073 = vmatpush1.bf16.msra.mxu0 0
          %1074 = vmatprep.subr.bf16.mxu0 %v827
          %1075 = vmatpush1.bf16.msra.mxu0 %v826
          %1076 = vmatprep.subr.bf16.mxu0 %v811
          %1077 = vmatpush1.bf16.msra.mxu0 %v810
          %1078 = vmatprep.subr.bf16.mxu0 %v795
          %1079 = vmatpush1.bf16.msra.mxu0 %v794
          %1080 = vmatprep.subr.bf16.mxu0 %v779
          %1081 = vmatpush1.bf16.msra.mxu0 %v778
          %1082 = vmatprep.subr.bf16.mxu0 0
          %1083 = vmatpush2.bf16.msra.mxu0 0
          %1084 = vmatprep.subr.bf16.mxu0 0
          %1085 = vmatpush2.bf16.msra.mxu0 0
          %1086 = vmatprep.subr.bf16.mxu0 0
          %1087 = vmatpush2.bf16.msra.mxu0 0
          %1088 = vmatprep.subr.bf16.mxu0 0
          %1089 = vmatpush2.bf16.msra.mxu0 0
          %1090 = vmatprep.subr.bf16.mxu0 0
          %1091 = vmatpush2.bf16.msra.mxu0 0
          %1092 = vmatprep.subr.bf16.mxu0 0
          %1093 = vmatpush2.bf16.msra.mxu0 0
          %1094 = vmatprep.subr.bf16.mxu0 0
          %1095 = vmatpush2.bf16.msra.mxu0 0
          %1096 = vmatprep.subr.bf16.mxu0 0
          %1097 = vmatpush2.bf16.msra.mxu0 0
          %1098 = vmatprep.mubr.bf16.mxu0 0
          %1099 = vmatmul.mubr.bf16.gmra.mxu0 %v900
          %v1100 = vpop.f32.mrf.mxu0
          %v1101 = vadd.f32 %v533, %v1100
          %v1102 = vpop.f32.mrf.mxu0
          %v1103 = vadd.f32 %v537, %v1102
          %v1104 = vpop.f32.mrf.mxu0
          %v1105 = vpop.f32.mrf.mxu0
          %1106 = vdwg.mxu0
          %1107 = vmatprep.subr.bf16.mxu0 0
          %1108 = vmatpush1.bf16.msra.mxu0 0
          %1109 = vmatprep.subr.bf16.mxu0 0
          %1110 = vmatpush1.bf16.msra.mxu0 0
          %1111 = vmatprep.subr.bf16.mxu0 0
          %1112 = vmatpush1.bf16.msra.mxu0 0
          %1113 = vmatprep.subr.bf16.mxu0 0
          %1114 = vmatpush1.bf16.msra.mxu0 0
          %1115 = vmatprep.subr.bf16.mxu0 %v829
          %1116 = vmatpush1.bf16.msra.mxu0 %v828
          %1117 = vmatprep.subr.bf16.mxu0 %v813
          %1118 = vmatpush1.bf16.msra.mxu0 %v812
          %1119 = vmatprep.subr.bf16.mxu0 %v797
          %1120 = vmatpush1.bf16.msra.mxu0 %v796
          %1121 = vmatprep.subr.bf16.mxu0 %v781
          %1122 = vmatpush1.bf16.msra.mxu0 %v780
          %1123 = vmatprep.subr.bf16.mxu0 0
          %1124 = vmatpush2.bf16.msra.mxu0 0
          %1125 = vmatprep.subr.bf16.mxu0 0
          %1126 = vmatpush2.bf16.msra.mxu0 0
          %1127 = vmatprep.subr.bf16.mxu0 0
          %1128 = vmatpush2.bf16.msra.mxu0 0
          %1129 = vmatprep.subr.bf16.mxu0 0
          %1130 = vmatpush2.bf16.msra.mxu0 0
          %1131 = vmatprep.subr.bf16.mxu0 0
          %1132 = vmatpush2.bf16.msra.mxu0 0
          %1133 = vmatprep.subr.bf16.mxu0 0
          %1134 = vmatpush2.bf16.msra.mxu0 0
          %1135 = vmatprep.subr.bf16.mxu0 0
          %1136 = vmatpush2.bf16.msra.mxu0 0
          %1137 = vmatprep.subr.bf16.mxu0 0
          %1138 = vmatpush2.bf16.msra.mxu0 0
          %1139 = vmatprep.mubr.bf16.mxu0 0
          %1140 = vmatmul.mubr.bf16.gmra.mxu0 %v900
          %v1141 = vpop.f32.mrf.mxu0
          %v1142 = vadd.f32 %v541, %v1141
          %v1143 = vpop.f32.mrf.mxu0
          %v1144 = vadd.f32 %v545, %v1143
          %v1145 = vpop.f32.mrf.mxu0
          %v1146 = vpop.f32.mrf.mxu0
          %1147 = vdwg.mxu0
          %1148 = vmatprep.subr.bf16.mxu0 0
          %1149 = vmatpush1.bf16.msra.mxu0 0
          %1150 = vmatprep.subr.bf16.mxu0 0
          %1151 = vmatpush1.bf16.msra.mxu0 0
          %1152 = vmatprep.subr.bf16.mxu0 0
          %1153 = vmatpush1.bf16.msra.mxu0 0
          %1154 = vmatprep.subr.bf16.mxu0 0
          %1155 = vmatpush1.bf16.msra.mxu0 0
          %1156 = vmatprep.subr.bf16.mxu0 %v831
          %1157 = vmatpush1.bf16.msra.mxu0 %v830
          %1158 = vmatprep.subr.bf16.mxu0 %v815
          %1159 = vmatpush1.bf16.msra.mxu0 %v814
          %1160 = vmatprep.subr.bf16.mxu0 %v799
          %1161 = vmatpush1.bf16.msra.mxu0 %v798
          %1162 = vmatprep.subr.bf16.mxu0 %v783
          %1163 = vmatpush1.bf16.msra.mxu0 %v782
          %1164 = vmatprep.subr.bf16.mxu0 0
          %1165 = vmatpush2.bf16.msra.mxu0 0
          %1166 = vmatprep.subr.bf16.mxu0 0
          %1167 = vmatpush2.bf16.msra.mxu0 0
          %1168 = vmatprep.subr.bf16.mxu0 0
          %1169 = vmatpush2.bf16.msra.mxu0 0
          %1170 = vmatprep.subr.bf16.mxu0 0
          %1171 = vmatpush2.bf16.msra.mxu0 0
          %1172 = vmatprep.subr.bf16.mxu0 0
          %1173 = vmatpush2.bf16.msra.mxu0 0
          %1174 = vmatprep.subr.bf16.mxu0 0
          %1175 = vmatpush2.bf16.msra.mxu0 0
          %1176 = vmatprep.subr.bf16.mxu0 0
          %1177 = vmatpush2.bf16.msra.mxu0 0
          %1178 = vmatprep.subr.bf16.mxu0 0
          %1179 = vmatpush2.bf16.msra.mxu0 0
          %1180 = vmatprep.mubr.bf16.mxu0 0
          %1181 = vmatmul.mubr.bf16.gmra.mxu0 %v900
          %v1182 = vpop.f32.mrf.mxu0
          %v1183 = vadd.f32 %v549, %v1182
          %v1184 = vpop.f32.mrf.mxu0
          %v1185 = vadd.f32 %v553, %v1184
          %v1186 = vpop.f32.mrf.mxu0
          %v1187 = vpop.f32.mrf.mxu0
          %1188 = vdwg.mxu0
          %1189 = vmatprep.subr.bf16.mxu0 0
          %1190 = vmatpush1.bf16.msra.mxu0 0
          %1191 = vmatprep.subr.bf16.mxu0 0
          %1192 = vmatpush1.bf16.msra.mxu0 0
          %1193 = vmatprep.subr.bf16.mxu0 0
          %1194 = vmatpush1.bf16.msra.mxu0 0
          %1195 = vmatprep.subr.bf16.mxu0 0
          %1196 = vmatpush1.bf16.msra.mxu0 0
          %1197 = vmatprep.subr.bf16.mxu0 %v833
          %1198 = vmatpush1.bf16.msra.mxu0 %v832
          %1199 = vmatprep.subr.bf16.mxu0 %v817
          %1200 = vmatpush1.bf16.msra.mxu0 %v816
          %1201 = vmatprep.subr.bf16.mxu0 %v801
          %1202 = vmatpush1.bf16.msra.mxu0 %v800
          %1203 = vmatprep.subr.bf16.mxu0 %v785
          %1204 = vmatpush1.bf16.msra.mxu0 %v784
          %1205 = vmatprep.subr.bf16.mxu0 0
          %1206 = vmatpush2.bf16.msra.mxu0 0
          %1207 = vmatprep.subr.bf16.mxu0 0
          %1208 = vmatpush2.bf16.msra.mxu0 0
          %1209 = vmatprep.subr.bf16.mxu0 0
          %1210 = vmatpush2.bf16.msra.mxu0 0
          %1211 = vmatprep.subr.bf16.mxu0 0
          %1212 = vmatpush2.bf16.msra.mxu0 0
          %1213 = vmatprep.subr.bf16.mxu0 0
          %1214 = vmatpush2.bf16.msra.mxu0 0
          %1215 = vmatprep.subr.bf16.mxu0 0
          %1216 = vmatpush2.bf16.msra.mxu0 0
          %1217 = vmatprep.subr.bf16.mxu0 0
          %1218 = vmatpush2.bf16.msra.mxu0 0
          %1219 = vmatprep.subr.bf16.mxu0 0
          %1220 = vmatpush2.bf16.msra.mxu0 0
          %1221 = vmatprep.mubr.bf16.mxu0 0
          %1222 = vmatmul.mubr.bf16.gmra.mxu0 %v900
          %v1223 = vpop.f32.mrf.mxu0
          %v1224 = vadd.f32 %v557, %v1223
          %v1225 = vpop.f32.mrf.mxu0
          %v1226 = vadd.f32 %v561, %v1225
          %v1227 = vpop.f32.mrf.mxu0
          %v1228 = vpop.f32.mrf.mxu0
          %1229 = vdwg.mxu0
          %v1230 = vmax.f32 %v937, 0.0
          %v1231 = vmax.f32 %v939, 0.0
          %v1232 = vmax.f32 %v978, 0.0
          %v1233 = vmax.f32 %v980, 0.0
          %v1234 = vmax.f32 %v1019, 0.0
          %v1235 = vmax.f32 %v1021, 0.0
          %v1236 = vmax.f32 %v1060, 0.0
          %v1237 = vmax.f32 %v1062, 0.0
          %v1238 = vmax.f32 %v1101, 0.0
          %v1239 = vmax.f32 %v1103, 0.0
          %v1240 = vmax.f32 %v1142, 0.0
          %v1241 = vmax.f32 %v1144, 0.0
          %v1242 = vmax.f32 %v1183, 0.0
          %v1243 = vmax.f32 %v1185, 0.0
          %v1244 = vmax.f32 %v1224, 0.0
          %v1245 = vmax.f32 %v1226, 0.0
          %1246 = vst [vmem:[#allocation2] sm:$0xff] %v1230
          %1247 = vst [vmem:[#allocation2 + $0x8] sm:$0xff] %v1231
          %1248 = vst [vmem:[#allocation2 + $0x10] sm:$0xff] %v1232
          %1249 = vst [vmem:[#allocation2 + $0x18] sm:$0xff] %v1233
          %1250 = vst [vmem:[#allocation2 + $0x20] sm:$0xff] %v1234
          %1251 = vst [vmem:[#allocation2 + $0x28] sm:$0xff] %v1235
          %1252 = vst [vmem:[#allocation2 + $0x30] sm:$0xff] %v1236
          %1253 = vst [vmem:[#allocation2 + $0x38] sm:$0xff] %v1237
          %1254 = vst [vmem:[#allocation2 + $0x40] sm:$0xff] %v1238
          %1255 = vst [vmem:[#allocation2 + $0x48] sm:$0xff] %v1239
          %1256 = vst [vmem:[#allocation2 + $0x50] sm:$0xff] %v1240
          %1257 = vst [vmem:[#allocation2 + $0x58] sm:$0xff] %v1241
          %1258 = vst [vmem:[#allocation2 + $0x60] sm:$0xff] %v1242
          %1259 = vst [vmem:[#allocation2 + $0x68] sm:$0xff] %v1243
          %1260 = vst [vmem:[#allocation2 + $0x70] sm:$0xff] %v1244
          %1261 = vst [vmem:[#allocation2 + $0x78] sm:$0xff] %v1245
        $region76: #{gen_forward_pallas.1} parent=47 // pred_fallthru
          _
        %v1262 = vld [vmem:[#allocation2] sm:$0xff]
        %v1263 = vld [vmem:[#allocation2 + $0x8] sm:$0xff]
        %v1264 = vld [vmem:[#allocation2 + $0x10] sm:$0xff]
        %v1265 = vld [vmem:[#allocation2 + $0x18] sm:$0xff]
        %v1266 = vld [vmem:[#allocation2 + $0x20] sm:$0xff]
        %v1267 = vld [vmem:[#allocation2 + $0x28] sm:$0xff]
        %v1268 = vld [vmem:[#allocation2 + $0x30] sm:$0xff]
        %v1269 = vld [vmem:[#allocation2 + $0x38] sm:$0xff]
        %v1270 = vld [vmem:[#allocation2 + $0x40] sm:$0xff]
        %v1271 = vld [vmem:[#allocation2 + $0x48] sm:$0xff]
        %v1272 = vld [vmem:[#allocation2 + $0x50] sm:$0xff]
        %v1273 = vld [vmem:[#allocation2 + $0x58] sm:$0xff]
        %v1274 = vld [vmem:[#allocation2 + $0x60] sm:$0xff]
        %v1275 = vld [vmem:[#allocation2 + $0x68] sm:$0xff]
        %v1276 = vld [vmem:[#allocation2 + $0x70] sm:$0xff]
        %v1277 = vld [vmem:[#allocation2 + $0x78] sm:$0xff]
        %v1278 = vld [vmem:[#allocation3] sm:$0xff]
        %v1279 = vld [vmem:[#allocation3 + $0x8] sm:$0xff]
        %v1280 = vld [vmem:[#allocation3 + $0x10] sm:$0xff]
        %v1281 = vld [vmem:[#allocation3 + $0x18] sm:$0xff]
        %v1282 = vld [vmem:[#allocation3 + $0x20] sm:$0xff]
        %v1283 = vld [vmem:[#allocation3 + $0x28] sm:$0xff]
        %v1284 = vld [vmem:[#allocation3 + $0x30] sm:$0xff]
        %v1285 = vld [vmem:[#allocation3 + $0x38] sm:$0xff]
        %v1286 = vld [vmem:[#allocation3 + $0x40] sm:$0xff]
        %v1287 = vld [vmem:[#allocation3 + $0x48] sm:$0xff]
        %v1288 = vld [vmem:[#allocation3 + $0x50] sm:$0xff]
        %v1289 = vld [vmem:[#allocation3 + $0x58] sm:$0xff]
        %v1290 = vld [vmem:[#allocation3 + $0x60] sm:$0xff]
        %v1291 = vld [vmem:[#allocation3 + $0x68] sm:$0xff]
        %v1292 = vld [vmem:[#allocation3 + $0x70] sm:$0xff]
        %v1293 = vld [vmem:[#allocation3 + $0x78] sm:$0xff]
        %s1294 = scalar_select %p422, 1, 0
        %v1295 = vstv %s1294
        %vm1296 = vcmp.eq.s32.totalorder %v1295, 1
        %v1297 = vsel %vm1296, %v1262, %v1278
        %v1298 = vsel %vm1296, %v1263, %v1279
        %v1299 = vsel %vm1296, %v1264, %v1280
        %v1300 = vsel %vm1296, %v1265, %v1281
        %v1301 = vsel %vm1296, %v1266, %v1282
        %v1302 = vsel %vm1296, %v1267, %v1283
        %v1303 = vsel %vm1296, %v1268, %v1284
        %v1304 = vsel %vm1296, %v1269, %v1285
        %v1305 = vsel %vm1296, %v1270, %v1286
        %v1306 = vsel %vm1296, %v1271, %v1287
        %v1307 = vsel %vm1296, %v1272, %v1288
        %v1308 = vsel %vm1296, %v1273, %v1289
        %v1309 = vsel %vm1296, %v1274, %v1290
        %v1310 = vsel %vm1296, %v1275, %v1291
        %v1311 = vsel %vm1296, %v1276, %v1292
        %v1312 = vsel %vm1296, %v1277, %v1293
        %v1313 = vpack.c.bf16 %v1297, %v1297
        %v1314 = vpack.c.bf16 %v1298, %v1298
        %v1315 = vpack.c.bf16 %v1299, %v1299
        %v1316 = vpack.c.bf16 %v1300, %v1300
        %v1317 = vpack.c.bf16 %v1301, %v1301
        %v1318 = vpack.c.bf16 %v1302, %v1302
        %v1319 = vpack.c.bf16 %v1303, %v1303
        %v1320 = vpack.c.bf16 %v1304, %v1304
        %v1321 = vpack.c.bf16 %v1305, %v1305
        %v1322 = vpack.c.bf16 %v1306, %v1306
        %v1323 = vpack.c.bf16 %v1307, %v1307
        %v1324 = vpack.c.bf16 %v1308, %v1308
        %v1325 = vpack.c.bf16 %v1309, %v1309
        %v1326 = vpack.c.bf16 %v1310, %v1310
        %v1327 = vpack.c.bf16 %v1311, %v1311
        %v1328 = vpack.c.bf16 %v1312, %v1312
        %v1329 = vld [vmem:[%s367] sm:$0xff]
        %v1330 = vld [vmem:[%s367 + $0x8] sm:$0xff]
        %v1331 = vld [vmem:[%s367 + $0x10] sm:$0xff]
        %v1332 = vld [vmem:[%s367 + $0x18] sm:$0xff]
        %v1333 = vld [vmem:[%s367 + $0x20] sm:$0xff]
        %v1334 = vld [vmem:[%s367 + $0x28] sm:$0xff]
        %v1335 = vld [vmem:[%s367 + $0x30] sm:$0xff]
        %v1336 = vld [vmem:[%s367 + $0x38] sm:$0xff]
        %v1337 = vld [vmem:[%s367 + $0x40] sm:$0xff]
        %v1338 = vld [vmem:[%s367 + $0x48] sm:$0xff]
        %v1339 = vld [vmem:[%s367 + $0x50] sm:$0xff]
        %v1340 = vld [vmem:[%s367 + $0x58] sm:$0xff]
        %v1341 = vld [vmem:[%s367 + $0x60] sm:$0xff]
        %v1342 = vld [vmem:[%s367 + $0x68] sm:$0xff]
        %v1343 = vld [vmem:[%s367 + $0x70] sm:$0xff]
        %v1344 = vld [vmem:[%s367 + $0x78] sm:$0xff]
        %v1345 = vld [vmem:[%s367 + $0x80] sm:$0xff]
        %v1346 = vld [vmem:[%s367 + $0x88] sm:$0xff]
        %v1347 = vld [vmem:[%s367 + $0x90] sm:$0xff]
        %v1348 = vld [vmem:[%s367 + $0x98] sm:$0xff]
        %v1349 = vld [vmem:[%s367 + $0xa0] sm:$0xff]
        %v1350 = vld [vmem:[%s367 + $0xa8] sm:$0xff]
        %v1351 = vld [vmem:[%s367 + $0xb0] sm:$0xff]
        %v1352 = vld [vmem:[%s367 + $0xb8] sm:$0xff]
        %v1353 = vld [vmem:[%s367 + $0xc0] sm:$0xff]
        %v1354 = vld [vmem:[%s367 + $0xc8] sm:$0xff]
        %v1355 = vld [vmem:[%s367 + $0xd0] sm:$0xff]
        %v1356 = vld [vmem:[%s367 + $0xd8] sm:$0xff]
        %v1357 = vld [vmem:[%s367 + $0xe0] sm:$0xff]
        %v1358 = vld [vmem:[%s367 + $0xe8] sm:$0xff]
        %v1359 = vld [vmem:[%s367 + $0xf0] sm:$0xff]
        %v1360 = vld [vmem:[%s367 + $0xf8] sm:$0xff]
        %v1361 = vld [vmem:[%s367 + $0x100] sm:$0xff]
        %v1362 = vld [vmem:[%s367 + $0x108] sm:$0xff]
        %v1363 = vld [vmem:[%s367 + $0x110] sm:$0xff]
        %v1364 = vld [vmem:[%s367 + $0x118] sm:$0xff]
        %v1365 = vld [vmem:[%s367 + $0x120] sm:$0xff]
        %v1366 = vld [vmem:[%s367 + $0x128] sm:$0xff]
        %v1367 = vld [vmem:[%s367 + $0x130] sm:$0xff]
        %v1368 = vld [vmem:[%s367 + $0x138] sm:$0xff]
        %v1369 = vld [vmem:[%s367 + $0x140] sm:$0xff]
        %v1370 = vld [vmem:[%s367 + $0x148] sm:$0xff]
        %v1371 = vld [vmem:[%s367 + $0x150] sm:$0xff]
        %v1372 = vld [vmem:[%s367 + $0x158] sm:$0xff]
        %v1373 = vld [vmem:[%s367 + $0x160] sm:$0xff]
        %v1374 = vld [vmem:[%s367 + $0x168] sm:$0xff]
        %v1375 = vld [vmem:[%s367 + $0x170] sm:$0xff]
        %v1376 = vld [vmem:[%s367 + $0x178] sm:$0xff]
        %v1377 = vld [vmem:[%s367 + $0x180] sm:$0xff]
        %v1378 = vld [vmem:[%s367 + $0x188] sm:$0xff]
        %v1379 = vld [vmem:[%s367 + $0x190] sm:$0xff]
        %v1380 = vld [vmem:[%s367 + $0x198] sm:$0xff]
        %v1381 = vld [vmem:[%s367 + $0x1a0] sm:$0xff]
        %v1382 = vld [vmem:[%s367 + $0x1a8] sm:$0xff]
        %v1383 = vld [vmem:[%s367 + $0x1b0] sm:$0xff]
        %v1384 = vld [vmem:[%s367 + $0x1b8] sm:$0xff]
        %v1385 = vld [vmem:[%s367 + $0x1c0] sm:$0xff]
        %v1386 = vld [vmem:[%s367 + $0x1c8] sm:$0xff]
        %v1387 = vld [vmem:[%s367 + $0x1d0] sm:$0xff]
        %v1388 = vld [vmem:[%s367 + $0x1d8] sm:$0xff]
        %v1389 = vld [vmem:[%s367 + $0x1e0] sm:$0xff]
        %v1390 = vld [vmem:[%s367 + $0x1e8] sm:$0xff]
        %v1391 = vld [vmem:[%s367 + $0x1f0] sm:$0xff]
        %v1392 = vld [vmem:[%s367 + $0x1f8] sm:$0xff]
        %v1393 = vld [vmem:[%s367 + $0x200] sm:$0xff]
        %v1394 = vld [vmem:[%s367 + $0x208] sm:$0xff]
        %v1395 = vld [vmem:[%s367 + $0x210] sm:$0xff]
        %v1396 = vld [vmem:[%s367 + $0x218] sm:$0xff]
        %v1397 = vld [vmem:[%s367 + $0x220] sm:$0xff]
        %v1398 = vld [vmem:[%s367 + $0x228] sm:$0xff]
        %v1399 = vld [vmem:[%s367 + $0x230] sm:$0xff]
        %v1400 = vld [vmem:[%s367 + $0x238] sm:$0xff]
        %v1401 = vld [vmem:[%s367 + $0x240] sm:$0xff]
        %v1402 = vld [vmem:[%s367 + $0x248] sm:$0xff]
        %v1403 = vld [vmem:[%s367 + $0x250] sm:$0xff]
        %v1404 = vld [vmem:[%s367 + $0x258] sm:$0xff]
        %v1405 = vld [vmem:[%s367 + $0x260] sm:$0xff]
        %v1406 = vld [vmem:[%s367 + $0x268] sm:$0xff]
        %v1407 = vld [vmem:[%s367 + $0x270] sm:$0xff]
        %v1408 = vld [vmem:[%s367 + $0x278] sm:$0xff]
        %v1409 = vld [vmem:[%s367 + $0x280] sm:$0xff]
        %v1410 = vld [vmem:[%s367 + $0x288] sm:$0xff]
        %v1411 = vld [vmem:[%s367 + $0x290] sm:$0xff]
        %v1412 = vld [vmem:[%s367 + $0x298] sm:$0xff]
        %v1413 = vld [vmem:[%s367 + $0x2a0] sm:$0xff]
        %v1414 = vld [vmem:[%s367 + $0x2a8] sm:$0xff]
        %v1415 = vld [vmem:[%s367 + $0x2b0] sm:$0xff]
        %v1416 = vld [vmem:[%s367 + $0x2b8] sm:$0xff]
        %v1417 = vld [vmem:[%s367 + $0x2c0] sm:$0xff]
        %v1418 = vld [vmem:[%s367 + $0x2c8] sm:$0xff]
        %v1419 = vld [vmem:[%s367 + $0x2d0] sm:$0xff]
        %v1420 = vld [vmem:[%s367 + $0x2d8] sm:$0xff]
        %v1421 = vld [vmem:[%s367 + $0x2e0] sm:$0xff]
        %v1422 = vld [vmem:[%s367 + $0x2e8] sm:$0xff]
        %v1423 = vld [vmem:[%s367 + $0x2f0] sm:$0xff]
        %v1424 = vld [vmem:[%s367 + $0x2f8] sm:$0xff]
        %v1425 = vld [vmem:[%s367 + $0x300] sm:$0xff]
        %v1426 = vld [vmem:[%s367 + $0x308] sm:$0xff]
        %v1427 = vld [vmem:[%s367 + $0x310] sm:$0xff]
        %v1428 = vld [vmem:[%s367 + $0x318] sm:$0xff]
        %v1429 = vld [vmem:[%s367 + $0x320] sm:$0xff]
        %v1430 = vld [vmem:[%s367 + $0x328] sm:$0xff]
        %v1431 = vld [vmem:[%s367 + $0x330] sm:$0xff]
        %v1432 = vld [vmem:[%s367 + $0x338] sm:$0xff]
        %v1433 = vld [vmem:[%s367 + $0x340] sm:$0xff]
        %v1434 = vld [vmem:[%s367 + $0x348] sm:$0xff]
        %v1435 = vld [vmem:[%s367 + $0x350] sm:$0xff]
        %v1436 = vld [vmem:[%s367 + $0x358] sm:$0xff]
        %v1437 = vld [vmem:[%s367 + $0x360] sm:$0xff]
        %v1438 = vld [vmem:[%s367 + $0x368] sm:$0xff]
        %v1439 = vld [vmem:[%s367 + $0x370] sm:$0xff]
        %v1440 = vld [vmem:[%s367 + $0x378] sm:$0xff]
        %v1441 = vld [vmem:[%s367 + $0x380] sm:$0xff]
        %v1442 = vld [vmem:[%s367 + $0x388] sm:$0xff]
        %v1443 = vld [vmem:[%s367 + $0x390] sm:$0xff]
        %v1444 = vld [vmem:[%s367 + $0x398] sm:$0xff]
        %v1445 = vld [vmem:[%s367 + $0x3a0] sm:$0xff]
        %v1446 = vld [vmem:[%s367 + $0x3a8] sm:$0xff]
        %v1447 = vld [vmem:[%s367 + $0x3b0] sm:$0xff]
        %v1448 = vld [vmem:[%s367 + $0x3b8] sm:$0xff]
        %v1449 = vld [vmem:[%s367 + $0x3c0] sm:$0xff]
        %v1450 = vld [vmem:[%s367 + $0x3c8] sm:$0xff]
        %v1451 = vld [vmem:[%s367 + $0x3d0] sm:$0xff]
        %v1452 = vld [vmem:[%s367 + $0x3d8] sm:$0xff]
        %v1453 = vld [vmem:[%s367 + $0x3e0] sm:$0xff]
        %v1454 = vld [vmem:[%s367 + $0x3e8] sm:$0xff]
        %v1455 = vld [vmem:[%s367 + $0x3f0] sm:$0xff]
        %v1456 = vld [vmem:[%s367 + $0x3f8] sm:$0xff]
        %v1457 = vld [vmem:[%s367 + $0x400] sm:$0xff]
        %v1458 = vld [vmem:[%s367 + $0x408] sm:$0xff]
        %v1459 = vld [vmem:[%s367 + $0x410] sm:$0xff]
        %v1460 = vld [vmem:[%s367 + $0x418] sm:$0xff]
        %v1461 = vld [vmem:[%s367 + $0x420] sm:$0xff]
        %v1462 = vld [vmem:[%s367 + $0x428] sm:$0xff]
        %v1463 = vld [vmem:[%s367 + $0x430] sm:$0xff]
        %v1464 = vld [vmem:[%s367 + $0x438] sm:$0xff]
        %v1465 = vld [vmem:[%s367 + $0x440] sm:$0xff]
        %v1466 = vld [vmem:[%s367 + $0x448] sm:$0xff]
        %v1467 = vld [vmem:[%s367 + $0x450] sm:$0xff]
        %v1468 = vld [vmem:[%s367 + $0x458] sm:$0xff]
        %v1469 = vld [vmem:[%s367 + $0x460] sm:$0xff]
        %v1470 = vld [vmem:[%s367 + $0x468] sm:$0xff]
        %v1471 = vld [vmem:[%s367 + $0x470] sm:$0xff]
        %v1472 = vld [vmem:[%s367 + $0x478] sm:$0xff]
        %v1473 = vld [vmem:[%s367 + $0x480] sm:$0xff]
        %v1474 = vld [vmem:[%s367 + $0x488] sm:$0xff]
        %v1475 = vld [vmem:[%s367 + $0x490] sm:$0xff]
        %v1476 = vld [vmem:[%s367 + $0x498] sm:$0xff]
        %v1477 = vld [vmem:[%s367 + $0x4a0] sm:$0xff]
        %v1478 = vld [vmem:[%s367 + $0x4a8] sm:$0xff]
        %v1479 = vld [vmem:[%s367 + $0x4b0] sm:$0xff]
        %v1480 = vld [vmem:[%s367 + $0x4b8] sm:$0xff]
        %v1481 = vld [vmem:[%s367 + $0x4c0] sm:$0xff]
        %v1482 = vld [vmem:[%s367 + $0x4c8] sm:$0xff]
        %v1483 = vld [vmem:[%s367 + $0x4d0] sm:$0xff]
        %v1484 = vld [vmem:[%s367 + $0x4d8] sm:$0xff]
        %v1485 = vld [vmem:[%s367 + $0x4e0] sm:$0xff]
        %v1486 = vld [vmem:[%s367 + $0x4e8] sm:$0xff]
        %v1487 = vld [vmem:[%s367 + $0x4f0] sm:$0xff]
        %v1488 = vld [vmem:[%s367 + $0x4f8] sm:$0xff]
        %v1489 = vld [vmem:[%s367 + $0x500] sm:$0xff]
        %v1490 = vld [vmem:[%s367 + $0x508] sm:$0xff]
        %v1491 = vld [vmem:[%s367 + $0x510] sm:$0xff]
        %v1492 = vld [vmem:[%s367 + $0x518] sm:$0xff]
        %v1493 = vld [vmem:[%s367 + $0x520] sm:$0xff]
        %v1494 = vld [vmem:[%s367 + $0x528] sm:$0xff]
        %v1495 = vld [vmem:[%s367 + $0x530] sm:$0xff]
        %v1496 = vld [vmem:[%s367 + $0x538] sm:$0xff]
        %v1497 = vld [vmem:[%s367 + $0x540] sm:$0xff]
        %v1498 = vld [vmem:[%s367 + $0x548] sm:$0xff]
        %v1499 = vld [vmem:[%s367 + $0x550] sm:$0xff]
        %v1500 = vld [vmem:[%s367 + $0x558] sm:$0xff]
        %v1501 = vld [vmem:[%s367 + $0x560] sm:$0xff]
        %v1502 = vld [vmem:[%s367 + $0x568] sm:$0xff]
        %v1503 = vld [vmem:[%s367 + $0x570] sm:$0xff]
        %v1504 = vld [vmem:[%s367 + $0x578] sm:$0xff]
        %v1505 = vld [vmem:[%s367 + $0x580] sm:$0xff]
        %v1506 = vld [vmem:[%s367 + $0x588] sm:$0xff]
        %v1507 = vld [vmem:[%s367 + $0x590] sm:$0xff]
        %v1508 = vld [vmem:[%s367 + $0x598] sm:$0xff]
        %v1509 = vld [vmem:[%s367 + $0x5a0] sm:$0xff]
        %v1510 = vld [vmem:[%s367 + $0x5a8] sm:$0xff]
        %v1511 = vld [vmem:[%s367 + $0x5b0] sm:$0xff]
        %v1512 = vld [vmem:[%s367 + $0x5b8] sm:$0xff]
        %v1513 = vld [vmem:[%s367 + $0x5c0] sm:$0xff]
        %v1514 = vld [vmem:[%s367 + $0x5c8] sm:$0xff]
        %v1515 = vld [vmem:[%s367 + $0x5d0] sm:$0xff]
        %v1516 = vld [vmem:[%s367 + $0x5d8] sm:$0xff]
        %v1517 = vld [vmem:[%s367 + $0x5e0] sm:$0xff]
        %v1518 = vld [vmem:[%s367 + $0x5e8] sm:$0xff]
        %v1519 = vld [vmem:[%s367 + $0x5f0] sm:$0xff]
        %v1520 = vld [vmem:[%s367 + $0x5f8] sm:$0xff]
        %v1521 = vld [vmem:[%s367 + $0x600] sm:$0xff]
        %v1522 = vld [vmem:[%s367 + $0x608] sm:$0xff]
        %v1523 = vld [vmem:[%s367 + $0x610] sm:$0xff]
        %v1524 = vld [vmem:[%s367 + $0x618] sm:$0xff]
        %v1525 = vld [vmem:[%s367 + $0x620] sm:$0xff]
        %v1526 = vld [vmem:[%s367 + $0x628] sm:$0xff]
        %v1527 = vld [vmem:[%s367 + $0x630] sm:$0xff]
        %v1528 = vld [vmem:[%s367 + $0x638] sm:$0xff]
        %v1529 = vld [vmem:[%s367 + $0x640] sm:$0xff]
        %v1530 = vld [vmem:[%s367 + $0x648] sm:$0xff]
        %v1531 = vld [vmem:[%s367 + $0x650] sm:$0xff]
        %v1532 = vld [vmem:[%s367 + $0x658] sm:$0xff]
        %v1533 = vld [vmem:[%s367 + $0x660] sm:$0xff]
        %v1534 = vld [vmem:[%s367 + $0x668] sm:$0xff]
        %v1535 = vld [vmem:[%s367 + $0x670] sm:$0xff]
        %v1536 = vld [vmem:[%s367 + $0x678] sm:$0xff]
        %v1537 = vld [vmem:[%s367 + $0x680] sm:$0xff]
        %v1538 = vld [vmem:[%s367 + $0x688] sm:$0xff]
        %v1539 = vld [vmem:[%s367 + $0x690] sm:$0xff]
        %v1540 = vld [vmem:[%s367 + $0x698] sm:$0xff]
        %v1541 = vld [vmem:[%s367 + $0x6a0] sm:$0xff]
        %v1542 = vld [vmem:[%s367 + $0x6a8] sm:$0xff]
        %v1543 = vld [vmem:[%s367 + $0x6b0] sm:$0xff]
        %v1544 = vld [vmem:[%s367 + $0x6b8] sm:$0xff]
        %v1545 = vld [vmem:[%s367 + $0x6c0] sm:$0xff]
        %v1546 = vld [vmem:[%s367 + $0x6c8] sm:$0xff]
        %v1547 = vld [vmem:[%s367 + $0x6d0] sm:$0xff]
        %v1548 = vld [vmem:[%s367 + $0x6d8] sm:$0xff]
        %v1549 = vld [vmem:[%s367 + $0x6e0] sm:$0xff]
        %v1550 = vld [vmem:[%s367 + $0x6e8] sm:$0xff]
        %v1551 = vld [vmem:[%s367 + $0x6f0] sm:$0xff]
        %v1552 = vld [vmem:[%s367 + $0x6f8] sm:$0xff]
        %v1553 = vld [vmem:[%s367 + $0x700] sm:$0xff]
        %v1554 = vld [vmem:[%s367 + $0x708] sm:$0xff]
        %v1555 = vld [vmem:[%s367 + $0x710] sm:$0xff]
        %v1556 = vld [vmem:[%s367 + $0x718] sm:$0xff]
        %v1557 = vld [vmem:[%s367 + $0x720] sm:$0xff]
        %v1558 = vld [vmem:[%s367 + $0x728] sm:$0xff]
        %v1559 = vld [vmem:[%s367 + $0x730] sm:$0xff]
        %v1560 = vld [vmem:[%s367 + $0x738] sm:$0xff]
        %v1561 = vld [vmem:[%s367 + $0x740] sm:$0xff]
        %v1562 = vld [vmem:[%s367 + $0x748] sm:$0xff]
        %v1563 = vld [vmem:[%s367 + $0x750] sm:$0xff]
        %v1564 = vld [vmem:[%s367 + $0x758] sm:$0xff]
        %v1565 = vld [vmem:[%s367 + $0x760] sm:$0xff]
        %v1566 = vld [vmem:[%s367 + $0x768] sm:$0xff]
        %v1567 = vld [vmem:[%s367 + $0x770] sm:$0xff]
        %v1568 = vld [vmem:[%s367 + $0x778] sm:$0xff]
        %v1569 = vld [vmem:[%s367 + $0x780] sm:$0xff]
        %v1570 = vld [vmem:[%s367 + $0x788] sm:$0xff]
        %v1571 = vld [vmem:[%s367 + $0x790] sm:$0xff]
        %v1572 = vld [vmem:[%s367 + $0x798] sm:$0xff]
        %v1573 = vld [vmem:[%s367 + $0x7a0] sm:$0xff]
        %v1574 = vld [vmem:[%s367 + $0x7a8] sm:$0xff]
        %v1575 = vld [vmem:[%s367 + $0x7b0] sm:$0xff]
        %v1576 = vld [vmem:[%s367 + $0x7b8] sm:$0xff]
        %v1577 = vld [vmem:[%s367 + $0x7c0] sm:$0xff]
        %v1578 = vld [vmem:[%s367 + $0x7c8] sm:$0xff]
        %v1579 = vld [vmem:[%s367 + $0x7d0] sm:$0xff]
        %v1580 = vld [vmem:[%s367 + $0x7d8] sm:$0xff]
        %v1581 = vld [vmem:[%s367 + $0x7e0] sm:$0xff]
        %v1582 = vld [vmem:[%s367 + $0x7e8] sm:$0xff]
        %v1583 = vld [vmem:[%s367 + $0x7f0] sm:$0xff]
        %v1584 = vld [vmem:[%s367 + $0x7f8] sm:$0xff]
        %v1585 = vld [vmem:[%s367 + $0x800] sm:$0xff]
        %v1586 = vld [vmem:[%s367 + $0x808] sm:$0xff]
        %v1587 = vld [vmem:[%s367 + $0x810] sm:$0xff]
        %v1588 = vld [vmem:[%s367 + $0x818] sm:$0xff]
        %v1589 = vld [vmem:[%s367 + $0x820] sm:$0xff]
        %v1590 = vld [vmem:[%s367 + $0x828] sm:$0xff]
        %v1591 = vld [vmem:[%s367 + $0x830] sm:$0xff]
        %v1592 = vld [vmem:[%s367 + $0x838] sm:$0xff]
        %v1593 = vld [vmem:[%s367 + $0x840] sm:$0xff]
        %v1594 = vld [vmem:[%s367 + $0x848] sm:$0xff]
        %v1595 = vld [vmem:[%s367 + $0x850] sm:$0xff]
        %v1596 = vld [vmem:[%s367 + $0x858] sm:$0xff]
        %v1597 = vld [vmem:[%s367 + $0x860] sm:$0xff]
        %v1598 = vld [vmem:[%s367 + $0x868] sm:$0xff]
        %v1599 = vld [vmem:[%s367 + $0x870] sm:$0xff]
        %v1600 = vld [vmem:[%s367 + $0x878] sm:$0xff]
        %v1601 = vld [vmem:[%s367 + $0x880] sm:$0xff]
        %v1602 = vld [vmem:[%s367 + $0x888] sm:$0xff]
        %v1603 = vld [vmem:[%s367 + $0x890] sm:$0xff]
        %v1604 = vld [vmem:[%s367 + $0x898] sm:$0xff]
        %v1605 = vld [vmem:[%s367 + $0x8a0] sm:$0xff]
        %v1606 = vld [vmem:[%s367 + $0x8a8] sm:$0xff]
        %v1607 = vld [vmem:[%s367 + $0x8b0] sm:$0xff]
        %v1608 = vld [vmem:[%s367 + $0x8b8] sm:$0xff]
        %v1609 = vld [vmem:[%s367 + $0x8c0] sm:$0xff]
        %v1610 = vld [vmem:[%s367 + $0x8c8] sm:$0xff]
        %v1611 = vld [vmem:[%s367 + $0x8d0] sm:$0xff]
        %v1612 = vld [vmem:[%s367 + $0x8d8] sm:$0xff]
        %v1613 = vld [vmem:[%s367 + $0x8e0] sm:$0xff]
        %v1614 = vld [vmem:[%s367 + $0x8e8] sm:$0xff]
        %v1615 = vld [vmem:[%s367 + $0x8f0] sm:$0xff]
        %v1616 = vld [vmem:[%s367 + $0x8f8] sm:$0xff]
        %v1617 = vld [vmem:[%s367 + $0x900] sm:$0xff]
        %v1618 = vld [vmem:[%s367 + $0x908] sm:$0xff]
        %v1619 = vld [vmem:[%s367 + $0x910] sm:$0xff]
        %v1620 = vld [vmem:[%s367 + $0x918] sm:$0xff]
        %v1621 = vld [vmem:[%s367 + $0x920] sm:$0xff]
        %v1622 = vld [vmem:[%s367 + $0x928] sm:$0xff]
        %v1623 = vld [vmem:[%s367 + $0x930] sm:$0xff]
        %v1624 = vld [vmem:[%s367 + $0x938] sm:$0xff]
        %v1625 = vld [vmem:[%s367 + $0x940] sm:$0xff]
        %v1626 = vld [vmem:[%s367 + $0x948] sm:$0xff]
        %v1627 = vld [vmem:[%s367 + $0x950] sm:$0xff]
        %v1628 = vld [vmem:[%s367 + $0x958] sm:$0xff]
        %v1629 = vld [vmem:[%s367 + $0x960] sm:$0xff]
        %v1630 = vld [vmem:[%s367 + $0x968] sm:$0xff]
        %v1631 = vld [vmem:[%s367 + $0x970] sm:$0xff]
        %v1632 = vld [vmem:[%s367 + $0x978] sm:$0xff]
        %v1633 = vld [vmem:[%s367 + $0x980] sm:$0xff]
        %v1634 = vld [vmem:[%s367 + $0x988] sm:$0xff]
        %v1635 = vld [vmem:[%s367 + $0x990] sm:$0xff]
        %v1636 = vld [vmem:[%s367 + $0x998] sm:$0xff]
        %v1637 = vld [vmem:[%s367 + $0x9a0] sm:$0xff]
        %v1638 = vld [vmem:[%s367 + $0x9a8] sm:$0xff]
        %v1639 = vld [vmem:[%s367 + $0x9b0] sm:$0xff]
        %v1640 = vld [vmem:[%s367 + $0x9b8] sm:$0xff]
        %v1641 = vld [vmem:[%s367 + $0x9c0] sm:$0xff]
        %v1642 = vld [vmem:[%s367 + $0x9c8] sm:$0xff]
        %v1643 = vld [vmem:[%s367 + $0x9d0] sm:$0xff]
        %v1644 = vld [vmem:[%s367 + $0x9d8] sm:$0xff]
        %v1645 = vld [vmem:[%s367 + $0x9e0] sm:$0xff]
        %v1646 = vld [vmem:[%s367 + $0x9e8] sm:$0xff]
        %v1647 = vld [vmem:[%s367 + $0x9f0] sm:$0xff]
        %v1648 = vld [vmem:[%s367 + $0x9f8] sm:$0xff]
        %v1649 = vld [vmem:[%s367 + $0xa00] sm:$0xff]
        %v1650 = vld [vmem:[%s367 + $0xa08] sm:$0xff]
        %v1651 = vld [vmem:[%s367 + $0xa10] sm:$0xff]
        %v1652 = vld [vmem:[%s367 + $0xa18] sm:$0xff]
        %v1653 = vld [vmem:[%s367 + $0xa20] sm:$0xff]
        %v1654 = vld [vmem:[%s367 + $0xa28] sm:$0xff]
        %v1655 = vld [vmem:[%s367 + $0xa30] sm:$0xff]
        %v1656 = vld [vmem:[%s367 + $0xa38] sm:$0xff]
        %v1657 = vld [vmem:[%s367 + $0xa40] sm:$0xff]
        %v1658 = vld [vmem:[%s367 + $0xa48] sm:$0xff]
        %v1659 = vld [vmem:[%s367 + $0xa50] sm:$0xff]
        %v1660 = vld [vmem:[%s367 + $0xa58] sm:$0xff]
        %v1661 = vld [vmem:[%s367 + $0xa60] sm:$0xff]
        %v1662 = vld [vmem:[%s367 + $0xa68] sm:$0xff]
        %v1663 = vld [vmem:[%s367 + $0xa70] sm:$0xff]
        %v1664 = vld [vmem:[%s367 + $0xa78] sm:$0xff]
        %v1665 = vld [vmem:[%s367 + $0xa80] sm:$0xff]
        %v1666 = vld [vmem:[%s367 + $0xa88] sm:$0xff]
        %v1667 = vld [vmem:[%s367 + $0xa90] sm:$0xff]
        %v1668 = vld [vmem:[%s367 + $0xa98] sm:$0xff]
        %v1669 = vld [vmem:[%s367 + $0xaa0] sm:$0xff]
        %v1670 = vld [vmem:[%s367 + $0xaa8] sm:$0xff]
        %v1671 = vld [vmem:[%s367 + $0xab0] sm:$0xff]
        %v1672 = vld [vmem:[%s367 + $0xab8] sm:$0xff]
        %v1673 = vld [vmem:[%s367 + $0xac0] sm:$0xff]
        %v1674 = vld [vmem:[%s367 + $0xac8] sm:$0xff]
        %v1675 = vld [vmem:[%s367 + $0xad0] sm:$0xff]
        %v1676 = vld [vmem:[%s367 + $0xad8] sm:$0xff]
        %v1677 = vld [vmem:[%s367 + $0xae0] sm:$0xff]
        %v1678 = vld [vmem:[%s367 + $0xae8] sm:$0xff]
        %v1679 = vld [vmem:[%s367 + $0xaf0] sm:$0xff]
        %v1680 = vld [vmem:[%s367 + $0xaf8] sm:$0xff]
        %v1681 = vld [vmem:[%s367 + $0xb00] sm:$0xff]
        %v1682 = vld [vmem:[%s367 + $0xb08] sm:$0xff]
        %v1683 = vld [vmem:[%s367 + $0xb10] sm:$0xff]
        %v1684 = vld [vmem:[%s367 + $0xb18] sm:$0xff]
        %v1685 = vld [vmem:[%s367 + $0xb20] sm:$0xff]
        %v1686 = vld [vmem:[%s367 + $0xb28] sm:$0xff]
        %v1687 = vld [vmem:[%s367 + $0xb30] sm:$0xff]
        %v1688 = vld [vmem:[%s367 + $0xb38] sm:$0xff]
        %v1689 = vld [vmem:[%s367 + $0xb40] sm:$0xff]
        %v1690 = vld [vmem:[%s367 + $0xb48] sm:$0xff]
        %v1691 = vld [vmem:[%s367 + $0xb50] sm:$0xff]
        %v1692 = vld [vmem:[%s367 + $0xb58] sm:$0xff]
        %v1693 = vld [vmem:[%s367 + $0xb60] sm:$0xff]
        %v1694 = vld [vmem:[%s367 + $0xb68] sm:$0xff]
        %v1695 = vld [vmem:[%s367 + $0xb70] sm:$0xff]
        %v1696 = vld [vmem:[%s367 + $0xb78] sm:$0xff]
        %v1697 = vld [vmem:[%s367 + $0xb80] sm:$0xff]
        %v1698 = vld [vmem:[%s367 + $0xb88] sm:$0xff]
        %v1699 = vld [vmem:[%s367 + $0xb90] sm:$0xff]
        %v1700 = vld [vmem:[%s367 + $0xb98] sm:$0xff]
        %v1701 = vld [vmem:[%s367 + $0xba0] sm:$0xff]
        %v1702 = vld [vmem:[%s367 + $0xba8] sm:$0xff]
        %v1703 = vld [vmem:[%s367 + $0xbb0] sm:$0xff]
        %v1704 = vld [vmem:[%s367 + $0xbb8] sm:$0xff]
        %v1705 = vld [vmem:[%s367 + $0xbc0] sm:$0xff]
        %v1706 = vld [vmem:[%s367 + $0xbc8] sm:$0xff]
        %v1707 = vld [vmem:[%s367 + $0xbd0] sm:$0xff]
        %v1708 = vld [vmem:[%s367 + $0xbd8] sm:$0xff]
        %v1709 = vld [vmem:[%s367 + $0xbe0] sm:$0xff]
        %v1710 = vld [vmem:[%s367 + $0xbe8] sm:$0xff]
        %v1711 = vld [vmem:[%s367 + $0xbf0] sm:$0xff]
        %v1712 = vld [vmem:[%s367 + $0xbf8] sm:$0xff]
        %v1713 = vld [vmem:[%s367 + $0xc00] sm:$0xff]
        %v1714 = vld [vmem:[%s367 + $0xc08] sm:$0xff]
        %v1715 = vld [vmem:[%s367 + $0xc10] sm:$0xff]
        %v1716 = vld [vmem:[%s367 + $0xc18] sm:$0xff]
        %v1717 = vld [vmem:[%s367 + $0xc20] sm:$0xff]
        %v1718 = vld [vmem:[%s367 + $0xc28] sm:$0xff]
        %v1719 = vld [vmem:[%s367 + $0xc30] sm:$0xff]
        %v1720 = vld [vmem:[%s367 + $0xc38] sm:$0xff]
        %v1721 = vld [vmem:[%s367 + $0xc40] sm:$0xff]
        %v1722 = vld [vmem:[%s367 + $0xc48] sm:$0xff]
        %v1723 = vld [vmem:[%s367 + $0xc50] sm:$0xff]
        %v1724 = vld [vmem:[%s367 + $0xc58] sm:$0xff]
        %v1725 = vld [vmem:[%s367 + $0xc60] sm:$0xff]
        %v1726 = vld [vmem:[%s367 + $0xc68] sm:$0xff]
        %v1727 = vld [vmem:[%s367 + $0xc70] sm:$0xff]
        %v1728 = vld [vmem:[%s367 + $0xc78] sm:$0xff]
        %v1729 = vld [vmem:[%s367 + $0xc80] sm:$0xff]
        %v1730 = vld [vmem:[%s367 + $0xc88] sm:$0xff]
        %v1731 = vld [vmem:[%s367 + $0xc90] sm:$0xff]
        %v1732 = vld [vmem:[%s367 + $0xc98] sm:$0xff]
        %v1733 = vld [vmem:[%s367 + $0xca0] sm:$0xff]
        %v1734 = vld [vmem:[%s367 + $0xca8] sm:$0xff]
        %v1735 = vld [vmem:[%s367 + $0xcb0] sm:$0xff]
        %v1736 = vld [vmem:[%s367 + $0xcb8] sm:$0xff]
        %v1737 = vld [vmem:[%s367 + $0xcc0] sm:$0xff]
        %v1738 = vld [vmem:[%s367 + $0xcc8] sm:$0xff]
        %v1739 = vld [vmem:[%s367 + $0xcd0] sm:$0xff]
        %v1740 = vld [vmem:[%s367 + $0xcd8] sm:$0xff]
        %v1741 = vld [vmem:[%s367 + $0xce0] sm:$0xff]
        %v1742 = vld [vmem:[%s367 + $0xce8] sm:$0xff]
        %v1743 = vld [vmem:[%s367 + $0xcf0] sm:$0xff]
        %v1744 = vld [vmem:[%s367 + $0xcf8] sm:$0xff]
        %v1745 = vld [vmem:[%s367 + $0xd00] sm:$0xff]
        %v1746 = vld [vmem:[%s367 + $0xd08] sm:$0xff]
        %v1747 = vld [vmem:[%s367 + $0xd10] sm:$0xff]
        %v1748 = vld [vmem:[%s367 + $0xd18] sm:$0xff]
        %v1749 = vld [vmem:[%s367 + $0xd20] sm:$0xff]
        %v1750 = vld [vmem:[%s367 + $0xd28] sm:$0xff]
        %v1751 = vld [vmem:[%s367 + $0xd30] sm:$0xff]
        %v1752 = vld [vmem:[%s367 + $0xd38] sm:$0xff]
        %v1753 = vld [vmem:[%s367 + $0xd40] sm:$0xff]
        %v1754 = vld [vmem:[%s367 + $0xd48] sm:$0xff]
        %v1755 = vld [vmem:[%s367 + $0xd50] sm:$0xff]
        %v1756 = vld [vmem:[%s367 + $0xd58] sm:$0xff]
        %v1757 = vld [vmem:[%s367 + $0xd60] sm:$0xff]
        %v1758 = vld [vmem:[%s367 + $0xd68] sm:$0xff]
        %v1759 = vld [vmem:[%s367 + $0xd70] sm:$0xff]
        %v1760 = vld [vmem:[%s367 + $0xd78] sm:$0xff]
        %v1761 = vld [vmem:[%s367 + $0xd80] sm:$0xff]
        %v1762 = vld [vmem:[%s367 + $0xd88] sm:$0xff]
        %v1763 = vld [vmem:[%s367 + $0xd90] sm:$0xff]
        %v1764 = vld [vmem:[%s367 + $0xd98] sm:$0xff]
        %v1765 = vld [vmem:[%s367 + $0xda0] sm:$0xff]
        %v1766 = vld [vmem:[%s367 + $0xda8] sm:$0xff]
        %v1767 = vld [vmem:[%s367 + $0xdb0] sm:$0xff]
        %v1768 = vld [vmem:[%s367 + $0xdb8] sm:$0xff]
        %v1769 = vld [vmem:[%s367 + $0xdc0] sm:$0xff]
        %v1770 = vld [vmem:[%s367 + $0xdc8] sm:$0xff]
        %v1771 = vld [vmem:[%s367 + $0xdd0] sm:$0xff]
        %v1772 = vld [vmem:[%s367 + $0xdd8] sm:$0xff]
        %v1773 = vld [vmem:[%s367 + $0xde0] sm:$0xff]
        %v1774 = vld [vmem:[%s367 + $0xde8] sm:$0xff]
        %v1775 = vld [vmem:[%s367 + $0xdf0] sm:$0xff]
        %v1776 = vld [vmem:[%s367 + $0xdf8] sm:$0xff]
        %v1777 = vld [vmem:[%s367 + $0xe00] sm:$0xff]
        %v1778 = vld [vmem:[%s367 + $0xe08] sm:$0xff]
        %v1779 = vld [vmem:[%s367 + $0xe10] sm:$0xff]
        %v1780 = vld [vmem:[%s367 + $0xe18] sm:$0xff]
        %v1781 = vld [vmem:[%s367 + $0xe20] sm:$0xff]
        %v1782 = vld [vmem:[%s367 + $0xe28] sm:$0xff]
        %v1783 = vld [vmem:[%s367 + $0xe30] sm:$0xff]
        %v1784 = vld [vmem:[%s367 + $0xe38] sm:$0xff]
        %v1785 = vld [vmem:[%s367 + $0xe40] sm:$0xff]
        %v1786 = vld [vmem:[%s367 + $0xe48] sm:$0xff]
        %v1787 = vld [vmem:[%s367 + $0xe50] sm:$0xff]
        %v1788 = vld [vmem:[%s367 + $0xe58] sm:$0xff]
        %v1789 = vld [vmem:[%s367 + $0xe60] sm:$0xff]
        %v1790 = vld [vmem:[%s367 + $0xe68] sm:$0xff]
        %v1791 = vld [vmem:[%s367 + $0xe70] sm:$0xff]
        %v1792 = vld [vmem:[%s367 + $0xe78] sm:$0xff]
        %v1793 = vld [vmem:[%s367 + $0xe80] sm:$0xff]
        %v1794 = vld [vmem:[%s367 + $0xe88] sm:$0xff]
        %v1795 = vld [vmem:[%s367 + $0xe90] sm:$0xff]
        %v1796 = vld [vmem:[%s367 + $0xe98] sm:$0xff]
        %v1797 = vld [vmem:[%s367 + $0xea0] sm:$0xff]
        %v1798 = vld [vmem:[%s367 + $0xea8] sm:$0xff]
        %v1799 = vld [vmem:[%s367 + $0xeb0] sm:$0xff]
        %v1800 = vld [vmem:[%s367 + $0xeb8] sm:$0xff]
        %v1801 = vld [vmem:[%s367 + $0xec0] sm:$0xff]
        %v1802 = vld [vmem:[%s367 + $0xec8] sm:$0xff]
        %v1803 = vld [vmem:[%s367 + $0xed0] sm:$0xff]
        %v1804 = vld [vmem:[%s367 + $0xed8] sm:$0xff]
        %v1805 = vld [vmem:[%s367 + $0xee0] sm:$0xff]
        %v1806 = vld [vmem:[%s367 + $0xee8] sm:$0xff]
        %v1807 = vld [vmem:[%s367 + $0xef0] sm:$0xff]
        %v1808 = vld [vmem:[%s367 + $0xef8] sm:$0xff]
        %v1809 = vld [vmem:[%s367 + $0xf00] sm:$0xff]
        %v1810 = vld [vmem:[%s367 + $0xf08] sm:$0xff]
        %v1811 = vld [vmem:[%s367 + $0xf10] sm:$0xff]
        %v1812 = vld [vmem:[%s367 + $0xf18] sm:$0xff]
        %v1813 = vld [vmem:[%s367 + $0xf20] sm:$0xff]
        %v1814 = vld [vmem:[%s367 + $0xf28] sm:$0xff]
        %v1815 = vld [vmem:[%s367 + $0xf30] sm:$0xff]
        %v1816 = vld [vmem:[%s367 + $0xf38] sm:$0xff]
        %v1817 = vld [vmem:[%s367 + $0xf40] sm:$0xff]
        %v1818 = vld [vmem:[%s367 + $0xf48] sm:$0xff]
        %v1819 = vld [vmem:[%s367 + $0xf50] sm:$0xff]
        %v1820 = vld [vmem:[%s367 + $0xf58] sm:$0xff]
        %v1821 = vld [vmem:[%s367 + $0xf60] sm:$0xff]
        %v1822 = vld [vmem:[%s367 + $0xf68] sm:$0xff]
        %v1823 = vld [vmem:[%s367 + $0xf70] sm:$0xff]
        %v1824 = vld [vmem:[%s367 + $0xf78] sm:$0xff]
        %v1825 = vld [vmem:[%s367 + $0xf80] sm:$0xff]
        %v1826 = vld [vmem:[%s367 + $0xf88] sm:$0xff]
        %v1827 = vld [vmem:[%s367 + $0xf90] sm:$0xff]
        %v1828 = vld [vmem:[%s367 + $0xf98] sm:$0xff]
        %v1829 = vld [vmem:[%s367 + $0xfa0] sm:$0xff]
        %v1830 = vld [vmem:[%s367 + $0xfa8] sm:$0xff]
        %v1831 = vld [vmem:[%s367 + $0xfb0] sm:$0xff]
        %v1832 = vld [vmem:[%s367 + $0xfb8] sm:$0xff]
        %v1833 = vld [vmem:[%s367 + $0xfc0] sm:$0xff]
        %v1834 = vld [vmem:[%s367 + $0xfc8] sm:$0xff]
        %v1835 = vld [vmem:[%s367 + $0xfd0] sm:$0xff]
        %v1836 = vld [vmem:[%s367 + $0xfd8] sm:$0xff]
        %v1837 = vld [vmem:[%s367 + $0xfe0] sm:$0xff]
        %v1838 = vld [vmem:[%s367 + $0xfe8] sm:$0xff]
        %v1839 = vld [vmem:[%s367 + $0xff0] sm:$0xff]
        %v1840 = vld [vmem:[%s367 + $0xff8] sm:$0xff]
        %v1841 = vld [vmem:[%s376] sm:$0xf]
        %v1843 = vlaneseq
        %v1844 = vshrl.u32 %v1843, 7
        %v1845 = vsub.s32 0, %v1844
        %v1846 = vrot.slane %v1841, %v1845
        %v1847 = vlaneseq
        %v1848 = vshrl.u32 %v1847, 7
        %v1849 = vsub.s32 1, %v1848
        %v1850 = vrot.slane %v1841, %v1849
        %v1851 = vlaneseq
        %v1852 = vshrl.u32 %v1851, 7
        %v1853 = vsub.s32 2, %v1852
        %v1854 = vrot.slane %v1841, %v1853
        %v1855 = vlaneseq
        %v1856 = vshrl.u32 %v1855, 7
        %v1857 = vsub.s32 3, %v1856
        %v1858 = vrot.slane %v1841, %v1857
        %v2375 = vunpack.c.l.b16 %v1329
        %v2376 = vunpack.c.h.b16 %v1329
        %v2377 = vunpack.c.l.b16 %v1330
        %v2378 = vunpack.c.h.b16 %v1330
        %v2379 = vunpack.c.l.b16 %v1331
        %v2380 = vunpack.c.h.b16 %v1331
        %v2381 = vunpack.c.l.b16 %v1332
        %v2382 = vunpack.c.h.b16 %v1332
        %v2383 = vunpack.c.l.b16 %v1333
        %v2384 = vunpack.c.h.b16 %v1333
        %v2385 = vunpack.c.l.b16 %v1334
        %v2386 = vunpack.c.h.b16 %v1334
        %v2387 = vunpack.c.l.b16 %v1335
        %v2388 = vunpack.c.h.b16 %v1335
        %v2389 = vunpack.c.l.b16 %v1336
        %v2390 = vunpack.c.h.b16 %v1336
        %v2391 = vunpack.c.l.b16 %v1337
        %v2392 = vunpack.c.h.b16 %v1337
        %v2393 = vunpack.c.l.b16 %v1338
        %v2394 = vunpack.c.h.b16 %v1338
        %v2395 = vunpack.c.l.b16 %v1339
        %v2396 = vunpack.c.h.b16 %v1339
        %v2397 = vunpack.c.l.b16 %v1340
        %v2398 = vunpack.c.h.b16 %v1340
        %v2399 = vunpack.c.l.b16 %v1341
        %v2400 = vunpack.c.h.b16 %v1341
        %v2401 = vunpack.c.l.b16 %v1342
        %v2402 = vunpack.c.h.b16 %v1342
        %v2403 = vunpack.c.l.b16 %v1343
        %v2404 = vunpack.c.h.b16 %v1343
        %v2405 = vunpack.c.l.b16 %v1344
        %v2406 = vunpack.c.h.b16 %v1344
        %v2407 = vunpack.c.l.b16 %v1345
        %v2408 = vunpack.c.h.b16 %v1345
        %v2409 = vunpack.c.l.b16 %v1346
        %v2410 = vunpack.c.h.b16 %v1346
        %v2411 = vunpack.c.l.b16 %v1347
        %v2412 = vunpack.c.h.b16 %v1347
        %v2413 = vunpack.c.l.b16 %v1348
        %v2414 = vunpack.c.h.b16 %v1348
        %v2415 = vunpack.c.l.b16 %v1349
        %v2416 = vunpack.c.h.b16 %v1349
        %v2417 = vunpack.c.l.b16 %v1350
        %v2418 = vunpack.c.h.b16 %v1350
        %v2419 = vunpack.c.l.b16 %v1351
        %v2420 = vunpack.c.h.b16 %v1351
        %v2421 = vunpack.c.l.b16 %v1352
        %v2422 = vunpack.c.h.b16 %v1352
        %v2423 = vunpack.c.l.b16 %v1353
        %v2424 = vunpack.c.h.b16 %v1353
        %v2425 = vunpack.c.l.b16 %v1354
        %v2426 = vunpack.c.h.b16 %v1354
        %v2427 = vunpack.c.l.b16 %v1355
        %v2428 = vunpack.c.h.b16 %v1355
        %v2429 = vunpack.c.l.b16 %v1356
        %v2430 = vunpack.c.h.b16 %v1356
        %v2431 = vunpack.c.l.b16 %v1357
        %v2432 = vunpack.c.h.b16 %v1357
        %v2433 = vunpack.c.l.b16 %v1358
        %v2434 = vunpack.c.h.b16 %v1358
        %v2435 = vunpack.c.l.b16 %v1359
        %v2436 = vunpack.c.h.b16 %v1359
        %v2437 = vunpack.c.l.b16 %v1360
        %v2438 = vunpack.c.h.b16 %v1360
        %v2439 = vunpack.c.l.b16 %v1361
        %v2440 = vunpack.c.h.b16 %v1361
        %v2441 = vunpack.c.l.b16 %v1362
        %v2442 = vunpack.c.h.b16 %v1362
        %v2443 = vunpack.c.l.b16 %v1363
        %v2444 = vunpack.c.h.b16 %v1363
        %v2445 = vunpack.c.l.b16 %v1364
        %v2446 = vunpack.c.h.b16 %v1364
        %v2447 = vunpack.c.l.b16 %v1365
        %v2448 = vunpack.c.h.b16 %v1365
        %v2449 = vunpack.c.l.b16 %v1366
        %v2450 = vunpack.c.h.b16 %v1366
        %v2451 = vunpack.c.l.b16 %v1367
        %v2452 = vunpack.c.h.b16 %v1367
        %v2453 = vunpack.c.l.b16 %v1368
        %v2454 = vunpack.c.h.b16 %v1368
        %v2455 = vunpack.c.l.b16 %v1369
        %v2456 = vunpack.c.h.b16 %v1369
        %v2457 = vunpack.c.l.b16 %v1370
        %v2458 = vunpack.c.h.b16 %v1370
        %v2459 = vunpack.c.l.b16 %v1371
        %v2460 = vunpack.c.h.b16 %v1371
        %v2461 = vunpack.c.l.b16 %v1372
        %v2462 = vunpack.c.h.b16 %v1372
        %v2463 = vunpack.c.l.b16 %v1373
        %v2464 = vunpack.c.h.b16 %v1373
        %v2465 = vunpack.c.l.b16 %v1374
        %v2466 = vunpack.c.h.b16 %v1374
        %v2467 = vunpack.c.l.b16 %v1375
        %v2468 = vunpack.c.h.b16 %v1375
        %v2469 = vunpack.c.l.b16 %v1376
        %v2470 = vunpack.c.h.b16 %v1376
        %v2471 = vunpack.c.l.b16 %v1377
        %v2472 = vunpack.c.h.b16 %v1377
        %v2473 = vunpack.c.l.b16 %v1378
        %v2474 = vunpack.c.h.b16 %v1378
        %v2475 = vunpack.c.l.b16 %v1379
        %v2476 = vunpack.c.h.b16 %v1379
        %v2477 = vunpack.c.l.b16 %v1380
        %v2478 = vunpack.c.h.b16 %v1380
        %v2479 = vunpack.c.l.b16 %v1381
        %v2480 = vunpack.c.h.b16 %v1381
        %v2481 = vunpack.c.l.b16 %v1382
        %v2482 = vunpack.c.h.b16 %v1382
        %v2483 = vunpack.c.l.b16 %v1383
        %v2484 = vunpack.c.h.b16 %v1383
        %v2485 = vunpack.c.l.b16 %v1384
        %v2486 = vunpack.c.h.b16 %v1384
        %v2487 = vunpack.c.l.b16 %v1385
        %v2488 = vunpack.c.h.b16 %v1385
        %v2489 = vunpack.c.l.b16 %v1386
        %v2490 = vunpack.c.h.b16 %v1386
        %v2491 = vunpack.c.l.b16 %v1387
        %v2492 = vunpack.c.h.b16 %v1387
        %v2493 = vunpack.c.l.b16 %v1388
        %v2494 = vunpack.c.h.b16 %v1388
        %v2495 = vunpack.c.l.b16 %v1389
        %v2496 = vunpack.c.h.b16 %v1389
        %v2497 = vunpack.c.l.b16 %v1390
        %v2498 = vunpack.c.h.b16 %v1390
        %v2499 = vunpack.c.l.b16 %v1391
        %v2500 = vunpack.c.h.b16 %v1391
        %v2501 = vunpack.c.l.b16 %v1392
        %v2502 = vunpack.c.h.b16 %v1392
        %v2503 = vunpack.c.l.b16 %v1393
        %v2504 = vunpack.c.h.b16 %v1393
        %v2505 = vunpack.c.l.b16 %v1394
        %v2506 = vunpack.c.h.b16 %v1394
        %v2507 = vunpack.c.l.b16 %v1395
        %v2508 = vunpack.c.h.b16 %v1395
        %v2509 = vunpack.c.l.b16 %v1396
        %v2510 = vunpack.c.h.b16 %v1396
        %v2511 = vunpack.c.l.b16 %v1397
        %v2512 = vunpack.c.h.b16 %v1397
        %v2513 = vunpack.c.l.b16 %v1398
        %v2514 = vunpack.c.h.b16 %v1398
        %v2515 = vunpack.c.l.b16 %v1399
        %v2516 = vunpack.c.h.b16 %v1399
        %v2517 = vunpack.c.l.b16 %v1400
        %v2518 = vunpack.c.h.b16 %v1400
        %v2519 = vunpack.c.l.b16 %v1401
        %v2520 = vunpack.c.h.b16 %v1401
        %v2521 = vunpack.c.l.b16 %v1402
        %v2522 = vunpack.c.h.b16 %v1402
        %v2523 = vunpack.c.l.b16 %v1403
        %v2524 = vunpack.c.h.b16 %v1403
        %v2525 = vunpack.c.l.b16 %v1404
        %v2526 = vunpack.c.h.b16 %v1404
        %v2527 = vunpack.c.l.b16 %v1405
        %v2528 = vunpack.c.h.b16 %v1405
        %v2529 = vunpack.c.l.b16 %v1406
        %v2530 = vunpack.c.h.b16 %v1406
        %v2531 = vunpack.c.l.b16 %v1407
        %v2532 = vunpack.c.h.b16 %v1407
        %v2533 = vunpack.c.l.b16 %v1408
        %v2534 = vunpack.c.h.b16 %v1408
        %v2535 = vunpack.c.l.b16 %v1409
        %v2536 = vunpack.c.h.b16 %v1409
        %v2537 = vunpack.c.l.b16 %v1410
        %v2538 = vunpack.c.h.b16 %v1410
        %v2539 = vunpack.c.l.b16 %v1411
        %v2540 = vunpack.c.h.b16 %v1411
        %v2541 = vunpack.c.l.b16 %v1412
        %v2542 = vunpack.c.h.b16 %v1412
        %v2543 = vunpack.c.l.b16 %v1413
        %v2544 = vunpack.c.h.b16 %v1413
        %v2545 = vunpack.c.l.b16 %v1414
        %v2546 = vunpack.c.h.b16 %v1414
        %v2547 = vunpack.c.l.b16 %v1415
        %v2548 = vunpack.c.h.b16 %v1415
        %v2549 = vunpack.c.l.b16 %v1416
        %v2550 = vunpack.c.h.b16 %v1416
        %v2551 = vunpack.c.l.b16 %v1417
        %v2552 = vunpack.c.h.b16 %v1417
        %v2553 = vunpack.c.l.b16 %v1418
        %v2554 = vunpack.c.h.b16 %v1418
        %v2555 = vunpack.c.l.b16 %v1419
        %v2556 = vunpack.c.h.b16 %v1419
        %v2557 = vunpack.c.l.b16 %v1420
        %v2558 = vunpack.c.h.b16 %v1420
        %v2559 = vunpack.c.l.b16 %v1421
        %v2560 = vunpack.c.h.b16 %v1421
        %v2561 = vunpack.c.l.b16 %v1422
        %v2562 = vunpack.c.h.b16 %v1422
        %v2563 = vunpack.c.l.b16 %v1423
        %v2564 = vunpack.c.h.b16 %v1423
        %v2565 = vunpack.c.l.b16 %v1424
        %v2566 = vunpack.c.h.b16 %v1424
        %v2567 = vunpack.c.l.b16 %v1425
        %v2568 = vunpack.c.h.b16 %v1425
        %v2569 = vunpack.c.l.b16 %v1426
        %v2570 = vunpack.c.h.b16 %v1426
        %v2571 = vunpack.c.l.b16 %v1427
        %v2572 = vunpack.c.h.b16 %v1427
        %v2573 = vunpack.c.l.b16 %v1428
        %v2574 = vunpack.c.h.b16 %v1428
        %v2575 = vunpack.c.l.b16 %v1429
        %v2576 = vunpack.c.h.b16 %v1429
        %v2577 = vunpack.c.l.b16 %v1430
        %v2578 = vunpack.c.h.b16 %v1430
        %v2579 = vunpack.c.l.b16 %v1431
        %v2580 = vunpack.c.h.b16 %v1431
        %v2581 = vunpack.c.l.b16 %v1432
        %v2582 = vunpack.c.h.b16 %v1432
        %v2583 = vunpack.c.l.b16 %v1433
        %v2584 = vunpack.c.h.b16 %v1433
        %v2585 = vunpack.c.l.b16 %v1434
        %v2586 = vunpack.c.h.b16 %v1434
        %v2587 = vunpack.c.l.b16 %v1435
        %v2588 = vunpack.c.h.b16 %v1435
        %v2589 = vunpack.c.l.b16 %v1436
        %v2590 = vunpack.c.h.b16 %v1436
        %v2591 = vunpack.c.l.b16 %v1437
        %v2592 = vunpack.c.h.b16 %v1437
        %v2593 = vunpack.c.l.b16 %v1438
        %v2594 = vunpack.c.h.b16 %v1438
        %v2595 = vunpack.c.l.b16 %v1439
        %v2596 = vunpack.c.h.b16 %v1439
        %v2597 = vunpack.c.l.b16 %v1440
        %v2598 = vunpack.c.h.b16 %v1440
        %v2599 = vunpack.c.l.b16 %v1441
        %v2600 = vunpack.c.h.b16 %v1441
        %v2601 = vunpack.c.l.b16 %v1442
        %v2602 = vunpack.c.h.b16 %v1442
        %v2603 = vunpack.c.l.b16 %v1443
        %v2604 = vunpack.c.h.b16 %v1443
        %v2605 = vunpack.c.l.b16 %v1444
        %v2606 = vunpack.c.h.b16 %v1444
        %v2607 = vunpack.c.l.b16 %v1445
        %v2608 = vunpack.c.h.b16 %v1445
        %v2609 = vunpack.c.l.b16 %v1446
        %v2610 = vunpack.c.h.b16 %v1446
        %v2611 = vunpack.c.l.b16 %v1447
        %v2612 = vunpack.c.h.b16 %v1447
        %v2613 = vunpack.c.l.b16 %v1448
        %v2614 = vunpack.c.h.b16 %v1448
        %v2615 = vunpack.c.l.b16 %v1449
        %v2616 = vunpack.c.h.b16 %v1449
        %v2617 = vunpack.c.l.b16 %v1450
        %v2618 = vunpack.c.h.b16 %v1450
        %v2619 = vunpack.c.l.b16 %v1451
        %v2620 = vunpack.c.h.b16 %v1451
        %v2621 = vunpack.c.l.b16 %v1452
        %v2622 = vunpack.c.h.b16 %v1452
        %v2623 = vunpack.c.l.b16 %v1453
        %v2624 = vunpack.c.h.b16 %v1453
        %v2625 = vunpack.c.l.b16 %v1454
        %v2626 = vunpack.c.h.b16 %v1454
        %v2627 = vunpack.c.l.b16 %v1455
        %v2628 = vunpack.c.h.b16 %v1455
        %v2629 = vunpack.c.l.b16 %v1456
        %v2630 = vunpack.c.h.b16 %v1456
        %v2631 = vunpack.c.l.b16 %v1457
        %v2632 = vunpack.c.h.b16 %v1457
        %v2633 = vunpack.c.l.b16 %v1458
        %v2634 = vunpack.c.h.b16 %v1458
        %v2635 = vunpack.c.l.b16 %v1459
        %v2636 = vunpack.c.h.b16 %v1459
        %v2637 = vunpack.c.l.b16 %v1460
        %v2638 = vunpack.c.h.b16 %v1460
        %v2639 = vunpack.c.l.b16 %v1461
        %v2640 = vunpack.c.h.b16 %v1461
        %v2641 = vunpack.c.l.b16 %v1462
        %v2642 = vunpack.c.h.b16 %v1462
        %v2643 = vunpack.c.l.b16 %v1463
        %v2644 = vunpack.c.h.b16 %v1463
        %v2645 = vunpack.c.l.b16 %v1464
        %v2646 = vunpack.c.h.b16 %v1464
        %v2647 = vunpack.c.l.b16 %v1465
        %v2648 = vunpack.c.h.b16 %v1465
        %v2649 = vunpack.c.l.b16 %v1466
        %v2650 = vunpack.c.h.b16 %v1466
        %v2651 = vunpack.c.l.b16 %v1467
        %v2652 = vunpack.c.h.b16 %v1467
        %v2653 = vunpack.c.l.b16 %v1468
        %v2654 = vunpack.c.h.b16 %v1468
        %v2655 = vunpack.c.l.b16 %v1469
        %v2656 = vunpack.c.h.b16 %v1469
        %v2657 = vunpack.c.l.b16 %v1470
        %v2658 = vunpack.c.h.b16 %v1470
        %v2659 = vunpack.c.l.b16 %v1471
        %v2660 = vunpack.c.h.b16 %v1471
        %v2661 = vunpack.c.l.b16 %v1472
        %v2662 = vunpack.c.h.b16 %v1472
        %v2663 = vunpack.c.l.b16 %v1473
        %v2664 = vunpack.c.h.b16 %v1473
        %v2665 = vunpack.c.l.b16 %v1474
        %v2666 = vunpack.c.h.b16 %v1474
        %v2667 = vunpack.c.l.b16 %v1475
        %v2668 = vunpack.c.h.b16 %v1475
        %v2669 = vunpack.c.l.b16 %v1476
        %v2670 = vunpack.c.h.b16 %v1476
        %v2671 = vunpack.c.l.b16 %v1477
        %v2672 = vunpack.c.h.b16 %v1477
        %v2673 = vunpack.c.l.b16 %v1478
        %v2674 = vunpack.c.h.b16 %v1478
        %v2675 = vunpack.c.l.b16 %v1479
        %v2676 = vunpack.c.h.b16 %v1479
        %v2677 = vunpack.c.l.b16 %v1480
        %v2678 = vunpack.c.h.b16 %v1480
        %v2679 = vunpack.c.l.b16 %v1481
        %v2680 = vunpack.c.h.b16 %v1481
        %v2681 = vunpack.c.l.b16 %v1482
        %v2682 = vunpack.c.h.b16 %v1482
        %v2683 = vunpack.c.l.b16 %v1483
        %v2684 = vunpack.c.h.b16 %v1483
        %v2685 = vunpack.c.l.b16 %v1484
        %v2686 = vunpack.c.h.b16 %v1484
        %v2687 = vunpack.c.l.b16 %v1485
        %v2688 = vunpack.c.h.b16 %v1485
        %v2689 = vunpack.c.l.b16 %v1486
        %v2690 = vunpack.c.h.b16 %v1486
        %v2691 = vunpack.c.l.b16 %v1487
        %v2692 = vunpack.c.h.b16 %v1487
        %v2693 = vunpack.c.l.b16 %v1488
        %v2694 = vunpack.c.h.b16 %v1488
        %v2695 = vunpack.c.l.b16 %v1489
        %v2696 = vunpack.c.h.b16 %v1489
        %v2697 = vunpack.c.l.b16 %v1490
        %v2698 = vunpack.c.h.b16 %v1490
        %v2699 = vunpack.c.l.b16 %v1491
        %v2700 = vunpack.c.h.b16 %v1491
        %v2701 = vunpack.c.l.b16 %v1492
        %v2702 = vunpack.c.h.b16 %v1492
        %v2703 = vunpack.c.l.b16 %v1493
        %v2704 = vunpack.c.h.b16 %v1493
        %v2705 = vunpack.c.l.b16 %v1494
        %v2706 = vunpack.c.h.b16 %v1494
        %v2707 = vunpack.c.l.b16 %v1495
        %v2708 = vunpack.c.h.b16 %v1495
        %v2709 = vunpack.c.l.b16 %v1496
        %v2710 = vunpack.c.h.b16 %v1496
        %v2711 = vunpack.c.l.b16 %v1497
        %v2712 = vunpack.c.h.b16 %v1497
        %v2713 = vunpack.c.l.b16 %v1498
        %v2714 = vunpack.c.h.b16 %v1498
        %v2715 = vunpack.c.l.b16 %v1499
        %v2716 = vunpack.c.h.b16 %v1499
        %v2717 = vunpack.c.l.b16 %v1500
        %v2718 = vunpack.c.h.b16 %v1500
        %v2719 = vunpack.c.l.b16 %v1501
        %v2720 = vunpack.c.h.b16 %v1501
        %v2721 = vunpack.c.l.b16 %v1502
        %v2722 = vunpack.c.h.b16 %v1502
        %v2723 = vunpack.c.l.b16 %v1503
        %v2724 = vunpack.c.h.b16 %v1503
        %v2725 = vunpack.c.l.b16 %v1504
        %v2726 = vunpack.c.h.b16 %v1504
        %v2727 = vunpack.c.l.b16 %v1505
        %v2728 = vunpack.c.h.b16 %v1505
        %v2729 = vunpack.c.l.b16 %v1506
        %v2730 = vunpack.c.h.b16 %v1506
        %v2731 = vunpack.c.l.b16 %v1507
        %v2732 = vunpack.c.h.b16 %v1507
        %v2733 = vunpack.c.l.b16 %v1508
        %v2734 = vunpack.c.h.b16 %v1508
        %v2735 = vunpack.c.l.b16 %v1509
        %v2736 = vunpack.c.h.b16 %v1509
        %v2737 = vunpack.c.l.b16 %v1510
        %v2738 = vunpack.c.h.b16 %v1510
        %v2739 = vunpack.c.l.b16 %v1511
        %v2740 = vunpack.c.h.b16 %v1511
        %v2741 = vunpack.c.l.b16 %v1512
        %v2742 = vunpack.c.h.b16 %v1512
        %v2743 = vunpack.c.l.b16 %v1513
        %v2744 = vunpack.c.h.b16 %v1513
        %v2745 = vunpack.c.l.b16 %v1514
        %v2746 = vunpack.c.h.b16 %v1514
        %v2747 = vunpack.c.l.b16 %v1515
        %v2748 = vunpack.c.h.b16 %v1515
        %v2749 = vunpack.c.l.b16 %v1516
        %v2750 = vunpack.c.h.b16 %v1516
        %v2751 = vunpack.c.l.b16 %v1517
        %v2752 = vunpack.c.h.b16 %v1517
        %v2753 = vunpack.c.l.b16 %v1518
        %v2754 = vunpack.c.h.b16 %v1518
        %v2755 = vunpack.c.l.b16 %v1519
        %v2756 = vunpack.c.h.b16 %v1519
        %v2757 = vunpack.c.l.b16 %v1520
        %v2758 = vunpack.c.h.b16 %v1520
        %v2759 = vunpack.c.l.b16 %v1521
        %v2760 = vunpack.c.h.b16 %v1521
        %v2761 = vunpack.c.l.b16 %v1522
        %v2762 = vunpack.c.h.b16 %v1522
        %v2763 = vunpack.c.l.b16 %v1523
        %v2764 = vunpack.c.h.b16 %v1523
        %v2765 = vunpack.c.l.b16 %v1524
        %v2766 = vunpack.c.h.b16 %v1524
        %v2767 = vunpack.c.l.b16 %v1525
        %v2768 = vunpack.c.h.b16 %v1525
        %v2769 = vunpack.c.l.b16 %v1526
        %v2770 = vunpack.c.h.b16 %v1526
        %v2771 = vunpack.c.l.b16 %v1527
        %v2772 = vunpack.c.h.b16 %v1527
        %v2773 = vunpack.c.l.b16 %v1528
        %v2774 = vunpack.c.h.b16 %v1528
        %v2775 = vunpack.c.l.b16 %v1529
        %v2776 = vunpack.c.h.b16 %v1529
        %v2777 = vunpack.c.l.b16 %v1530
        %v2778 = vunpack.c.h.b16 %v1530
        %v2779 = vunpack.c.l.b16 %v1531
        %v2780 = vunpack.c.h.b16 %v1531
        %v2781 = vunpack.c.l.b16 %v1532
        %v2782 = vunpack.c.h.b16 %v1532
        %v2783 = vunpack.c.l.b16 %v1533
        %v2784 = vunpack.c.h.b16 %v1533
        %v2785 = vunpack.c.l.b16 %v1534
        %v2786 = vunpack.c.h.b16 %v1534
        %v2787 = vunpack.c.l.b16 %v1535
        %v2788 = vunpack.c.h.b16 %v1535
        %v2789 = vunpack.c.l.b16 %v1536
        %v2790 = vunpack.c.h.b16 %v1536
        %v2791 = vunpack.c.l.b16 %v1537
        %v2792 = vunpack.c.h.b16 %v1537
        %v2793 = vunpack.c.l.b16 %v1538
        %v2794 = vunpack.c.h.b16 %v1538
        %v2795 = vunpack.c.l.b16 %v1539
        %v2796 = vunpack.c.h.b16 %v1539
        %v2797 = vunpack.c.l.b16 %v1540
        %v2798 = vunpack.c.h.b16 %v1540
        %v2799 = vunpack.c.l.b16 %v1541
        %v2800 = vunpack.c.h.b16 %v1541
        %v2801 = vunpack.c.l.b16 %v1542
        %v2802 = vunpack.c.h.b16 %v1542
        %v2803 = vunpack.c.l.b16 %v1543
        %v2804 = vunpack.c.h.b16 %v1543
        %v2805 = vunpack.c.l.b16 %v1544
        %v2806 = vunpack.c.h.b16 %v1544
        %v2807 = vunpack.c.l.b16 %v1545
        %v2808 = vunpack.c.h.b16 %v1545
        %v2809 = vunpack.c.l.b16 %v1546
        %v2810 = vunpack.c.h.b16 %v1546
        %v2811 = vunpack.c.l.b16 %v1547
        %v2812 = vunpack.c.h.b16 %v1547
        %v2813 = vunpack.c.l.b16 %v1548
        %v2814 = vunpack.c.h.b16 %v1548
        %v2815 = vunpack.c.l.b16 %v1549
        %v2816 = vunpack.c.h.b16 %v1549
        %v2817 = vunpack.c.l.b16 %v1550
        %v2818 = vunpack.c.h.b16 %v1550
        %v2819 = vunpack.c.l.b16 %v1551
        %v2820 = vunpack.c.h.b16 %v1551
        %v2821 = vunpack.c.l.b16 %v1552
        %v2822 = vunpack.c.h.b16 %v1552
        %v2823 = vunpack.c.l.b16 %v1553
        %v2824 = vunpack.c.h.b16 %v1553
        %v2825 = vunpack.c.l.b16 %v1554
        %v2826 = vunpack.c.h.b16 %v1554
        %v2827 = vunpack.c.l.b16 %v1555
        %v2828 = vunpack.c.h.b16 %v1555
        %v2829 = vunpack.c.l.b16 %v1556
        %v2830 = vunpack.c.h.b16 %v1556
        %v2831 = vunpack.c.l.b16 %v1557
        %v2832 = vunpack.c.h.b16 %v1557
        %v2833 = vunpack.c.l.b16 %v1558
        %v2834 = vunpack.c.h.b16 %v1558
        %v2835 = vunpack.c.l.b16 %v1559
        %v2836 = vunpack.c.h.b16 %v1559
        %v2837 = vunpack.c.l.b16 %v1560
        %v2838 = vunpack.c.h.b16 %v1560
        %v2839 = vunpack.c.l.b16 %v1561
        %v2840 = vunpack.c.h.b16 %v1561
        %v2841 = vunpack.c.l.b16 %v1562
        %v2842 = vunpack.c.h.b16 %v1562
        %v2843 = vunpack.c.l.b16 %v1563
        %v2844 = vunpack.c.h.b16 %v1563
        %v2845 = vunpack.c.l.b16 %v1564
        %v2846 = vunpack.c.h.b16 %v1564
        %v2847 = vunpack.c.l.b16 %v1565
        %v2848 = vunpack.c.h.b16 %v1565
        %v2849 = vunpack.c.l.b16 %v1566
        %v2850 = vunpack.c.h.b16 %v1566
        %v2851 = vunpack.c.l.b16 %v1567
        %v2852 = vunpack.c.h.b16 %v1567
        %v2853 = vunpack.c.l.b16 %v1568
        %v2854 = vunpack.c.h.b16 %v1568
        %v2855 = vunpack.c.l.b16 %v1569
        %v2856 = vunpack.c.h.b16 %v1569
        %v2857 = vunpack.c.l.b16 %v1570
        %v2858 = vunpack.c.h.b16 %v1570
        %v2859 = vunpack.c.l.b16 %v1571
        %v2860 = vunpack.c.h.b16 %v1571
        %v2861 = vunpack.c.l.b16 %v1572
        %v2862 = vunpack.c.h.b16 %v1572
        %v2863 = vunpack.c.l.b16 %v1573
        %v2864 = vunpack.c.h.b16 %v1573
        %v2865 = vunpack.c.l.b16 %v1574
        %v2866 = vunpack.c.h.b16 %v1574
        %v2867 = vunpack.c.l.b16 %v1575
        %v2868 = vunpack.c.h.b16 %v1575
        %v2869 = vunpack.c.l.b16 %v1576
        %v2870 = vunpack.c.h.b16 %v1576
        %v2871 = vunpack.c.l.b16 %v1577
        %v2872 = vunpack.c.h.b16 %v1577
        %v2873 = vunpack.c.l.b16 %v1578
        %v2874 = vunpack.c.h.b16 %v1578
        %v2875 = vunpack.c.l.b16 %v1579
        %v2876 = vunpack.c.h.b16 %v1579
        %v2877 = vunpack.c.l.b16 %v1580
        %v2878 = vunpack.c.h.b16 %v1580
        %v2879 = vunpack.c.l.b16 %v1581
        %v2880 = vunpack.c.h.b16 %v1581
        %v2881 = vunpack.c.l.b16 %v1582
        %v2882 = vunpack.c.h.b16 %v1582
        %v2883 = vunpack.c.l.b16 %v1583
        %v2884 = vunpack.c.h.b16 %v1583
        %v2885 = vunpack.c.l.b16 %v1584
        %v2886 = vunpack.c.h.b16 %v1584
        %v2887 = vunpack.c.l.b16 %v1585
        %v2888 = vunpack.c.h.b16 %v1585
        %v2889 = vunpack.c.l.b16 %v1586
        %v2890 = vunpack.c.h.b16 %v1586
        %v2891 = vunpack.c.l.b16 %v1587
        %v2892 = vunpack.c.h.b16 %v1587
        %v2893 = vunpack.c.l.b16 %v1588
        %v2894 = vunpack.c.h.b16 %v1588
        %v2895 = vunpack.c.l.b16 %v1589
        %v2896 = vunpack.c.h.b16 %v1589
        %v2897 = vunpack.c.l.b16 %v1590
        %v2898 = vunpack.c.h.b16 %v1590
        %v2899 = vunpack.c.l.b16 %v1591
        %v2900 = vunpack.c.h.b16 %v1591
        %v2901 = vunpack.c.l.b16 %v1592
        %v2902 = vunpack.c.h.b16 %v1592
        %v2903 = vunpack.c.l.b16 %v1593
        %v2904 = vunpack.c.h.b16 %v1593
        %v2905 = vunpack.c.l.b16 %v1594
        %v2906 = vunpack.c.h.b16 %v1594
        %v2907 = vunpack.c.l.b16 %v1595
        %v2908 = vunpack.c.h.b16 %v1595
        %v2909 = vunpack.c.l.b16 %v1596
        %v2910 = vunpack.c.h.b16 %v1596
        %v2911 = vunpack.c.l.b16 %v1597
        %v2912 = vunpack.c.h.b16 %v1597
        %v2913 = vunpack.c.l.b16 %v1598
        %v2914 = vunpack.c.h.b16 %v1598
        %v2915 = vunpack.c.l.b16 %v1599
        %v2916 = vunpack.c.h.b16 %v1599
        %v2917 = vunpack.c.l.b16 %v1600
        %v2918 = vunpack.c.h.b16 %v1600
        %v2919 = vunpack.c.l.b16 %v1601
        %v2920 = vunpack.c.h.b16 %v1601
        %v2921 = vunpack.c.l.b16 %v1602
        %v2922 = vunpack.c.h.b16 %v1602
        %v2923 = vunpack.c.l.b16 %v1603
        %v2924 = vunpack.c.h.b16 %v1603
        %v2925 = vunpack.c.l.b16 %v1604
        %v2926 = vunpack.c.h.b16 %v1604
        %v2927 = vunpack.c.l.b16 %v1605
        %v2928 = vunpack.c.h.b16 %v1605
        %v2929 = vunpack.c.l.b16 %v1606
        %v2930 = vunpack.c.h.b16 %v1606
        %v2931 = vunpack.c.l.b16 %v1607
        %v2932 = vunpack.c.h.b16 %v1607
        %v2933 = vunpack.c.l.b16 %v1608
        %v2934 = vunpack.c.h.b16 %v1608
        %v2935 = vunpack.c.l.b16 %v1609
        %v2936 = vunpack.c.h.b16 %v1609
        %v2937 = vunpack.c.l.b16 %v1610
        %v2938 = vunpack.c.h.b16 %v1610
        %v2939 = vunpack.c.l.b16 %v1611
        %v2940 = vunpack.c.h.b16 %v1611
        %v2941 = vunpack.c.l.b16 %v1612
        %v2942 = vunpack.c.h.b16 %v1612
        %v2943 = vunpack.c.l.b16 %v1613
        %v2944 = vunpack.c.h.b16 %v1613
        %v2945 = vunpack.c.l.b16 %v1614
        %v2946 = vunpack.c.h.b16 %v1614
        %v2947 = vunpack.c.l.b16 %v1615
        %v2948 = vunpack.c.h.b16 %v1615
        %v2949 = vunpack.c.l.b16 %v1616
        %v2950 = vunpack.c.h.b16 %v1616
        %v2951 = vunpack.c.l.b16 %v1617
        %v2952 = vunpack.c.h.b16 %v1617
        %v2953 = vunpack.c.l.b16 %v1618
        %v2954 = vunpack.c.h.b16 %v1618
        %v2955 = vunpack.c.l.b16 %v1619
        %v2956 = vunpack.c.h.b16 %v1619
        %v2957 = vunpack.c.l.b16 %v1620
        %v2958 = vunpack.c.h.b16 %v1620
        %v2959 = vunpack.c.l.b16 %v1621
        %v2960 = vunpack.c.h.b16 %v1621
        %v2961 = vunpack.c.l.b16 %v1622
        %v2962 = vunpack.c.h.b16 %v1622
        %v2963 = vunpack.c.l.b16 %v1623
        %v2964 = vunpack.c.h.b16 %v1623
        %v2965 = vunpack.c.l.b16 %v1624
        %v2966 = vunpack.c.h.b16 %v1624
        %v2967 = vunpack.c.l.b16 %v1625
        %v2968 = vunpack.c.h.b16 %v1625
        %v2969 = vunpack.c.l.b16 %v1626
        %v2970 = vunpack.c.h.b16 %v1626
        %v2971 = vunpack.c.l.b16 %v1627
        %v2972 = vunpack.c.h.b16 %v1627
        %v2973 = vunpack.c.l.b16 %v1628
        %v2974 = vunpack.c.h.b16 %v1628
        %v2975 = vunpack.c.l.b16 %v1629
        %v2976 = vunpack.c.h.b16 %v1629
        %v2977 = vunpack.c.l.b16 %v1630
        %v2978 = vunpack.c.h.b16 %v1630
        %v2979 = vunpack.c.l.b16 %v1631
        %v2980 = vunpack.c.h.b16 %v1631
        %v2981 = vunpack.c.l.b16 %v1632
        %v2982 = vunpack.c.h.b16 %v1632
        %v2983 = vunpack.c.l.b16 %v1633
        %v2984 = vunpack.c.h.b16 %v1633
        %v2985 = vunpack.c.l.b16 %v1634
        %v2986 = vunpack.c.h.b16 %v1634
        %v2987 = vunpack.c.l.b16 %v1635
        %v2988 = vunpack.c.h.b16 %v1635
        %v2989 = vunpack.c.l.b16 %v1636
        %v2990 = vunpack.c.h.b16 %v1636
        %v2991 = vunpack.c.l.b16 %v1637
        %v2992 = vunpack.c.h.b16 %v1637
        %v2993 = vunpack.c.l.b16 %v1638
        %v2994 = vunpack.c.h.b16 %v1638
        %v2995 = vunpack.c.l.b16 %v1639
        %v2996 = vunpack.c.h.b16 %v1639
        %v2997 = vunpack.c.l.b16 %v1640
        %v2998 = vunpack.c.h.b16 %v1640
        %v2999 = vunpack.c.l.b16 %v1641
        %v3000 = vunpack.c.h.b16 %v1641
        %v3001 = vunpack.c.l.b16 %v1642
        %v3002 = vunpack.c.h.b16 %v1642
        %v3003 = vunpack.c.l.b16 %v1643
        %v3004 = vunpack.c.h.b16 %v1643
        %v3005 = vunpack.c.l.b16 %v1644
        %v3006 = vunpack.c.h.b16 %v1644
        %v3007 = vunpack.c.l.b16 %v1645
        %v3008 = vunpack.c.h.b16 %v1645
        %v3009 = vunpack.c.l.b16 %v1646
        %v3010 = vunpack.c.h.b16 %v1646
        %v3011 = vunpack.c.l.b16 %v1647
        %v3012 = vunpack.c.h.b16 %v1647
        %v3013 = vunpack.c.l.b16 %v1648
        %v3014 = vunpack.c.h.b16 %v1648
        %v3015 = vunpack.c.l.b16 %v1649
        %v3016 = vunpack.c.h.b16 %v1649
        %v3017 = vunpack.c.l.b16 %v1650
        %v3018 = vunpack.c.h.b16 %v1650
        %v3019 = vunpack.c.l.b16 %v1651
        %v3020 = vunpack.c.h.b16 %v1651
        %v3021 = vunpack.c.l.b16 %v1652
        %v3022 = vunpack.c.h.b16 %v1652
        %v3023 = vunpack.c.l.b16 %v1653
        %v3024 = vunpack.c.h.b16 %v1653
        %v3025 = vunpack.c.l.b16 %v1654
        %v3026 = vunpack.c.h.b16 %v1654
        %v3027 = vunpack.c.l.b16 %v1655
        %v3028 = vunpack.c.h.b16 %v1655
        %v3029 = vunpack.c.l.b16 %v1656
        %v3030 = vunpack.c.h.b16 %v1656
        %v3031 = vunpack.c.l.b16 %v1657
        %v3032 = vunpack.c.h.b16 %v1657
        %v3033 = vunpack.c.l.b16 %v1658
        %v3034 = vunpack.c.h.b16 %v1658
        %v3035 = vunpack.c.l.b16 %v1659
        %v3036 = vunpack.c.h.b16 %v1659
        %v3037 = vunpack.c.l.b16 %v1660
        %v3038 = vunpack.c.h.b16 %v1660
        %v3039 = vunpack.c.l.b16 %v1661
        %v3040 = vunpack.c.h.b16 %v1661
        %v3041 = vunpack.c.l.b16 %v1662
        %v3042 = vunpack.c.h.b16 %v1662
        %v3043 = vunpack.c.l.b16 %v1663
        %v3044 = vunpack.c.h.b16 %v1663
        %v3045 = vunpack.c.l.b16 %v1664
        %v3046 = vunpack.c.h.b16 %v1664
        %v3047 = vunpack.c.l.b16 %v1665
        %v3048 = vunpack.c.h.b16 %v1665
        %v3049 = vunpack.c.l.b16 %v1666
        %v3050 = vunpack.c.h.b16 %v1666
        %v3051 = vunpack.c.l.b16 %v1667
        %v3052 = vunpack.c.h.b16 %v1667
        %v3053 = vunpack.c.l.b16 %v1668
        %v3054 = vunpack.c.h.b16 %v1668
        %v3055 = vunpack.c.l.b16 %v1669
        %v3056 = vunpack.c.h.b16 %v1669
        %v3057 = vunpack.c.l.b16 %v1670
        %v3058 = vunpack.c.h.b16 %v1670
        %v3059 = vunpack.c.l.b16 %v1671
        %v3060 = vunpack.c.h.b16 %v1671
        %v3061 = vunpack.c.l.b16 %v1672
        %v3062 = vunpack.c.h.b16 %v1672
        %v3063 = vunpack.c.l.b16 %v1673
        %v3064 = vunpack.c.h.b16 %v1673
        %v3065 = vunpack.c.l.b16 %v1674
        %v3066 = vunpack.c.h.b16 %v1674
        %v3067 = vunpack.c.l.b16 %v1675
        %v3068 = vunpack.c.h.b16 %v1675
        %v3069 = vunpack.c.l.b16 %v1676
        %v3070 = vunpack.c.h.b16 %v1676
        %v3071 = vunpack.c.l.b16 %v1677
        %v3072 = vunpack.c.h.b16 %v1677
        %v3073 = vunpack.c.l.b16 %v1678
        %v3074 = vunpack.c.h.b16 %v1678
        %v3075 = vunpack.c.l.b16 %v1679
        %v3076 = vunpack.c.h.b16 %v1679
        %v3077 = vunpack.c.l.b16 %v1680
        %v3078 = vunpack.c.h.b16 %v1680
        %v3079 = vunpack.c.l.b16 %v1681
        %v3080 = vunpack.c.h.b16 %v1681
        %v3081 = vunpack.c.l.b16 %v1682
        %v3082 = vunpack.c.h.b16 %v1682
        %v3083 = vunpack.c.l.b16 %v1683
        %v3084 = vunpack.c.h.b16 %v1683
        %v3085 = vunpack.c.l.b16 %v1684
        %v3086 = vunpack.c.h.b16 %v1684
        %v3087 = vunpack.c.l.b16 %v1685
        %v3088 = vunpack.c.h.b16 %v1685
        %v3089 = vunpack.c.l.b16 %v1686
        %v3090 = vunpack.c.h.b16 %v1686
        %v3091 = vunpack.c.l.b16 %v1687
        %v3092 = vunpack.c.h.b16 %v1687
        %v3093 = vunpack.c.l.b16 %v1688
        %v3094 = vunpack.c.h.b16 %v1688
        %v3095 = vunpack.c.l.b16 %v1689
        %v3096 = vunpack.c.h.b16 %v1689
        %v3097 = vunpack.c.l.b16 %v1690
        %v3098 = vunpack.c.h.b16 %v1690
        %v3099 = vunpack.c.l.b16 %v1691
        %v3100 = vunpack.c.h.b16 %v1691
        %v3101 = vunpack.c.l.b16 %v1692
        %v3102 = vunpack.c.h.b16 %v1692
        %v3103 = vunpack.c.l.b16 %v1693
        %v3104 = vunpack.c.h.b16 %v1693
        %v3105 = vunpack.c.l.b16 %v1694
        %v3106 = vunpack.c.h.b16 %v1694
        %v3107 = vunpack.c.l.b16 %v1695
        %v3108 = vunpack.c.h.b16 %v1695
        %v3109 = vunpack.c.l.b16 %v1696
        %v3110 = vunpack.c.h.b16 %v1696
        %v3111 = vunpack.c.l.b16 %v1697
        %v3112 = vunpack.c.h.b16 %v1697
        %v3113 = vunpack.c.l.b16 %v1698
        %v3114 = vunpack.c.h.b16 %v1698
        %v3115 = vunpack.c.l.b16 %v1699
        %v3116 = vunpack.c.h.b16 %v1699
        %v3117 = vunpack.c.l.b16 %v1700
        %v3118 = vunpack.c.h.b16 %v1700
        %v3119 = vunpack.c.l.b16 %v1701
        %v3120 = vunpack.c.h.b16 %v1701
        %v3121 = vunpack.c.l.b16 %v1702
        %v3122 = vunpack.c.h.b16 %v1702
        %v3123 = vunpack.c.l.b16 %v1703
        %v3124 = vunpack.c.h.b16 %v1703
        %v3125 = vunpack.c.l.b16 %v1704
        %v3126 = vunpack.c.h.b16 %v1704
        %v3127 = vunpack.c.l.b16 %v1705
        %v3128 = vunpack.c.h.b16 %v1705
        %v3129 = vunpack.c.l.b16 %v1706
        %v3130 = vunpack.c.h.b16 %v1706
        %v3131 = vunpack.c.l.b16 %v1707
        %v3132 = vunpack.c.h.b16 %v1707
        %v3133 = vunpack.c.l.b16 %v1708
        %v3134 = vunpack.c.h.b16 %v1708
        %v3135 = vunpack.c.l.b16 %v1709
        %v3136 = vunpack.c.h.b16 %v1709
        %v3137 = vunpack.c.l.b16 %v1710
        %v3138 = vunpack.c.h.b16 %v1710
        %v3139 = vunpack.c.l.b16 %v1711
        %v3140 = vunpack.c.h.b16 %v1711
        %v3141 = vunpack.c.l.b16 %v1712
        %v3142 = vunpack.c.h.b16 %v1712
        %v3143 = vunpack.c.l.b16 %v1713
        %v3144 = vunpack.c.h.b16 %v1713
        %v3145 = vunpack.c.l.b16 %v1714
        %v3146 = vunpack.c.h.b16 %v1714
        %v3147 = vunpack.c.l.b16 %v1715
        %v3148 = vunpack.c.h.b16 %v1715
        %v3149 = vunpack.c.l.b16 %v1716
        %v3150 = vunpack.c.h.b16 %v1716
        %v3151 = vunpack.c.l.b16 %v1717
        %v3152 = vunpack.c.h.b16 %v1717
        %v3153 = vunpack.c.l.b16 %v1718
        %v3154 = vunpack.c.h.b16 %v1718
        %v3155 = vunpack.c.l.b16 %v1719
        %v3156 = vunpack.c.h.b16 %v1719
        %v3157 = vunpack.c.l.b16 %v1720
        %v3158 = vunpack.c.h.b16 %v1720
        %v3159 = vunpack.c.l.b16 %v1721
        %v3160 = vunpack.c.h.b16 %v1721
        %v3161 = vunpack.c.l.b16 %v1722
        %v3162 = vunpack.c.h.b16 %v1722
        %v3163 = vunpack.c.l.b16 %v1723
        %v3164 = vunpack.c.h.b16 %v1723
        %v3165 = vunpack.c.l.b16 %v1724
        %v3166 = vunpack.c.h.b16 %v1724
        %v3167 = vunpack.c.l.b16 %v1725
        %v3168 = vunpack.c.h.b16 %v1725
        %v3169 = vunpack.c.l.b16 %v1726
        %v3170 = vunpack.c.h.b16 %v1726
        %v3171 = vunpack.c.l.b16 %v1727
        %v3172 = vunpack.c.h.b16 %v1727
        %v3173 = vunpack.c.l.b16 %v1728
        %v3174 = vunpack.c.h.b16 %v1728
        %v3175 = vunpack.c.l.b16 %v1729
        %v3176 = vunpack.c.h.b16 %v1729
        %v3177 = vunpack.c.l.b16 %v1730
        %v3178 = vunpack.c.h.b16 %v1730
        %v3179 = vunpack.c.l.b16 %v1731
        %v3180 = vunpack.c.h.b16 %v1731
        %v3181 = vunpack.c.l.b16 %v1732
        %v3182 = vunpack.c.h.b16 %v1732
        %v3183 = vunpack.c.l.b16 %v1733
        %v3184 = vunpack.c.h.b16 %v1733
        %v3185 = vunpack.c.l.b16 %v1734
        %v3186 = vunpack.c.h.b16 %v1734
        %v3187 = vunpack.c.l.b16 %v1735
        %v3188 = vunpack.c.h.b16 %v1735
        %v3189 = vunpack.c.l.b16 %v1736
        %v3190 = vunpack.c.h.b16 %v1736
        %v3191 = vunpack.c.l.b16 %v1737
        %v3192 = vunpack.c.h.b16 %v1737
        %v3193 = vunpack.c.l.b16 %v1738
        %v3194 = vunpack.c.h.b16 %v1738
        %v3195 = vunpack.c.l.b16 %v1739
        %v3196 = vunpack.c.h.b16 %v1739
        %v3197 = vunpack.c.l.b16 %v1740
        %v3198 = vunpack.c.h.b16 %v1740
        %v3199 = vunpack.c.l.b16 %v1741
        %v3200 = vunpack.c.h.b16 %v1741
        %v3201 = vunpack.c.l.b16 %v1742
        %v3202 = vunpack.c.h.b16 %v1742
        %v3203 = vunpack.c.l.b16 %v1743
        %v3204 = vunpack.c.h.b16 %v1743
        %v3205 = vunpack.c.l.b16 %v1744
        %v3206 = vunpack.c.h.b16 %v1744
        %v3207 = vunpack.c.l.b16 %v1745
        %v3208 = vunpack.c.h.b16 %v1745
        %v3209 = vunpack.c.l.b16 %v1746
        %v3210 = vunpack.c.h.b16 %v1746
        %v3211 = vunpack.c.l.b16 %v1747
        %v3212 = vunpack.c.h.b16 %v1747
        %v3213 = vunpack.c.l.b16 %v1748
        %v3214 = vunpack.c.h.b16 %v1748
        %v3215 = vunpack.c.l.b16 %v1749
        %v3216 = vunpack.c.h.b16 %v1749
        %v3217 = vunpack.c.l.b16 %v1750
        %v3218 = vunpack.c.h.b16 %v1750
        %v3219 = vunpack.c.l.b16 %v1751
        %v3220 = vunpack.c.h.b16 %v1751
        %v3221 = vunpack.c.l.b16 %v1752
        %v3222 = vunpack.c.h.b16 %v1752
        %v3223 = vunpack.c.l.b16 %v1753
        %v3224 = vunpack.c.h.b16 %v1753
        %v3225 = vunpack.c.l.b16 %v1754
        %v3226 = vunpack.c.h.b16 %v1754
        %v3227 = vunpack.c.l.b16 %v1755
        %v3228 = vunpack.c.h.b16 %v1755
        %v3229 = vunpack.c.l.b16 %v1756
        %v3230 = vunpack.c.h.b16 %v1756
        %v3231 = vunpack.c.l.b16 %v1757
        %v3232 = vunpack.c.h.b16 %v1757
        %v3233 = vunpack.c.l.b16 %v1758
        %v3234 = vunpack.c.h.b16 %v1758
        %v3235 = vunpack.c.l.b16 %v1759
        %v3236 = vunpack.c.h.b16 %v1759
        %v3237 = vunpack.c.l.b16 %v1760
        %v3238 = vunpack.c.h.b16 %v1760
        %v3239 = vunpack.c.l.b16 %v1761
        %v3240 = vunpack.c.h.b16 %v1761
        %v3241 = vunpack.c.l.b16 %v1762
        %v3242 = vunpack.c.h.b16 %v1762
        %v3243 = vunpack.c.l.b16 %v1763
        %v3244 = vunpack.c.h.b16 %v1763
        %v3245 = vunpack.c.l.b16 %v1764
        %v3246 = vunpack.c.h.b16 %v1764
        %v3247 = vunpack.c.l.b16 %v1765
        %v3248 = vunpack.c.h.b16 %v1765
        %v3249 = vunpack.c.l.b16 %v1766
        %v3250 = vunpack.c.h.b16 %v1766
        %v3251 = vunpack.c.l.b16 %v1767
        %v3252 = vunpack.c.h.b16 %v1767
        %v3253 = vunpack.c.l.b16 %v1768
        %v3254 = vunpack.c.h.b16 %v1768
        %v3255 = vunpack.c.l.b16 %v1769
        %v3256 = vunpack.c.h.b16 %v1769
        %v3257 = vunpack.c.l.b16 %v1770
        %v3258 = vunpack.c.h.b16 %v1770
        %v3259 = vunpack.c.l.b16 %v1771
        %v3260 = vunpack.c.h.b16 %v1771
        %v3261 = vunpack.c.l.b16 %v1772
        %v3262 = vunpack.c.h.b16 %v1772
        %v3263 = vunpack.c.l.b16 %v1773
        %v3264 = vunpack.c.h.b16 %v1773
        %v3265 = vunpack.c.l.b16 %v1774
        %v3266 = vunpack.c.h.b16 %v1774
        %v3267 = vunpack.c.l.b16 %v1775
        %v3268 = vunpack.c.h.b16 %v1775
        %v3269 = vunpack.c.l.b16 %v1776
        %v3270 = vunpack.c.h.b16 %v1776
        %v3271 = vunpack.c.l.b16 %v1777
        %v3272 = vunpack.c.h.b16 %v1777
        %v3273 = vunpack.c.l.b16 %v1778
        %v3274 = vunpack.c.h.b16 %v1778
        %v3275 = vunpack.c.l.b16 %v1779
        %v3276 = vunpack.c.h.b16 %v1779
        %v3277 = vunpack.c.l.b16 %v1780
        %v3278 = vunpack.c.h.b16 %v1780
        %v3279 = vunpack.c.l.b16 %v1781
        %v3280 = vunpack.c.h.b16 %v1781
        %v3281 = vunpack.c.l.b16 %v1782
        %v3282 = vunpack.c.h.b16 %v1782
        %v3283 = vunpack.c.l.b16 %v1783
        %v3284 = vunpack.c.h.b16 %v1783
        %v3285 = vunpack.c.l.b16 %v1784
        %v3286 = vunpack.c.h.b16 %v1784
        %v3287 = vunpack.c.l.b16 %v1785
        %v3288 = vunpack.c.h.b16 %v1785
        %v3289 = vunpack.c.l.b16 %v1786
        %v3290 = vunpack.c.h.b16 %v1786
        %v3291 = vunpack.c.l.b16 %v1787
        %v3292 = vunpack.c.h.b16 %v1787
        %v3293 = vunpack.c.l.b16 %v1788
        %v3294 = vunpack.c.h.b16 %v1788
        %v3295 = vunpack.c.l.b16 %v1789
        %v3296 = vunpack.c.h.b16 %v1789
        %v3297 = vunpack.c.l.b16 %v1790
        %v3298 = vunpack.c.h.b16 %v1790
        %v3299 = vunpack.c.l.b16 %v1791
        %v3300 = vunpack.c.h.b16 %v1791
        %v3301 = vunpack.c.l.b16 %v1792
        %v3302 = vunpack.c.h.b16 %v1792
        %v3303 = vunpack.c.l.b16 %v1793
        %v3304 = vunpack.c.h.b16 %v1793
        %v3305 = vunpack.c.l.b16 %v1794
        %v3306 = vunpack.c.h.b16 %v1794
        %v3307 = vunpack.c.l.b16 %v1795
        %v3308 = vunpack.c.h.b16 %v1795
        %v3309 = vunpack.c.l.b16 %v1796
        %v3310 = vunpack.c.h.b16 %v1796
        %v3311 = vunpack.c.l.b16 %v1797
        %v3312 = vunpack.c.h.b16 %v1797
        %v3313 = vunpack.c.l.b16 %v1798
        %v3314 = vunpack.c.h.b16 %v1798
        %v3315 = vunpack.c.l.b16 %v1799
        %v3316 = vunpack.c.h.b16 %v1799
        %v3317 = vunpack.c.l.b16 %v1800
        %v3318 = vunpack.c.h.b16 %v1800
        %v3319 = vunpack.c.l.b16 %v1801
        %v3320 = vunpack.c.h.b16 %v1801
        %v3321 = vunpack.c.l.b16 %v1802
        %v3322 = vunpack.c.h.b16 %v1802
        %v3323 = vunpack.c.l.b16 %v1803
        %v3324 = vunpack.c.h.b16 %v1803
        %v3325 = vunpack.c.l.b16 %v1804
        %v3326 = vunpack.c.h.b16 %v1804
        %v3327 = vunpack.c.l.b16 %v1805
        %v3328 = vunpack.c.h.b16 %v1805
        %v3329 = vunpack.c.l.b16 %v1806
        %v3330 = vunpack.c.h.b16 %v1806
        %v3331 = vunpack.c.l.b16 %v1807
        %v3332 = vunpack.c.h.b16 %v1807
        %v3333 = vunpack.c.l.b16 %v1808
        %v3334 = vunpack.c.h.b16 %v1808
        %v3335 = vunpack.c.l.b16 %v1809
        %v3336 = vunpack.c.h.b16 %v1809
        %v3337 = vunpack.c.l.b16 %v1810
        %v3338 = vunpack.c.h.b16 %v1810
        %v3339 = vunpack.c.l.b16 %v1811
        %v3340 = vunpack.c.h.b16 %v1811
        %v3341 = vunpack.c.l.b16 %v1812
        %v3342 = vunpack.c.h.b16 %v1812
        %v3343 = vunpack.c.l.b16 %v1813
        %v3344 = vunpack.c.h.b16 %v1813
        %v3345 = vunpack.c.l.b16 %v1814
        %v3346 = vunpack.c.h.b16 %v1814
        %v3347 = vunpack.c.l.b16 %v1815
        %v3348 = vunpack.c.h.b16 %v1815
        %v3349 = vunpack.c.l.b16 %v1816
        %v3350 = vunpack.c.h.b16 %v1816
        %v3351 = vunpack.c.l.b16 %v1817
        %v3352 = vunpack.c.h.b16 %v1817
        %v3353 = vunpack.c.l.b16 %v1818
        %v3354 = vunpack.c.h.b16 %v1818
        %v3355 = vunpack.c.l.b16 %v1819
        %v3356 = vunpack.c.h.b16 %v1819
        %v3357 = vunpack.c.l.b16 %v1820
        %v3358 = vunpack.c.h.b16 %v1820
        %v3359 = vunpack.c.l.b16 %v1821
        %v3360 = vunpack.c.h.b16 %v1821
        %v3361 = vunpack.c.l.b16 %v1822
        %v3362 = vunpack.c.h.b16 %v1822
        %v3363 = vunpack.c.l.b16 %v1823
        %v3364 = vunpack.c.h.b16 %v1823
        %v3365 = vunpack.c.l.b16 %v1824
        %v3366 = vunpack.c.h.b16 %v1824
        %v3367 = vunpack.c.l.b16 %v1825
        %v3368 = vunpack.c.h.b16 %v1825
        %v3369 = vunpack.c.l.b16 %v1826
        %v3370 = vunpack.c.h.b16 %v1826
        %v3371 = vunpack.c.l.b16 %v1827
        %v3372 = vunpack.c.h.b16 %v1827
        %v3373 = vunpack.c.l.b16 %v1828
        %v3374 = vunpack.c.h.b16 %v1828
        %v3375 = vunpack.c.l.b16 %v1829
        %v3376 = vunpack.c.h.b16 %v1829
        %v3377 = vunpack.c.l.b16 %v1830
        %v3378 = vunpack.c.h.b16 %v1830
        %v3379 = vunpack.c.l.b16 %v1831
        %v3380 = vunpack.c.h.b16 %v1831
        %v3381 = vunpack.c.l.b16 %v1832
        %v3382 = vunpack.c.h.b16 %v1832
        %v3383 = vunpack.c.l.b16 %v1833
        %v3384 = vunpack.c.h.b16 %v1833
        %v3385 = vunpack.c.l.b16 %v1834
        %v3386 = vunpack.c.h.b16 %v1834
        %v3387 = vunpack.c.l.b16 %v1835
        %v3388 = vunpack.c.h.b16 %v1835
        %v3389 = vunpack.c.l.b16 %v1836
        %v3390 = vunpack.c.h.b16 %v1836
        %v3391 = vunpack.c.l.b16 %v1837
        %v3392 = vunpack.c.h.b16 %v1837
        %v3393 = vunpack.c.l.b16 %v1838
        %v3394 = vunpack.c.h.b16 %v1838
        %v3395 = vunpack.c.l.b16 %v1839
        %v3396 = vunpack.c.h.b16 %v1839
        %v3397 = vunpack.c.l.b16 %v1840
        %v3398 = vunpack.c.h.b16 %v1840
        %v3399 = vpack.c.b16 %v2379, %v2375
        %v3400 = vpack.c.b16 %v2380, %v2376
        %v3401 = vpack.c.b16 %v2381, %v2377
        %v3402 = vpack.c.b16 %v2382, %v2378
        %v3403 = vpack.c.b16 %v2387, %v2383
        %v3404 = vpack.c.b16 %v2388, %v2384
        %v3405 = vpack.c.b16 %v2389, %v2385
        %v3406 = vpack.c.b16 %v2390, %v2386
        %v3407 = vpack.c.b16 %v2395, %v2391
        %v3408 = vpack.c.b16 %v2396, %v2392
        %v3409 = vpack.c.b16 %v2397, %v2393
        %v3410 = vpack.c.b16 %v2398, %v2394
        %v3411 = vpack.c.b16 %v2403, %v2399
        %v3412 = vpack.c.b16 %v2404, %v2400
        %v3413 = vpack.c.b16 %v2405, %v2401
        %v3414 = vpack.c.b16 %v2406, %v2402
        %v3415 = vpack.c.b16 %v2411, %v2407
        %v3416 = vpack.c.b16 %v2412, %v2408
        %v3417 = vpack.c.b16 %v2413, %v2409
        %v3418 = vpack.c.b16 %v2414, %v2410
        %v3419 = vpack.c.b16 %v2419, %v2415
        %v3420 = vpack.c.b16 %v2420, %v2416
        %v3421 = vpack.c.b16 %v2421, %v2417
        %v3422 = vpack.c.b16 %v2422, %v2418
        %v3423 = vpack.c.b16 %v2427, %v2423
        %v3424 = vpack.c.b16 %v2428, %v2424
        %v3425 = vpack.c.b16 %v2429, %v2425
        %v3426 = vpack.c.b16 %v2430, %v2426
        %v3427 = vpack.c.b16 %v2435, %v2431
        %v3428 = vpack.c.b16 %v2436, %v2432
        %v3429 = vpack.c.b16 %v2437, %v2433
        %v3430 = vpack.c.b16 %v2438, %v2434
        %v3431 = vpack.c.b16 %v2443, %v2439
        %v3432 = vpack.c.b16 %v2444, %v2440
        %v3433 = vpack.c.b16 %v2445, %v2441
        %v3434 = vpack.c.b16 %v2446, %v2442
        %v3435 = vpack.c.b16 %v2451, %v2447
        %v3436 = vpack.c.b16 %v2452, %v2448
        %v3437 = vpack.c.b16 %v2453, %v2449
        %v3438 = vpack.c.b16 %v2454, %v2450
        %v3439 = vpack.c.b16 %v2459, %v2455
        %v3440 = vpack.c.b16 %v2460, %v2456
        %v3441 = vpack.c.b16 %v2461, %v2457
        %v3442 = vpack.c.b16 %v2462, %v2458
        %v3443 = vpack.c.b16 %v2467, %v2463
        %v3444 = vpack.c.b16 %v2468, %v2464
        %v3445 = vpack.c.b16 %v2469, %v2465
        %v3446 = vpack.c.b16 %v2470, %v2466
        %v3447 = vpack.c.b16 %v2475, %v2471
        %v3448 = vpack.c.b16 %v2476, %v2472
        %v3449 = vpack.c.b16 %v2477, %v2473
        %v3450 = vpack.c.b16 %v2478, %v2474
        %v3451 = vpack.c.b16 %v2483, %v2479
        %v3452 = vpack.c.b16 %v2484, %v2480
        %v3453 = vpack.c.b16 %v2485, %v2481
        %v3454 = vpack.c.b16 %v2486, %v2482
        %v3455 = vpack.c.b16 %v2491, %v2487
        %v3456 = vpack.c.b16 %v2492, %v2488
        %v3457 = vpack.c.b16 %v2493, %v2489
        %v3458 = vpack.c.b16 %v2494, %v2490
        %v3459 = vpack.c.b16 %v2499, %v2495
        %v3460 = vpack.c.b16 %v2500, %v2496
        %v3461 = vpack.c.b16 %v2501, %v2497
        %v3462 = vpack.c.b16 %v2502, %v2498
        %v3463 = vpack.c.b16 %v2507, %v2503
        %v3464 = vpack.c.b16 %v2508, %v2504
        %v3465 = vpack.c.b16 %v2509, %v2505
        %v3466 = vpack.c.b16 %v2510, %v2506
        %v3467 = vpack.c.b16 %v2515, %v2511
        %v3468 = vpack.c.b16 %v2516, %v2512
        %v3469 = vpack.c.b16 %v2517, %v2513
        %v3470 = vpack.c.b16 %v2518, %v2514
        %v3471 = vpack.c.b16 %v2523, %v2519
        %v3472 = vpack.c.b16 %v2524, %v2520
        %v3473 = vpack.c.b16 %v2525, %v2521
        %v3474 = vpack.c.b16 %v2526, %v2522
        %v3475 = vpack.c.b16 %v2531, %v2527
        %v3476 = vpack.c.b16 %v2532, %v2528
        %v3477 = vpack.c.b16 %v2533, %v2529
        %v3478 = vpack.c.b16 %v2534, %v2530
        %v3479 = vpack.c.b16 %v2539, %v2535
        %v3480 = vpack.c.b16 %v2540, %v2536
        %v3481 = vpack.c.b16 %v2541, %v2537
        %v3482 = vpack.c.b16 %v2542, %v2538
        %v3483 = vpack.c.b16 %v2547, %v2543
        %v3484 = vpack.c.b16 %v2548, %v2544
        %v3485 = vpack.c.b16 %v2549, %v2545
        %v3486 = vpack.c.b16 %v2550, %v2546
        %v3487 = vpack.c.b16 %v2555, %v2551
        %v3488 = vpack.c.b16 %v2556, %v2552
        %v3489 = vpack.c.b16 %v2557, %v2553
        %v3490 = vpack.c.b16 %v2558, %v2554
        %v3491 = vpack.c.b16 %v2563, %v2559
        %v3492 = vpack.c.b16 %v2564, %v2560
        %v3493 = vpack.c.b16 %v2565, %v2561
        %v3494 = vpack.c.b16 %v2566, %v2562
        %v3495 = vpack.c.b16 %v2571, %v2567
        %v3496 = vpack.c.b16 %v2572, %v2568
        %v3497 = vpack.c.b16 %v2573, %v2569
        %v3498 = vpack.c.b16 %v2574, %v2570
        %v3499 = vpack.c.b16 %v2579, %v2575
        %v3500 = vpack.c.b16 %v2580, %v2576
        %v3501 = vpack.c.b16 %v2581, %v2577
        %v3502 = vpack.c.b16 %v2582, %v2578
        %v3503 = vpack.c.b16 %v2587, %v2583
        %v3504 = vpack.c.b16 %v2588, %v2584
        %v3505 = vpack.c.b16 %v2589, %v2585
        %v3506 = vpack.c.b16 %v2590, %v2586
        %v3507 = vpack.c.b16 %v2595, %v2591
        %v3508 = vpack.c.b16 %v2596, %v2592
        %v3509 = vpack.c.b16 %v2597, %v2593
        %v3510 = vpack.c.b16 %v2598, %v2594
        %v3511 = vpack.c.b16 %v2603, %v2599
        %v3512 = vpack.c.b16 %v2604, %v2600
        %v3513 = vpack.c.b16 %v2605, %v2601
        %v3514 = vpack.c.b16 %v2606, %v2602
        %v3515 = vpack.c.b16 %v2611, %v2607
        %v3516 = vpack.c.b16 %v2612, %v2608
        %v3517 = vpack.c.b16 %v2613, %v2609
        %v3518 = vpack.c.b16 %v2614, %v2610
        %v3519 = vpack.c.b16 %v2619, %v2615
        %v3520 = vpack.c.b16 %v2620, %v2616
        %v3521 = vpack.c.b16 %v2621, %v2617
        %v3522 = vpack.c.b16 %v2622, %v2618
        %v3523 = vpack.c.b16 %v2627, %v2623
        %v3524 = vpack.c.b16 %v2628, %v2624
        %v3525 = vpack.c.b16 %v2629, %v2625
        %v3526 = vpack.c.b16 %v2630, %v2626
        %v3527 = vpack.c.b16 %v2635, %v2631
        %v3528 = vpack.c.b16 %v2636, %v2632
        %v3529 = vpack.c.b16 %v2637, %v2633
        %v3530 = vpack.c.b16 %v2638, %v2634
        %v3531 = vpack.c.b16 %v2643, %v2639
        %v3532 = vpack.c.b16 %v2644, %v2640
        %v3533 = vpack.c.b16 %v2645, %v2641
        %v3534 = vpack.c.b16 %v2646, %v2642
        %v3535 = vpack.c.b16 %v2651, %v2647
        %v3536 = vpack.c.b16 %v2652, %v2648
        %v3537 = vpack.c.b16 %v2653, %v2649
        %v3538 = vpack.c.b16 %v2654, %v2650
        %v3539 = vpack.c.b16 %v2659, %v2655
        %v3540 = vpack.c.b16 %v2660, %v2656
        %v3541 = vpack.c.b16 %v2661, %v2657
        %v3542 = vpack.c.b16 %v2662, %v2658
        %v3543 = vpack.c.b16 %v2667, %v2663
        %v3544 = vpack.c.b16 %v2668, %v2664
        %v3545 = vpack.c.b16 %v2669, %v2665
        %v3546 = vpack.c.b16 %v2670, %v2666
        %v3547 = vpack.c.b16 %v2675, %v2671
        %v3548 = vpack.c.b16 %v2676, %v2672
        %v3549 = vpack.c.b16 %v2677, %v2673
        %v3550 = vpack.c.b16 %v2678, %v2674
        %v3551 = vpack.c.b16 %v2683, %v2679
        %v3552 = vpack.c.b16 %v2684, %v2680
        %v3553 = vpack.c.b16 %v2685, %v2681
        %v3554 = vpack.c.b16 %v2686, %v2682
        %v3555 = vpack.c.b16 %v2691, %v2687
        %v3556 = vpack.c.b16 %v2692, %v2688
        %v3557 = vpack.c.b16 %v2693, %v2689
        %v3558 = vpack.c.b16 %v2694, %v2690
        %v3559 = vpack.c.b16 %v2699, %v2695
        %v3560 = vpack.c.b16 %v2700, %v2696
        %v3561 = vpack.c.b16 %v2701, %v2697
        %v3562 = vpack.c.b16 %v2702, %v2698
        %v3563 = vpack.c.b16 %v2707, %v2703
        %v3564 = vpack.c.b16 %v2708, %v2704
        %v3565 = vpack.c.b16 %v2709, %v2705
        %v3566 = vpack.c.b16 %v2710, %v2706
        %v3567 = vpack.c.b16 %v2715, %v2711
        %v3568 = vpack.c.b16 %v2716, %v2712
        %v3569 = vpack.c.b16 %v2717, %v2713
        %v3570 = vpack.c.b16 %v2718, %v2714
        %v3571 = vpack.c.b16 %v2723, %v2719
        %v3572 = vpack.c.b16 %v2724, %v2720
        %v3573 = vpack.c.b16 %v2725, %v2721
        %v3574 = vpack.c.b16 %v2726, %v2722
        %v3575 = vpack.c.b16 %v2731, %v2727
        %v3576 = vpack.c.b16 %v2732, %v2728
        %v3577 = vpack.c.b16 %v2733, %v2729
        %v3578 = vpack.c.b16 %v2734, %v2730
        %v3579 = vpack.c.b16 %v2739, %v2735
        %v3580 = vpack.c.b16 %v2740, %v2736
        %v3581 = vpack.c.b16 %v2741, %v2737
        %v3582 = vpack.c.b16 %v2742, %v2738
        %v3583 = vpack.c.b16 %v2747, %v2743
        %v3584 = vpack.c.b16 %v2748, %v2744
        %v3585 = vpack.c.b16 %v2749, %v2745
        %v3586 = vpack.c.b16 %v2750, %v2746
        %v3587 = vpack.c.b16 %v2755, %v2751
        %v3588 = vpack.c.b16 %v2756, %v2752
        %v3589 = vpack.c.b16 %v2757, %v2753
        %v3590 = vpack.c.b16 %v2758, %v2754
        %v3591 = vpack.c.b16 %v2763, %v2759
        %v3592 = vpack.c.b16 %v2764, %v2760
        %v3593 = vpack.c.b16 %v2765, %v2761
        %v3594 = vpack.c.b16 %v2766, %v2762
        %v3595 = vpack.c.b16 %v2771, %v2767
        %v3596 = vpack.c.b16 %v2772, %v2768
        %v3597 = vpack.c.b16 %v2773, %v2769
        %v3598 = vpack.c.b16 %v2774, %v2770
        %v3599 = vpack.c.b16 %v2779, %v2775
        %v3600 = vpack.c.b16 %v2780, %v2776
        %v3601 = vpack.c.b16 %v2781, %v2777
        %v3602 = vpack.c.b16 %v2782, %v2778
        %v3603 = vpack.c.b16 %v2787, %v2783
        %v3604 = vpack.c.b16 %v2788, %v2784
        %v3605 = vpack.c.b16 %v2789, %v2785
        %v3606 = vpack.c.b16 %v2790, %v2786
        %v3607 = vpack.c.b16 %v2795, %v2791
        %v3608 = vpack.c.b16 %v2796, %v2792
        %v3609 = vpack.c.b16 %v2797, %v2793
        %v3610 = vpack.c.b16 %v2798, %v2794
        %v3611 = vpack.c.b16 %v2803, %v2799
        %v3612 = vpack.c.b16 %v2804, %v2800
        %v3613 = vpack.c.b16 %v2805, %v2801
        %v3614 = vpack.c.b16 %v2806, %v2802
        %v3615 = vpack.c.b16 %v2811, %v2807
        %v3616 = vpack.c.b16 %v2812, %v2808
        %v3617 = vpack.c.b16 %v2813, %v2809
        %v3618 = vpack.c.b16 %v2814, %v2810
        %v3619 = vpack.c.b16 %v2819, %v2815
        %v3620 = vpack.c.b16 %v2820, %v2816
        %v3621 = vpack.c.b16 %v2821, %v2817
        %v3622 = vpack.c.b16 %v2822, %v2818
        %v3623 = vpack.c.b16 %v2827, %v2823
        %v3624 = vpack.c.b16 %v2828, %v2824
        %v3625 = vpack.c.b16 %v2829, %v2825
        %v3626 = vpack.c.b16 %v2830, %v2826
        %v3627 = vpack.c.b16 %v2835, %v2831
        %v3628 = vpack.c.b16 %v2836, %v2832
        %v3629 = vpack.c.b16 %v2837, %v2833
        %v3630 = vpack.c.b16 %v2838, %v2834
        %v3631 = vpack.c.b16 %v2843, %v2839
        %v3632 = vpack.c.b16 %v2844, %v2840
        %v3633 = vpack.c.b16 %v2845, %v2841
        %v3634 = vpack.c.b16 %v2846, %v2842
        %v3635 = vpack.c.b16 %v2851, %v2847
        %v3636 = vpack.c.b16 %v2852, %v2848
        %v3637 = vpack.c.b16 %v2853, %v2849
        %v3638 = vpack.c.b16 %v2854, %v2850
        %v3639 = vpack.c.b16 %v2859, %v2855
        %v3640 = vpack.c.b16 %v2860, %v2856
        %v3641 = vpack.c.b16 %v2861, %v2857
        %v3642 = vpack.c.b16 %v2862, %v2858
        %v3643 = vpack.c.b16 %v2867, %v2863
        %v3644 = vpack.c.b16 %v2868, %v2864
        %v3645 = vpack.c.b16 %v2869, %v2865
        %v3646 = vpack.c.b16 %v2870, %v2866
        %v3647 = vpack.c.b16 %v2875, %v2871
        %v3648 = vpack.c.b16 %v2876, %v2872
        %v3649 = vpack.c.b16 %v2877, %v2873
        %v3650 = vpack.c.b16 %v2878, %v2874
        %v3651 = vpack.c.b16 %v2883, %v2879
        %v3652 = vpack.c.b16 %v2884, %v2880
        %v3653 = vpack.c.b16 %v2885, %v2881
        %v3654 = vpack.c.b16 %v2886, %v2882
        %v3655 = vpack.c.b16 %v2891, %v2887
        %v3656 = vpack.c.b16 %v2892, %v2888
        %v3657 = vpack.c.b16 %v2893, %v2889
        %v3658 = vpack.c.b16 %v2894, %v2890
        %v3659 = vpack.c.b16 %v2899, %v2895
        %v3660 = vpack.c.b16 %v2900, %v2896
        %v3661 = vpack.c.b16 %v2901, %v2897
        %v3662 = vpack.c.b16 %v2902, %v2898
        %v3663 = vpack.c.b16 %v2907, %v2903
        %v3664 = vpack.c.b16 %v2908, %v2904
        %v3665 = vpack.c.b16 %v2909, %v2905
        %v3666 = vpack.c.b16 %v2910, %v2906
        %v3667 = vpack.c.b16 %v2915, %v2911
        %v3668 = vpack.c.b16 %v2916, %v2912
        %v3669 = vpack.c.b16 %v2917, %v2913
        %v3670 = vpack.c.b16 %v2918, %v2914
        %v3671 = vpack.c.b16 %v2923, %v2919
        %v3672 = vpack.c.b16 %v2924, %v2920
        %v3673 = vpack.c.b16 %v2925, %v2921
        %v3674 = vpack.c.b16 %v2926, %v2922
        %v3675 = vpack.c.b16 %v2931, %v2927
        %v3676 = vpack.c.b16 %v2932, %v2928
        %v3677 = vpack.c.b16 %v2933, %v2929
        %v3678 = vpack.c.b16 %v2934, %v2930
        %v3679 = vpack.c.b16 %v2939, %v2935
        %v3680 = vpack.c.b16 %v2940, %v2936
        %v3681 = vpack.c.b16 %v2941, %v2937
        %v3682 = vpack.c.b16 %v2942, %v2938
        %v3683 = vpack.c.b16 %v2947, %v2943
        %v3684 = vpack.c.b16 %v2948, %v2944
        %v3685 = vpack.c.b16 %v2949, %v2945
        %v3686 = vpack.c.b16 %v2950, %v2946
        %v3687 = vpack.c.b16 %v2955, %v2951
        %v3688 = vpack.c.b16 %v2956, %v2952
        %v3689 = vpack.c.b16 %v2957, %v2953
        %v3690 = vpack.c.b16 %v2958, %v2954
        %v3691 = vpack.c.b16 %v2963, %v2959
        %v3692 = vpack.c.b16 %v2964, %v2960
        %v3693 = vpack.c.b16 %v2965, %v2961
        %v3694 = vpack.c.b16 %v2966, %v2962
        %v3695 = vpack.c.b16 %v2971, %v2967
        %v3696 = vpack.c.b16 %v2972, %v2968
        %v3697 = vpack.c.b16 %v2973, %v2969
        %v3698 = vpack.c.b16 %v2974, %v2970
        %v3699 = vpack.c.b16 %v2979, %v2975
        %v3700 = vpack.c.b16 %v2980, %v2976
        %v3701 = vpack.c.b16 %v2981, %v2977
        %v3702 = vpack.c.b16 %v2982, %v2978
        %v3703 = vpack.c.b16 %v2987, %v2983
        %v3704 = vpack.c.b16 %v2988, %v2984
        %v3705 = vpack.c.b16 %v2989, %v2985
        %v3706 = vpack.c.b16 %v2990, %v2986
        %v3707 = vpack.c.b16 %v2995, %v2991
        %v3708 = vpack.c.b16 %v2996, %v2992
        %v3709 = vpack.c.b16 %v2997, %v2993
        %v3710 = vpack.c.b16 %v2998, %v2994
        %v3711 = vpack.c.b16 %v3003, %v2999
        %v3712 = vpack.c.b16 %v3004, %v3000
        %v3713 = vpack.c.b16 %v3005, %v3001
        %v3714 = vpack.c.b16 %v3006, %v3002
        %v3715 = vpack.c.b16 %v3011, %v3007
        %v3716 = vpack.c.b16 %v3012, %v3008
        %v3717 = vpack.c.b16 %v3013, %v3009
        %v3718 = vpack.c.b16 %v3014, %v3010
        %v3719 = vpack.c.b16 %v3019, %v3015
        %v3720 = vpack.c.b16 %v3020, %v3016
        %v3721 = vpack.c.b16 %v3021, %v3017
        %v3722 = vpack.c.b16 %v3022, %v3018
        %v3723 = vpack.c.b16 %v3027, %v3023
        %v3724 = vpack.c.b16 %v3028, %v3024
        %v3725 = vpack.c.b16 %v3029, %v3025
        %v3726 = vpack.c.b16 %v3030, %v3026
        %v3727 = vpack.c.b16 %v3035, %v3031
        %v3728 = vpack.c.b16 %v3036, %v3032
        %v3729 = vpack.c.b16 %v3037, %v3033
        %v3730 = vpack.c.b16 %v3038, %v3034
        %v3731 = vpack.c.b16 %v3043, %v3039
        %v3732 = vpack.c.b16 %v3044, %v3040
        %v3733 = vpack.c.b16 %v3045, %v3041
        %v3734 = vpack.c.b16 %v3046, %v3042
        %v3735 = vpack.c.b16 %v3051, %v3047
        %v3736 = vpack.c.b16 %v3052, %v3048
        %v3737 = vpack.c.b16 %v3053, %v3049
        %v3738 = vpack.c.b16 %v3054, %v3050
        %v3739 = vpack.c.b16 %v3059, %v3055
        %v3740 = vpack.c.b16 %v3060, %v3056
        %v3741 = vpack.c.b16 %v3061, %v3057
        %v3742 = vpack.c.b16 %v3062, %v3058
        %v3743 = vpack.c.b16 %v3067, %v3063
        %v3744 = vpack.c.b16 %v3068, %v3064
        %v3745 = vpack.c.b16 %v3069, %v3065
        %v3746 = vpack.c.b16 %v3070, %v3066
        %v3747 = vpack.c.b16 %v3075, %v3071
        %v3748 = vpack.c.b16 %v3076, %v3072
        %v3749 = vpack.c.b16 %v3077, %v3073
        %v3750 = vpack.c.b16 %v3078, %v3074
        %v3751 = vpack.c.b16 %v3083, %v3079
        %v3752 = vpack.c.b16 %v3084, %v3080
        %v3753 = vpack.c.b16 %v3085, %v3081
        %v3754 = vpack.c.b16 %v3086, %v3082
        %v3755 = vpack.c.b16 %v3091, %v3087
        %v3756 = vpack.c.b16 %v3092, %v3088
        %v3757 = vpack.c.b16 %v3093, %v3089
        %v3758 = vpack.c.b16 %v3094, %v3090
        %v3759 = vpack.c.b16 %v3099, %v3095
        %v3760 = vpack.c.b16 %v3100, %v3096
        %v3761 = vpack.c.b16 %v3101, %v3097
        %v3762 = vpack.c.b16 %v3102, %v3098
        %v3763 = vpack.c.b16 %v3107, %v3103
        %v3764 = vpack.c.b16 %v3108, %v3104
        %v3765 = vpack.c.b16 %v3109, %v3105
        %v3766 = vpack.c.b16 %v3110, %v3106
        %v3767 = vpack.c.b16 %v3115, %v3111
        %v3768 = vpack.c.b16 %v3116, %v3112
        %v3769 = vpack.c.b16 %v3117, %v3113
        %v3770 = vpack.c.b16 %v3118, %v3114
        %v3771 = vpack.c.b16 %v3123, %v3119
        %v3772 = vpack.c.b16 %v3124, %v3120
        %v3773 = vpack.c.b16 %v3125, %v3121
        %v3774 = vpack.c.b16 %v3126, %v3122
        %v3775 = vpack.c.b16 %v3131, %v3127
        %v3776 = vpack.c.b16 %v3132, %v3128
        %v3777 = vpack.c.b16 %v3133, %v3129
        %v3778 = vpack.c.b16 %v3134, %v3130
        %v3779 = vpack.c.b16 %v3139, %v3135
        %v3780 = vpack.c.b16 %v3140, %v3136
        %v3781 = vpack.c.b16 %v3141, %v3137
        %v3782 = vpack.c.b16 %v3142, %v3138
        %v3783 = vpack.c.b16 %v3147, %v3143
        %v3784 = vpack.c.b16 %v3148, %v3144
        %v3785 = vpack.c.b16 %v3149, %v3145
        %v3786 = vpack.c.b16 %v3150, %v3146
        %v3787 = vpack.c.b16 %v3155, %v3151
        %v3788 = vpack.c.b16 %v3156, %v3152
        %v3789 = vpack.c.b16 %v3157, %v3153
        %v3790 = vpack.c.b16 %v3158, %v3154
        %v3791 = vpack.c.b16 %v3163, %v3159
        %v3792 = vpack.c.b16 %v3164, %v3160
        %v3793 = vpack.c.b16 %v3165, %v3161
        %v3794 = vpack.c.b16 %v3166, %v3162
        %v3795 = vpack.c.b16 %v3171, %v3167
        %v3796 = vpack.c.b16 %v3172, %v3168
        %v3797 = vpack.c.b16 %v3173, %v3169
        %v3798 = vpack.c.b16 %v3174, %v3170
        %v3799 = vpack.c.b16 %v3179, %v3175
        %v3800 = vpack.c.b16 %v3180, %v3176
        %v3801 = vpack.c.b16 %v3181, %v3177
        %v3802 = vpack.c.b16 %v3182, %v3178
        %v3803 = vpack.c.b16 %v3187, %v3183
        %v3804 = vpack.c.b16 %v3188, %v3184
        %v3805 = vpack.c.b16 %v3189, %v3185
        %v3806 = vpack.c.b16 %v3190, %v3186
        %v3807 = vpack.c.b16 %v3195, %v3191
        %v3808 = vpack.c.b16 %v3196, %v3192
        %v3809 = vpack.c.b16 %v3197, %v3193
        %v3810 = vpack.c.b16 %v3198, %v3194
        %v3811 = vpack.c.b16 %v3203, %v3199
        %v3812 = vpack.c.b16 %v3204, %v3200
        %v3813 = vpack.c.b16 %v3205, %v3201
        %v3814 = vpack.c.b16 %v3206, %v3202
        %v3815 = vpack.c.b16 %v3211, %v3207
        %v3816 = vpack.c.b16 %v3212, %v3208
        %v3817 = vpack.c.b16 %v3213, %v3209
        %v3818 = vpack.c.b16 %v3214, %v3210
        %v3819 = vpack.c.b16 %v3219, %v3215
        %v3820 = vpack.c.b16 %v3220, %v3216
        %v3821 = vpack.c.b16 %v3221, %v3217
        %v3822 = vpack.c.b16 %v3222, %v3218
        %v3823 = vpack.c.b16 %v3227, %v3223
        %v3824 = vpack.c.b16 %v3228, %v3224
        %v3825 = vpack.c.b16 %v3229, %v3225
        %v3826 = vpack.c.b16 %v3230, %v3226
        %v3827 = vpack.c.b16 %v3235, %v3231
        %v3828 = vpack.c.b16 %v3236, %v3232
        %v3829 = vpack.c.b16 %v3237, %v3233
        %v3830 = vpack.c.b16 %v3238, %v3234
        %v3831 = vpack.c.b16 %v3243, %v3239
        %v3832 = vpack.c.b16 %v3244, %v3240
        %v3833 = vpack.c.b16 %v3245, %v3241
        %v3834 = vpack.c.b16 %v3246, %v3242
        %v3835 = vpack.c.b16 %v3251, %v3247
        %v3836 = vpack.c.b16 %v3252, %v3248
        %v3837 = vpack.c.b16 %v3253, %v3249
        %v3838 = vpack.c.b16 %v3254, %v3250
        %v3839 = vpack.c.b16 %v3259, %v3255
        %v3840 = vpack.c.b16 %v3260, %v3256
        %v3841 = vpack.c.b16 %v3261, %v3257
        %v3842 = vpack.c.b16 %v3262, %v3258
        %v3843 = vpack.c.b16 %v3267, %v3263
        %v3844 = vpack.c.b16 %v3268, %v3264
        %v3845 = vpack.c.b16 %v3269, %v3265
        %v3846 = vpack.c.b16 %v3270, %v3266
        %v3847 = vpack.c.b16 %v3275, %v3271
        %v3848 = vpack.c.b16 %v3276, %v3272
        %v3849 = vpack.c.b16 %v3277, %v3273
        %v3850 = vpack.c.b16 %v3278, %v3274
        %v3851 = vpack.c.b16 %v3283, %v3279
        %v3852 = vpack.c.b16 %v3284, %v3280
        %v3853 = vpack.c.b16 %v3285, %v3281
        %v3854 = vpack.c.b16 %v3286, %v3282
        %v3855 = vpack.c.b16 %v3291, %v3287
        %v3856 = vpack.c.b16 %v3292, %v3288
        %v3857 = vpack.c.b16 %v3293, %v3289
        %v3858 = vpack.c.b16 %v3294, %v3290
        %v3859 = vpack.c.b16 %v3299, %v3295
        %v3860 = vpack.c.b16 %v3300, %v3296
        %v3861 = vpack.c.b16 %v3301, %v3297
        %v3862 = vpack.c.b16 %v3302, %v3298
        %v3863 = vpack.c.b16 %v3307, %v3303
        %v3864 = vpack.c.b16 %v3308, %v3304
        %v3865 = vpack.c.b16 %v3309, %v3305
        %v3866 = vpack.c.b16 %v3310, %v3306
        %v3867 = vpack.c.b16 %v3315, %v3311
        %v3868 = vpack.c.b16 %v3316, %v3312
        %v3869 = vpack.c.b16 %v3317, %v3313
        %v3870 = vpack.c.b16 %v3318, %v3314
        %v3871 = vpack.c.b16 %v3323, %v3319
        %v3872 = vpack.c.b16 %v3324, %v3320
        %v3873 = vpack.c.b16 %v3325, %v3321
        %v3874 = vpack.c.b16 %v3326, %v3322
        %v3875 = vpack.c.b16 %v3331, %v3327
        %v3876 = vpack.c.b16 %v3332, %v3328
        %v3877 = vpack.c.b16 %v3333, %v3329
        %v3878 = vpack.c.b16 %v3334, %v3330
        %v3879 = vpack.c.b16 %v3339, %v3335
        %v3880 = vpack.c.b16 %v3340, %v3336
        %v3881 = vpack.c.b16 %v3341, %v3337
        %v3882 = vpack.c.b16 %v3342, %v3338
        %v3883 = vpack.c.b16 %v3347, %v3343
        %v3884 = vpack.c.b16 %v3348, %v3344
        %v3885 = vpack.c.b16 %v3349, %v3345
        %v3886 = vpack.c.b16 %v3350, %v3346
        %v3887 = vpack.c.b16 %v3355, %v3351
        %v3888 = vpack.c.b16 %v3356, %v3352
        %v3889 = vpack.c.b16 %v3357, %v3353
        %v3890 = vpack.c.b16 %v3358, %v3354
        %v3891 = vpack.c.b16 %v3363, %v3359
        %v3892 = vpack.c.b16 %v3364, %v3360
        %v3893 = vpack.c.b16 %v3365, %v3361
        %v3894 = vpack.c.b16 %v3366, %v3362
        %v3895 = vpack.c.b16 %v3371, %v3367
        %v3896 = vpack.c.b16 %v3372, %v3368
        %v3897 = vpack.c.b16 %v3373, %v3369
        %v3898 = vpack.c.b16 %v3374, %v3370
        %v3899 = vpack.c.b16 %v3379, %v3375
        %v3900 = vpack.c.b16 %v3380, %v3376
        %v3901 = vpack.c.b16 %v3381, %v3377
        %v3902 = vpack.c.b16 %v3382, %v3378
        %v3903 = vpack.c.b16 %v3387, %v3383
        %v3904 = vpack.c.b16 %v3388, %v3384
        %v3905 = vpack.c.b16 %v3389, %v3385
        %v3906 = vpack.c.b16 %v3390, %v3386
        %v3907 = vpack.c.b16 %v3395, %v3391
        %v3908 = vpack.c.b16 %v3396, %v3392
        %v3909 = vpack.c.b16 %v3397, %v3393
        %v3910 = vpack.c.b16 %v3398, %v3394
        %4423 = vmatprep.subr.bf16.mxu0 %v3428
        %4424 = vmatpush1.bf16.msra.mxu0 %v3427
        %4425 = vmatprep.subr.bf16.mxu0 %v3424
        %4426 = vmatpush1.bf16.msra.mxu0 %v3423
        %4427 = vmatprep.subr.bf16.mxu0 %v3420
        %4428 = vmatpush1.bf16.msra.mxu0 %v3419
        %4429 = vmatprep.subr.bf16.mxu0 %v3416
        %4430 = vmatpush1.bf16.msra.mxu0 %v3415
        %4431 = vmatprep.subr.bf16.mxu0 %v3412
        %4432 = vmatpush1.bf16.msra.mxu0 %v3411
        %4433 = vmatprep.subr.bf16.mxu0 %v3408
        %4434 = vmatpush1.bf16.msra.mxu0 %v3407
        %4435 = vmatprep.subr.bf16.mxu0 %v3404
        %4436 = vmatpush1.bf16.msra.mxu0 %v3403
        %4437 = vmatprep.subr.bf16.mxu0 %v3400
        %4438 = vmatpush1.bf16.msra.mxu0 %v3399
        %4439 = vmatprep.subr.bf16.mxu0 %v3460
        %4440 = vmatpush2.bf16.msra.mxu0 %v3459
        %4441 = vmatprep.subr.bf16.mxu0 %v3456
        %4442 = vmatpush2.bf16.msra.mxu0 %v3455
        %4443 = vmatprep.subr.bf16.mxu0 %v3452
        %4444 = vmatpush2.bf16.msra.mxu0 %v3451
        %4445 = vmatprep.subr.bf16.mxu0 %v3448
        %4446 = vmatpush2.bf16.msra.mxu0 %v3447
        %4447 = vmatprep.subr.bf16.mxu0 %v3444
        %4448 = vmatpush2.bf16.msra.mxu0 %v3443
        %4449 = vmatprep.subr.bf16.mxu0 %v3440
        %4450 = vmatpush2.bf16.msra.mxu0 %v3439
        %4451 = vmatprep.subr.bf16.mxu0 %v3436
        %4452 = vmatpush2.bf16.msra.mxu0 %v3435
        %4453 = vmatprep.subr.bf16.mxu0 %v3432
        %4454 = vmatpush2.bf16.msra.mxu0 %v3431
        %4455 = vmatprep.mubr.bf16.mxu0 %v1314
        %4456 = vmatmul.mubr.bf16.gmra.mxu0 %v1313
        %v4457 = vpop.f32.mrf.mxu0
        %v4458 = vadd.f32 %v1846, %v4457
        %v4459 = vpop.f32.mrf.mxu0
        %v4460 = vadd.f32 %v1850, %v4459
        %v4461 = vpop.f32.mrf.mxu0
        %v4462 = vpop.f32.mrf.mxu0
        %4463 = vdwg.mxu0
        %4464 = vmatprep.subr.bf16.mxu0 %v3492
        %4465 = vmatpush1.bf16.msra.mxu0 %v3491
        %4466 = vmatprep.subr.bf16.mxu0 %v3488
        %4467 = vmatpush1.bf16.msra.mxu0 %v3487
        %4468 = vmatprep.subr.bf16.mxu0 %v3484
        %4469 = vmatpush1.bf16.msra.mxu0 %v3483
        %4470 = vmatprep.subr.bf16.mxu0 %v3480
        %4471 = vmatpush1.bf16.msra.mxu0 %v3479
        %4472 = vmatprep.subr.bf16.mxu0 %v3476
        %4473 = vmatpush1.bf16.msra.mxu0 %v3475
        %4474 = vmatprep.subr.bf16.mxu0 %v3472
        %4475 = vmatpush1.bf16.msra.mxu0 %v3471
        %4476 = vmatprep.subr.bf16.mxu0 %v3468
        %4477 = vmatpush1.bf16.msra.mxu0 %v3467
        %4478 = vmatprep.subr.bf16.mxu0 %v3464
        %4479 = vmatpush1.bf16.msra.mxu0 %v3463
        %4480 = vmatprep.subr.bf16.mxu0 %v3524
        %4481 = vmatpush2.bf16.msra.mxu0 %v3523
        %4482 = vmatprep.subr.bf16.mxu0 %v3520
        %4483 = vmatpush2.bf16.msra.mxu0 %v3519
        %4484 = vmatprep.subr.bf16.mxu0 %v3516
        %4485 = vmatpush2.bf16.msra.mxu0 %v3515
        %4486 = vmatprep.subr.bf16.mxu0 %v3512
        %4487 = vmatpush2.bf16.msra.mxu0 %v3511
        %4488 = vmatprep.subr.bf16.mxu0 %v3508
        %4489 = vmatpush2.bf16.msra.mxu0 %v3507
        %4490 = vmatprep.subr.bf16.mxu0 %v3504
        %4491 = vmatpush2.bf16.msra.mxu0 %v3503
        %4492 = vmatprep.subr.bf16.mxu0 %v3500
        %4493 = vmatpush2.bf16.msra.mxu0 %v3499
        %4494 = vmatprep.subr.bf16.mxu0 %v3496
        %4495 = vmatpush2.bf16.msra.mxu0 %v3495
        %4496 = vmatprep.mubr.bf16.mxu0 %v1316
        %4497 = vmatmul.mubr.bf16.gmra.mxu0 %v1315
        %v4498 = vpop.f32.mrf.mxu0
        %v4499 = vadd.f32 %v4458, %v4498
        %v4500 = vpop.f32.mrf.mxu0
        %v4501 = vadd.f32 %v4460, %v4500
        %v4502 = vpop.f32.mrf.mxu0
        %v4503 = vpop.f32.mrf.mxu0
        %4504 = vdwg.mxu0
        %4505 = vmatprep.subr.bf16.mxu0 %v3556
        %4506 = vmatpush1.bf16.msra.mxu0 %v3555
        %4507 = vmatprep.subr.bf16.mxu0 %v3552
        %4508 = vmatpush1.bf16.msra.mxu0 %v3551
        %4509 = vmatprep.subr.bf16.mxu0 %v3548
        %4510 = vmatpush1.bf16.msra.mxu0 %v3547
        %4511 = vmatprep.subr.bf16.mxu0 %v3544
        %4512 = vmatpush1.bf16.msra.mxu0 %v3543
        %4513 = vmatprep.subr.bf16.mxu0 %v3540
        %4514 = vmatpush1.bf16.msra.mxu0 %v3539
        %4515 = vmatprep.subr.bf16.mxu0 %v3536
        %4516 = vmatpush1.bf16.msra.mxu0 %v3535
        %4517 = vmatprep.subr.bf16.mxu0 %v3532
        %4518 = vmatpush1.bf16.msra.mxu0 %v3531
        %4519 = vmatprep.subr.bf16.mxu0 %v3528
        %4520 = vmatpush1.bf16.msra.mxu0 %v3527
        %4521 = vmatprep.subr.bf16.mxu0 %v3588
        %4522 = vmatpush2.bf16.msra.mxu0 %v3587
        %4523 = vmatprep.subr.bf16.mxu0 %v3584
        %4524 = vmatpush2.bf16.msra.mxu0 %v3583
        %4525 = vmatprep.subr.bf16.mxu0 %v3580
        %4526 = vmatpush2.bf16.msra.mxu0 %v3579
        %4527 = vmatprep.subr.bf16.mxu0 %v3576
        %4528 = vmatpush2.bf16.msra.mxu0 %v3575
        %4529 = vmatprep.subr.bf16.mxu0 %v3572
        %4530 = vmatpush2.bf16.msra.mxu0 %v3571
        %4531 = vmatprep.subr.bf16.mxu0 %v3568
        %4532 = vmatpush2.bf16.msra.mxu0 %v3567
        %4533 = vmatprep.subr.bf16.mxu0 %v3564
        %4534 = vmatpush2.bf16.msra.mxu0 %v3563
        %4535 = vmatprep.subr.bf16.mxu0 %v3560
        %4536 = vmatpush2.bf16.msra.mxu0 %v3559
        %4537 = vmatprep.mubr.bf16.mxu0 %v1318
        %4538 = vmatmul.mubr.bf16.gmra.mxu0 %v1317
        %v4539 = vpop.f32.mrf.mxu0
        %v4540 = vadd.f32 %v4499, %v4539
        %v4541 = vpop.f32.mrf.mxu0
        %v4542 = vadd.f32 %v4501, %v4541
        %v4543 = vpop.f32.mrf.mxu0
        %v4544 = vpop.f32.mrf.mxu0
        %4545 = vdwg.mxu0
        %4546 = vmatprep.subr.bf16.mxu0 %v3620
        %4547 = vmatpush1.bf16.msra.mxu0 %v3619
        %4548 = vmatprep.subr.bf16.mxu0 %v3616
        %4549 = vmatpush1.bf16.msra.mxu0 %v3615
        %4550 = vmatprep.subr.bf16.mxu0 %v3612
        %4551 = vmatpush1.bf16.msra.mxu0 %v3611
        %4552 = vmatprep.subr.bf16.mxu0 %v3608
        %4553 = vmatpush1.bf16.msra.mxu0 %v3607
        %4554 = vmatprep.subr.bf16.mxu0 %v3604
        %4555 = vmatpush1.bf16.msra.mxu0 %v3603
        %4556 = vmatprep.subr.bf16.mxu0 %v3600
        %4557 = vmatpush1.bf16.msra.mxu0 %v3599
        %4558 = vmatprep.subr.bf16.mxu0 %v3596
        %4559 = vmatpush1.bf16.msra.mxu0 %v3595
        %4560 = vmatprep.subr.bf16.mxu0 %v3592
        %4561 = vmatpush1.bf16.msra.mxu0 %v3591
        %4562 = vmatprep.subr.bf16.mxu0 %v3652
        %4563 = vmatpush2.bf16.msra.mxu0 %v3651
        %4564 = vmatprep.subr.bf16.mxu0 %v3648
        %4565 = vmatpush2.bf16.msra.mxu0 %v3647
        %4566 = vmatprep.subr.bf16.mxu0 %v3644
        %4567 = vmatpush2.bf16.msra.mxu0 %v3643
        %4568 = vmatprep.subr.bf16.mxu0 %v3640
        %4569 = vmatpush2.bf16.msra.mxu0 %v3639
        %4570 = vmatprep.subr.bf16.mxu0 %v3636
        %4571 = vmatpush2.bf16.msra.mxu0 %v3635
        %4572 = vmatprep.subr.bf16.mxu0 %v3632
        %4573 = vmatpush2.bf16.msra.mxu0 %v3631
        %4574 = vmatprep.subr.bf16.mxu0 %v3628
        %4575 = vmatpush2.bf16.msra.mxu0 %v3627
        %4576 = vmatprep.subr.bf16.mxu0 %v3624
        %4577 = vmatpush2.bf16.msra.mxu0 %v3623
        %4578 = vmatprep.mubr.bf16.mxu0 %v1320
        %4579 = vmatmul.mubr.bf16.gmra.mxu0 %v1319
        %v4580 = vpop.f32.mrf.mxu0
        %v4581 = vadd.f32 %v4540, %v4580
        %v4582 = vpop.f32.mrf.mxu0
        %v4583 = vadd.f32 %v4542, %v4582
        %v4584 = vpop.f32.mrf.mxu0
        %v4585 = vpop.f32.mrf.mxu0
        %4586 = vdwg.mxu0
        %4587 = vmatprep.subr.bf16.mxu0 %v3684
        %4588 = vmatpush1.bf16.msra.mxu0 %v3683
        %4589 = vmatprep.subr.bf16.mxu0 %v3680
        %4590 = vmatpush1.bf16.msra.mxu0 %v3679
        %4591 = vmatprep.subr.bf16.mxu0 %v3676
        %4592 = vmatpush1.bf16.msra.mxu0 %v3675
        %4593 = vmatprep.subr.bf16.mxu0 %v3672
        %4594 = vmatpush1.bf16.msra.mxu0 %v3671
        %4595 = vmatprep.subr.bf16.mxu0 %v3668
        %4596 = vmatpush1.bf16.msra.mxu0 %v3667
        %4597 = vmatprep.subr.bf16.mxu0 %v3664
        %4598 = vmatpush1.bf16.msra.mxu0 %v3663
        %4599 = vmatprep.subr.bf16.mxu0 %v3660
        %4600 = vmatpush1.bf16.msra.mxu0 %v3659
        %4601 = vmatprep.subr.bf16.mxu0 %v3656
        %4602 = vmatpush1.bf16.msra.mxu0 %v3655
        %4603 = vmatprep.subr.bf16.mxu0 %v3716
        %4604 = vmatpush2.bf16.msra.mxu0 %v3715
        %4605 = vmatprep.subr.bf16.mxu0 %v3712
        %4606 = vmatpush2.bf16.msra.mxu0 %v3711
        %4607 = vmatprep.subr.bf16.mxu0 %v3708
        %4608 = vmatpush2.bf16.msra.mxu0 %v3707
        %4609 = vmatprep.subr.bf16.mxu0 %v3704
        %4610 = vmatpush2.bf16.msra.mxu0 %v3703
        %4611 = vmatprep.subr.bf16.mxu0 %v3700
        %4612 = vmatpush2.bf16.msra.mxu0 %v3699
        %4613 = vmatprep.subr.bf16.mxu0 %v3696
        %4614 = vmatpush2.bf16.msra.mxu0 %v3695
        %4615 = vmatprep.subr.bf16.mxu0 %v3692
        %4616 = vmatpush2.bf16.msra.mxu0 %v3691
        %4617 = vmatprep.subr.bf16.mxu0 %v3688
        %4618 = vmatpush2.bf16.msra.mxu0 %v3687
        %4619 = vmatprep.mubr.bf16.mxu0 %v1322
        %4620 = vmatmul.mubr.bf16.gmra.mxu0 %v1321
        %v4621 = vpop.f32.mrf.mxu0
        %v4622 = vadd.f32 %v4581, %v4621
        %v4623 = vpop.f32.mrf.mxu0
        %v4624 = vadd.f32 %v4583, %v4623
        %v4625 = vpop.f32.mrf.mxu0
        %v4626 = vpop.f32.mrf.mxu0
        %4627 = vdwg.mxu0
        %4628 = vmatprep.subr.bf16.mxu0 %v3748
        %4629 = vmatpush1.bf16.msra.mxu0 %v3747
        %4630 = vmatprep.subr.bf16.mxu0 %v3744
        %4631 = vmatpush1.bf16.msra.mxu0 %v3743
        %4632 = vmatprep.subr.bf16.mxu0 %v3740
        %4633 = vmatpush1.bf16.msra.mxu0 %v3739
        %4634 = vmatprep.subr.bf16.mxu0 %v3736
        %4635 = vmatpush1.bf16.msra.mxu0 %v3735
        %4636 = vmatprep.subr.bf16.mxu0 %v3732
        %4637 = vmatpush1.bf16.msra.mxu0 %v3731
        %4638 = vmatprep.subr.bf16.mxu0 %v3728
        %4639 = vmatpush1.bf16.msra.mxu0 %v3727
        %4640 = vmatprep.subr.bf16.mxu0 %v3724
        %4641 = vmatpush1.bf16.msra.mxu0 %v3723
        %4642 = vmatprep.subr.bf16.mxu0 %v3720
        %4643 = vmatpush1.bf16.msra.mxu0 %v3719
        %4644 = vmatprep.subr.bf16.mxu0 %v3780
        %4645 = vmatpush2.bf16.msra.mxu0 %v3779
        %4646 = vmatprep.subr.bf16.mxu0 %v3776
        %4647 = vmatpush2.bf16.msra.mxu0 %v3775
        %4648 = vmatprep.subr.bf16.mxu0 %v3772
        %4649 = vmatpush2.bf16.msra.mxu0 %v3771
        %4650 = vmatprep.subr.bf16.mxu0 %v3768
        %4651 = vmatpush2.bf16.msra.mxu0 %v3767
        %4652 = vmatprep.subr.bf16.mxu0 %v3764
        %4653 = vmatpush2.bf16.msra.mxu0 %v3763
        %4654 = vmatprep.subr.bf16.mxu0 %v3760
        %4655 = vmatpush2.bf16.msra.mxu0 %v3759
        %4656 = vmatprep.subr.bf16.mxu0 %v3756
        %4657 = vmatpush2.bf16.msra.mxu0 %v3755
        %4658 = vmatprep.subr.bf16.mxu0 %v3752
        %4659 = vmatpush2.bf16.msra.mxu0 %v3751
        %4660 = vmatprep.mubr.bf16.mxu0 %v1324
        %4661 = vmatmul.mubr.bf16.gmra.mxu0 %v1323
        %v4662 = vpop.f32.mrf.mxu0
        %v4663 = vadd.f32 %v4622, %v4662
        %v4664 = vpop.f32.mrf.mxu0
        %v4665 = vadd.f32 %v4624, %v4664
        %v4666 = vpop.f32.mrf.mxu0
        %v4667 = vpop.f32.mrf.mxu0
        %4668 = vdwg.mxu0
        %4669 = vmatprep.subr.bf16.mxu0 %v3812
        %4670 = vmatpush1.bf16.msra.mxu0 %v3811
        %4671 = vmatprep.subr.bf16.mxu0 %v3808
        %4672 = vmatpush1.bf16.msra.mxu0 %v3807
        %4673 = vmatprep.subr.bf16.mxu0 %v3804
        %4674 = vmatpush1.bf16.msra.mxu0 %v3803
        %4675 = vmatprep.subr.bf16.mxu0 %v3800
        %4676 = vmatpush1.bf16.msra.mxu0 %v3799
        %4677 = vmatprep.subr.bf16.mxu0 %v3796
        %4678 = vmatpush1.bf16.msra.mxu0 %v3795
        %4679 = vmatprep.subr.bf16.mxu0 %v3792
        %4680 = vmatpush1.bf16.msra.mxu0 %v3791
        %4681 = vmatprep.subr.bf16.mxu0 %v3788
        %4682 = vmatpush1.bf16.msra.mxu0 %v3787
        %4683 = vmatprep.subr.bf16.mxu0 %v3784
        %4684 = vmatpush1.bf16.msra.mxu0 %v3783
        %4685 = vmatprep.subr.bf16.mxu0 %v3844
        %4686 = vmatpush2.bf16.msra.mxu0 %v3843
        %4687 = vmatprep.subr.bf16.mxu0 %v3840
        %4688 = vmatpush2.bf16.msra.mxu0 %v3839
        %4689 = vmatprep.subr.bf16.mxu0 %v3836
        %4690 = vmatpush2.bf16.msra.mxu0 %v3835
        %4691 = vmatprep.subr.bf16.mxu0 %v3832
        %4692 = vmatpush2.bf16.msra.mxu0 %v3831
        %4693 = vmatprep.subr.bf16.mxu0 %v3828
        %4694 = vmatpush2.bf16.msra.mxu0 %v3827
        %4695 = vmatprep.subr.bf16.mxu0 %v3824
        %4696 = vmatpush2.bf16.msra.mxu0 %v3823
        %4697 = vmatprep.subr.bf16.mxu0 %v3820
        %4698 = vmatpush2.bf16.msra.mxu0 %v3819
        %4699 = vmatprep.subr.bf16.mxu0 %v3816
        %4700 = vmatpush2.bf16.msra.mxu0 %v3815
        %4701 = vmatprep.mubr.bf16.mxu0 %v1326
        %4702 = vmatmul.mubr.bf16.gmra.mxu0 %v1325
        %v4703 = vpop.f32.mrf.mxu0
        %v4704 = vadd.f32 %v4663, %v4703
        %v4705 = vpop.f32.mrf.mxu0
        %v4706 = vadd.f32 %v4665, %v4705
        %v4707 = vpop.f32.mrf.mxu0
        %v4708 = vpop.f32.mrf.mxu0
        %4709 = vdwg.mxu0
        %4710 = vmatprep.subr.bf16.mxu0 %v3876
        %4711 = vmatpush1.bf16.msra.mxu0 %v3875
        %4712 = vmatprep.subr.bf16.mxu0 %v3872
        %4713 = vmatpush1.bf16.msra.mxu0 %v3871
        %4714 = vmatprep.subr.bf16.mxu0 %v3868
        %4715 = vmatpush1.bf16.msra.mxu0 %v3867
        %4716 = vmatprep.subr.bf16.mxu0 %v3864
        %4717 = vmatpush1.bf16.msra.mxu0 %v3863
        %4718 = vmatprep.subr.bf16.mxu0 %v3860
        %4719 = vmatpush1.bf16.msra.mxu0 %v3859
        %4720 = vmatprep.subr.bf16.mxu0 %v3856
        %4721 = vmatpush1.bf16.msra.mxu0 %v3855
        %4722 = vmatprep.subr.bf16.mxu0 %v3852
        %4723 = vmatpush1.bf16.msra.mxu0 %v3851
        %4724 = vmatprep.subr.bf16.mxu0 %v3848
        %4725 = vmatpush1.bf16.msra.mxu0 %v3847
        %4726 = vmatprep.subr.bf16.mxu0 %v3908
        %4727 = vmatpush2.bf16.msra.mxu0 %v3907
        %4728 = vmatprep.subr.bf16.mxu0 %v3904
        %4729 = vmatpush2.bf16.msra.mxu0 %v3903
        %4730 = vmatprep.subr.bf16.mxu0 %v3900
        %4731 = vmatpush2.bf16.msra.mxu0 %v3899
        %4732 = vmatprep.subr.bf16.mxu0 %v3896
        %4733 = vmatpush2.bf16.msra.mxu0 %v3895
        %4734 = vmatprep.subr.bf16.mxu0 %v3892
        %4735 = vmatpush2.bf16.msra.mxu0 %v3891
        %4736 = vmatprep.subr.bf16.mxu0 %v3888
        %4737 = vmatpush2.bf16.msra.mxu0 %v3887
        %4738 = vmatprep.subr.bf16.mxu0 %v3884
        %4739 = vmatpush2.bf16.msra.mxu0 %v3883
        %4740 = vmatprep.subr.bf16.mxu0 %v3880
        %4741 = vmatpush2.bf16.msra.mxu0 %v3879
        %4742 = vmatprep.mubr.bf16.mxu0 %v1328
        %4743 = vmatmul.mubr.bf16.gmra.mxu0 %v1327
        %v4744 = vpop.f32.mrf.mxu0
        %v4745 = vadd.f32 %v4704, %v4744
        %v4746 = vpop.f32.mrf.mxu0
        %v4747 = vadd.f32 %v4706, %v4746
        %v4748 = vpop.f32.mrf.mxu0
        %v4749 = vpop.f32.mrf.mxu0
        %4750 = vdwg.mxu0
        %4751 = vmatprep.subr.bf16.mxu0 %v3430
        %4752 = vmatpush1.bf16.msra.mxu0 %v3429
        %4753 = vmatprep.subr.bf16.mxu0 %v3426
        %4754 = vmatpush1.bf16.msra.mxu0 %v3425
        %4755 = vmatprep.subr.bf16.mxu0 %v3422
        %4756 = vmatpush1.bf16.msra.mxu0 %v3421
        %4757 = vmatprep.subr.bf16.mxu0 %v3418
        %4758 = vmatpush1.bf16.msra.mxu0 %v3417
        %4759 = vmatprep.subr.bf16.mxu0 %v3414
        %4760 = vmatpush1.bf16.msra.mxu0 %v3413
        %4761 = vmatprep.subr.bf16.mxu0 %v3410
        %4762 = vmatpush1.bf16.msra.mxu0 %v3409
        %4763 = vmatprep.subr.bf16.mxu0 %v3406
        %4764 = vmatpush1.bf16.msra.mxu0 %v3405
        %4765 = vmatprep.subr.bf16.mxu0 %v3402
        %4766 = vmatpush1.bf16.msra.mxu0 %v3401
        %4767 = vmatprep.subr.bf16.mxu0 %v3462
        %4768 = vmatpush2.bf16.msra.mxu0 %v3461
        %4769 = vmatprep.subr.bf16.mxu0 %v3458
        %4770 = vmatpush2.bf16.msra.mxu0 %v3457
        %4771 = vmatprep.subr.bf16.mxu0 %v3454
        %4772 = vmatpush2.bf16.msra.mxu0 %v3453
        %4773 = vmatprep.subr.bf16.mxu0 %v3450
        %4774 = vmatpush2.bf16.msra.mxu0 %v3449
        %4775 = vmatprep.subr.bf16.mxu0 %v3446
        %4776 = vmatpush2.bf16.msra.mxu0 %v3445
        %4777 = vmatprep.subr.bf16.mxu0 %v3442
        %4778 = vmatpush2.bf16.msra.mxu0 %v3441
        %4779 = vmatprep.subr.bf16.mxu0 %v3438
        %4780 = vmatpush2.bf16.msra.mxu0 %v3437
        %4781 = vmatprep.subr.bf16.mxu0 %v3434
        %4782 = vmatpush2.bf16.msra.mxu0 %v3433
        %4783 = vmatprep.mubr.bf16.mxu0 %v1314
        %4784 = vmatmul.mubr.bf16.gmra.mxu0 %v1313
        %v4785 = vpop.f32.mrf.mxu0
        %v4786 = vadd.f32 %v1854, %v4785
        %v4787 = vpop.f32.mrf.mxu0
        %v4788 = vadd.f32 %v1858, %v4787
        %v4789 = vpop.f32.mrf.mxu0
        %v4790 = vpop.f32.mrf.mxu0
        %4791 = vdwg.mxu0
        %4792 = vmatprep.subr.bf16.mxu0 %v3494
        %4793 = vmatpush1.bf16.msra.mxu0 %v3493
        %4794 = vmatprep.subr.bf16.mxu0 %v3490
        %4795 = vmatpush1.bf16.msra.mxu0 %v3489
        %4796 = vmatprep.subr.bf16.mxu0 %v3486
        %4797 = vmatpush1.bf16.msra.mxu0 %v3485
        %4798 = vmatprep.subr.bf16.mxu0 %v3482
        %4799 = vmatpush1.bf16.msra.mxu0 %v3481
        %4800 = vmatprep.subr.bf16.mxu0 %v3478
        %4801 = vmatpush1.bf16.msra.mxu0 %v3477
        %4802 = vmatprep.subr.bf16.mxu0 %v3474
        %4803 = vmatpush1.bf16.msra.mxu0 %v3473
        %4804 = vmatprep.subr.bf16.mxu0 %v3470
        %4805 = vmatpush1.bf16.msra.mxu0 %v3469
        %4806 = vmatprep.subr.bf16.mxu0 %v3466
        %4807 = vmatpush1.bf16.msra.mxu0 %v3465
        %4808 = vmatprep.subr.bf16.mxu0 %v3526
        %4809 = vmatpush2.bf16.msra.mxu0 %v3525
        %4810 = vmatprep.subr.bf16.mxu0 %v3522
        %4811 = vmatpush2.bf16.msra.mxu0 %v3521
        %4812 = vmatprep.subr.bf16.mxu0 %v3518
        %4813 = vmatpush2.bf16.msra.mxu0 %v3517
        %4814 = vmatprep.subr.bf16.mxu0 %v3514
        %4815 = vmatpush2.bf16.msra.mxu0 %v3513
        %4816 = vmatprep.subr.bf16.mxu0 %v3510
        %4817 = vmatpush2.bf16.msra.mxu0 %v3509
        %4818 = vmatprep.subr.bf16.mxu0 %v3506
        %4819 = vmatpush2.bf16.msra.mxu0 %v3505
        %4820 = vmatprep.subr.bf16.mxu0 %v3502
        %4821 = vmatpush2.bf16.msra.mxu0 %v3501
        %4822 = vmatprep.subr.bf16.mxu0 %v3498
        %4823 = vmatpush2.bf16.msra.mxu0 %v3497
        %4824 = vmatprep.mubr.bf16.mxu0 %v1316
        %4825 = vmatmul.mubr.bf16.gmra.mxu0 %v1315
        %v4826 = vpop.f32.mrf.mxu0
        %v4827 = vadd.f32 %v4786, %v4826
        %v4828 = vpop.f32.mrf.mxu0
        %v4829 = vadd.f32 %v4788, %v4828
        %v4830 = vpop.f32.mrf.mxu0
        %v4831 = vpop.f32.mrf.mxu0
        %4832 = vdwg.mxu0
        %4833 = vmatprep.subr.bf16.mxu0 %v3558
        %4834 = vmatpush1.bf16.msra.mxu0 %v3557
        %4835 = vmatprep.subr.bf16.mxu0 %v3554
        %4836 = vmatpush1.bf16.msra.mxu0 %v3553
        %4837 = vmatprep.subr.bf16.mxu0 %v3550
        %4838 = vmatpush1.bf16.msra.mxu0 %v3549
        %4839 = vmatprep.subr.bf16.mxu0 %v3546
        %4840 = vmatpush1.bf16.msra.mxu0 %v3545
        %4841 = vmatprep.subr.bf16.mxu0 %v3542
        %4842 = vmatpush1.bf16.msra.mxu0 %v3541
        %4843 = vmatprep.subr.bf16.mxu0 %v3538
        %4844 = vmatpush1.bf16.msra.mxu0 %v3537
        %4845 = vmatprep.subr.bf16.mxu0 %v3534
        %4846 = vmatpush1.bf16.msra.mxu0 %v3533
        %4847 = vmatprep.subr.bf16.mxu0 %v3530
        %4848 = vmatpush1.bf16.msra.mxu0 %v3529
        %4849 = vmatprep.subr.bf16.mxu0 %v3590
        %4850 = vmatpush2.bf16.msra.mxu0 %v3589
        %4851 = vmatprep.subr.bf16.mxu0 %v3586
        %4852 = vmatpush2.bf16.msra.mxu0 %v3585
        %4853 = vmatprep.subr.bf16.mxu0 %v3582
        %4854 = vmatpush2.bf16.msra.mxu0 %v3581
        %4855 = vmatprep.subr.bf16.mxu0 %v3578
        %4856 = vmatpush2.bf16.msra.mxu0 %v3577
        %4857 = vmatprep.subr.bf16.mxu0 %v3574
        %4858 = vmatpush2.bf16.msra.mxu0 %v3573
        %4859 = vmatprep.subr.bf16.mxu0 %v3570
        %4860 = vmatpush2.bf16.msra.mxu0 %v3569
        %4861 = vmatprep.subr.bf16.mxu0 %v3566
        %4862 = vmatpush2.bf16.msra.mxu0 %v3565
        %4863 = vmatprep.subr.bf16.mxu0 %v3562
        %4864 = vmatpush2.bf16.msra.mxu0 %v3561
        %4865 = vmatprep.mubr.bf16.mxu0 %v1318
        %4866 = vmatmul.mubr.bf16.gmra.mxu0 %v1317
        %v4867 = vpop.f32.mrf.mxu0
        %v4868 = vadd.f32 %v4827, %v4867
        %v4869 = vpop.f32.mrf.mxu0
        %v4870 = vadd.f32 %v4829, %v4869
        %v4871 = vpop.f32.mrf.mxu0
        %v4872 = vpop.f32.mrf.mxu0
        %4873 = vdwg.mxu0
        %4874 = vmatprep.subr.bf16.mxu0 %v3622
        %4875 = vmatpush1.bf16.msra.mxu0 %v3621
        %4876 = vmatprep.subr.bf16.mxu0 %v3618
        %4877 = vmatpush1.bf16.msra.mxu0 %v3617
        %4878 = vmatprep.subr.bf16.mxu0 %v3614
        %4879 = vmatpush1.bf16.msra.mxu0 %v3613
        %4880 = vmatprep.subr.bf16.mxu0 %v3610
        %4881 = vmatpush1.bf16.msra.mxu0 %v3609
        %4882 = vmatprep.subr.bf16.mxu0 %v3606
        %4883 = vmatpush1.bf16.msra.mxu0 %v3605
        %4884 = vmatprep.subr.bf16.mxu0 %v3602
        %4885 = vmatpush1.bf16.msra.mxu0 %v3601
        %4886 = vmatprep.subr.bf16.mxu0 %v3598
        %4887 = vmatpush1.bf16.msra.mxu0 %v3597
        %4888 = vmatprep.subr.bf16.mxu0 %v3594
        %4889 = vmatpush1.bf16.msra.mxu0 %v3593
        %4890 = vmatprep.subr.bf16.mxu0 %v3654
        %4891 = vmatpush2.bf16.msra.mxu0 %v3653
        %4892 = vmatprep.subr.bf16.mxu0 %v3650
        %4893 = vmatpush2.bf16.msra.mxu0 %v3649
        %4894 = vmatprep.subr.bf16.mxu0 %v3646
        %4895 = vmatpush2.bf16.msra.mxu0 %v3645
        %4896 = vmatprep.subr.bf16.mxu0 %v3642
        %4897 = vmatpush2.bf16.msra.mxu0 %v3641
        %4898 = vmatprep.subr.bf16.mxu0 %v3638
        %4899 = vmatpush2.bf16.msra.mxu0 %v3637
        %4900 = vmatprep.subr.bf16.mxu0 %v3634
        %4901 = vmatpush2.bf16.msra.mxu0 %v3633
        %4902 = vmatprep.subr.bf16.mxu0 %v3630
        %4903 = vmatpush2.bf16.msra.mxu0 %v3629
        %4904 = vmatprep.subr.bf16.mxu0 %v3626
        %4905 = vmatpush2.bf16.msra.mxu0 %v3625
        %4906 = vmatprep.mubr.bf16.mxu0 %v1320
        %4907 = vmatmul.mubr.bf16.gmra.mxu0 %v1319
        %v4908 = vpop.f32.mrf.mxu0
        %v4909 = vadd.f32 %v4868, %v4908
        %v4910 = vpop.f32.mrf.mxu0
        %v4911 = vadd.f32 %v4870, %v4910
        %v4912 = vpop.f32.mrf.mxu0
        %v4913 = vpop.f32.mrf.mxu0
        %4914 = vdwg.mxu0
        %4915 = vmatprep.subr.bf16.mxu0 %v3686
        %4916 = vmatpush1.bf16.msra.mxu0 %v3685
        %4917 = vmatprep.subr.bf16.mxu0 %v3682
        %4918 = vmatpush1.bf16.msra.mxu0 %v3681
        %4919 = vmatprep.subr.bf16.mxu0 %v3678
        %4920 = vmatpush1.bf16.msra.mxu0 %v3677
        %4921 = vmatprep.subr.bf16.mxu0 %v3674
        %4922 = vmatpush1.bf16.msra.mxu0 %v3673
        %4923 = vmatprep.subr.bf16.mxu0 %v3670
        %4924 = vmatpush1.bf16.msra.mxu0 %v3669
        %4925 = vmatprep.subr.bf16.mxu0 %v3666
        %4926 = vmatpush1.bf16.msra.mxu0 %v3665
        %4927 = vmatprep.subr.bf16.mxu0 %v3662
        %4928 = vmatpush1.bf16.msra.mxu0 %v3661
        %4929 = vmatprep.subr.bf16.mxu0 %v3658
        %4930 = vmatpush1.bf16.msra.mxu0 %v3657
        %4931 = vmatprep.subr.bf16.mxu0 %v3718
        %4932 = vmatpush2.bf16.msra.mxu0 %v3717
        %4933 = vmatprep.subr.bf16.mxu0 %v3714
        %4934 = vmatpush2.bf16.msra.mxu0 %v3713
        %4935 = vmatprep.subr.bf16.mxu0 %v3710
        %4936 = vmatpush2.bf16.msra.mxu0 %v3709
        %4937 = vmatprep.subr.bf16.mxu0 %v3706
        %4938 = vmatpush2.bf16.msra.mxu0 %v3705
        %4939 = vmatprep.subr.bf16.mxu0 %v3702
        %4940 = vmatpush2.bf16.msra.mxu0 %v3701
        %4941 = vmatprep.subr.bf16.mxu0 %v3698
        %4942 = vmatpush2.bf16.msra.mxu0 %v3697
        %4943 = vmatprep.subr.bf16.mxu0 %v3694
        %4944 = vmatpush2.bf16.msra.mxu0 %v3693
        %4945 = vmatprep.subr.bf16.mxu0 %v3690
        %4946 = vmatpush2.bf16.msra.mxu0 %v3689
        %4947 = vmatprep.mubr.bf16.mxu0 %v1322
        %4948 = vmatmul.mubr.bf16.gmra.mxu0 %v1321
        %v4949 = vpop.f32.mrf.mxu0
        %v4950 = vadd.f32 %v4909, %v4949
        %v4951 = vpop.f32.mrf.mxu0
        %v4952 = vadd.f32 %v4911, %v4951
        %v4953 = vpop.f32.mrf.mxu0
        %v4954 = vpop.f32.mrf.mxu0
        %4955 = vdwg.mxu0
        %4956 = vmatprep.subr.bf16.mxu0 %v3750
        %4957 = vmatpush1.bf16.msra.mxu0 %v3749
        %4958 = vmatprep.subr.bf16.mxu0 %v3746
        %4959 = vmatpush1.bf16.msra.mxu0 %v3745
        %4960 = vmatprep.subr.bf16.mxu0 %v3742
        %4961 = vmatpush1.bf16.msra.mxu0 %v3741
        %4962 = vmatprep.subr.bf16.mxu0 %v3738
        %4963 = vmatpush1.bf16.msra.mxu0 %v3737
        %4964 = vmatprep.subr.bf16.mxu0 %v3734
        %4965 = vmatpush1.bf16.msra.mxu0 %v3733
        %4966 = vmatprep.subr.bf16.mxu0 %v3730
        %4967 = vmatpush1.bf16.msra.mxu0 %v3729
        %4968 = vmatprep.subr.bf16.mxu0 %v3726
        %4969 = vmatpush1.bf16.msra.mxu0 %v3725
        %4970 = vmatprep.subr.bf16.mxu0 %v3722
        %4971 = vmatpush1.bf16.msra.mxu0 %v3721
        %4972 = vmatprep.subr.bf16.mxu0 %v3782
        %4973 = vmatpush2.bf16.msra.mxu0 %v3781
        %4974 = vmatprep.subr.bf16.mxu0 %v3778
        %4975 = vmatpush2.bf16.msra.mxu0 %v3777
        %4976 = vmatprep.subr.bf16.mxu0 %v3774
        %4977 = vmatpush2.bf16.msra.mxu0 %v3773
        %4978 = vmatprep.subr.bf16.mxu0 %v3770
        %4979 = vmatpush2.bf16.msra.mxu0 %v3769
        %4980 = vmatprep.subr.bf16.mxu0 %v3766
        %4981 = vmatpush2.bf16.msra.mxu0 %v3765
        %4982 = vmatprep.subr.bf16.mxu0 %v3762
        %4983 = vmatpush2.bf16.msra.mxu0 %v3761
        %4984 = vmatprep.subr.bf16.mxu0 %v3758
        %4985 = vmatpush2.bf16.msra.mxu0 %v3757
        %4986 = vmatprep.subr.bf16.mxu0 %v3754
        %4987 = vmatpush2.bf16.msra.mxu0 %v3753
        %4988 = vmatprep.mubr.bf16.mxu0 %v1324
        %4989 = vmatmul.mubr.bf16.gmra.mxu0 %v1323
        %v4990 = vpop.f32.mrf.mxu0
        %v4991 = vadd.f32 %v4950, %v4990
        %v4992 = vpop.f32.mrf.mxu0
        %v4993 = vadd.f32 %v4952, %v4992
        %v4994 = vpop.f32.mrf.mxu0
        %v4995 = vpop.f32.mrf.mxu0
        %4996 = vdwg.mxu0
        %4997 = vmatprep.subr.bf16.mxu0 %v3814
        %4998 = vmatpush1.bf16.msra.mxu0 %v3813
        %4999 = vmatprep.subr.bf16.mxu0 %v3810
        %5000 = vmatpush1.bf16.msra.mxu0 %v3809
        %5001 = vmatprep.subr.bf16.mxu0 %v3806
        %5002 = vmatpush1.bf16.msra.mxu0 %v3805
        %5003 = vmatprep.subr.bf16.mxu0 %v3802
        %5004 = vmatpush1.bf16.msra.mxu0 %v3801
        %5005 = vmatprep.subr.bf16.mxu0 %v3798
        %5006 = vmatpush1.bf16.msra.mxu0 %v3797
        %5007 = vmatprep.subr.bf16.mxu0 %v3794
        %5008 = vmatpush1.bf16.msra.mxu0 %v3793
        %5009 = vmatprep.subr.bf16.mxu0 %v3790
        %5010 = vmatpush1.bf16.msra.mxu0 %v3789
        %5011 = vmatprep.subr.bf16.mxu0 %v3786
        %5012 = vmatpush1.bf16.msra.mxu0 %v3785
        %5013 = vmatprep.subr.bf16.mxu0 %v3846
        %5014 = vmatpush2.bf16.msra.mxu0 %v3845
        %5015 = vmatprep.subr.bf16.mxu0 %v3842
        %5016 = vmatpush2.bf16.msra.mxu0 %v3841
        %5017 = vmatprep.subr.bf16.mxu0 %v3838
        %5018 = vmatpush2.bf16.msra.mxu0 %v3837
        %5019 = vmatprep.subr.bf16.mxu0 %v3834
        %5020 = vmatpush2.bf16.msra.mxu0 %v3833
        %5021 = vmatprep.subr.bf16.mxu0 %v3830
        %5022 = vmatpush2.bf16.msra.mxu0 %v3829
        %5023 = vmatprep.subr.bf16.mxu0 %v3826
        %5024 = vmatpush2.bf16.msra.mxu0 %v3825
        %5025 = vmatprep.subr.bf16.mxu0 %v3822
        %5026 = vmatpush2.bf16.msra.mxu0 %v3821
        %5027 = vmatprep.subr.bf16.mxu0 %v3818
        %5028 = vmatpush2.bf16.msra.mxu0 %v3817
        %5029 = vmatprep.mubr.bf16.mxu0 %v1326
        %5030 = vmatmul.mubr.bf16.gmra.mxu0 %v1325
        %v5031 = vpop.f32.mrf.mxu0
        %v5032 = vadd.f32 %v4991, %v5031
        %v5033 = vpop.f32.mrf.mxu0
        %v5034 = vadd.f32 %v4993, %v5033
        %v5035 = vpop.f32.mrf.mxu0
        %v5036 = vpop.f32.mrf.mxu0
        %5037 = vdwg.mxu0
        %5038 = vmatprep.subr.bf16.mxu0 %v3878
        %5039 = vmatpush1.bf16.msra.mxu0 %v3877
        %5040 = vmatprep.subr.bf16.mxu0 %v3874
        %5041 = vmatpush1.bf16.msra.mxu0 %v3873
        %5042 = vmatprep.subr.bf16.mxu0 %v3870
        %5043 = vmatpush1.bf16.msra.mxu0 %v3869
        %5044 = vmatprep.subr.bf16.mxu0 %v3866
        %5045 = vmatpush1.bf16.msra.mxu0 %v3865
        %5046 = vmatprep.subr.bf16.mxu0 %v3862
        %5047 = vmatpush1.bf16.msra.mxu0 %v3861
        %5048 = vmatprep.subr.bf16.mxu0 %v3858
        %5049 = vmatpush1.bf16.msra.mxu0 %v3857
        %5050 = vmatprep.subr.bf16.mxu0 %v3854
        %5051 = vmatpush1.bf16.msra.mxu0 %v3853
        %5052 = vmatprep.subr.bf16.mxu0 %v3850
        %5053 = vmatpush1.bf16.msra.mxu0 %v3849
        %5054 = vmatprep.subr.bf16.mxu0 %v3910
        %5055 = vmatpush2.bf16.msra.mxu0 %v3909
        %5056 = vmatprep.subr.bf16.mxu0 %v3906
        %5057 = vmatpush2.bf16.msra.mxu0 %v3905
        %5058 = vmatprep.subr.bf16.mxu0 %v3902
        %5059 = vmatpush2.bf16.msra.mxu0 %v3901
        %5060 = vmatprep.subr.bf16.mxu0 %v3898
        %5061 = vmatpush2.bf16.msra.mxu0 %v3897
        %5062 = vmatprep.subr.bf16.mxu0 %v3894
        %5063 = vmatpush2.bf16.msra.mxu0 %v3893
        %5064 = vmatprep.subr.bf16.mxu0 %v3890
        %5065 = vmatpush2.bf16.msra.mxu0 %v3889
        %5066 = vmatprep.subr.bf16.mxu0 %v3886
        %5067 = vmatpush2.bf16.msra.mxu0 %v3885
        %5068 = vmatprep.subr.bf16.mxu0 %v3882
        %5069 = vmatpush2.bf16.msra.mxu0 %v3881
        %5070 = vmatprep.mubr.bf16.mxu0 %v1328
        %5071 = vmatmul.mubr.bf16.gmra.mxu0 %v1327
        %v5072 = vpop.f32.mrf.mxu0
        %v5073 = vadd.f32 %v5032, %v5072
        %v5074 = vpop.f32.mrf.mxu0
        %v5075 = vadd.f32 %v5034, %v5074
        %v5076 = vpop.f32.mrf.mxu0
        %v5077 = vpop.f32.mrf.mxu0
        %5078 = vdwg.mxu0
        %v5079 = vmax.f32 %v4745, 0.0
        %v5080 = vmax.f32 %v4747, 0.0
        %v5081 = vmax.f32 %v5073, 0.0
        %v5082 = vmax.f32 %v5075, 0.0
        // Predicated region
        $region77: #{gen_forward_pallas.1} parent=47 // pred_check
          _
        $region78: #{gen_forward_pallas.1} parent=47 // pred_check_branch
          %5084 = sbr.rel (%p424) target = $region80
        $region79: #{gen_forward_pallas.1} parent=47 // pred_region
          %5085 = vst [vmem:[#allocation3] sm:$0xff] %v5079
          %5086 = vst [vmem:[#allocation3 + $0x8] sm:$0xff] %v5080
          %5087 = vst [vmem:[#allocation3 + $0x10] sm:$0xff] %v5081
          %5088 = vst [vmem:[#allocation3 + $0x18] sm:$0xff] %v5082
        $region80: #{gen_forward_pallas.1} parent=47 // pred_fallthru
          _
        %p5089 = scmp.eq.s32.totalorder %s31, 1
        %p5090 = pnand %p422, %p5089
        %p5091 = pneg %p5090
        // Predicated region
        $region81: #{gen_forward_pallas.1} parent=47 // pred_check
          _
        $region82: #{gen_forward_pallas.1} parent=47 // pred_check_branch
          %5093 = sbr.rel (%p5090) target = $region84
        $region83: #{gen_forward_pallas.1} parent=47 // pred_region
          %5094 = vst [vmem:[#allocation3 + $0x20] sm:$0xff] %v5079
          %5095 = vst [vmem:[#allocation3 + $0x28] sm:$0xff] %v5080
          %5096 = vst [vmem:[#allocation3 + $0x30] sm:$0xff] %v5081
          %5097 = vst [vmem:[#allocation3 + $0x38] sm:$0xff] %v5082
        $region84: #{gen_forward_pallas.1} parent=47 // pred_fallthru
          _
        %p5098 = scmp.eq.s32.totalorder %s31, 2
        %p5099 = pnand %p422, %p5098
        %p5100 = pneg %p5099
        // Predicated region
        $region85: #{gen_forward_pallas.1} parent=47 // pred_check
          _
        $region86: #{gen_forward_pallas.1} parent=47 // pred_check_branch
          %5102 = sbr.rel (%p5099) target = $region88
        $region87: #{gen_forward_pallas.1} parent=47 // pred_region
          %5103 = vst [vmem:[#allocation3 + $0x40] sm:$0xff] %v5079
          %5104 = vst [vmem:[#allocation3 + $0x48] sm:$0xff] %v5080
          %5105 = vst [vmem:[#allocation3 + $0x50] sm:$0xff] %v5081
          %5106 = vst [vmem:[#allocation3 + $0x58] sm:$0xff] %v5082
        $region88: #{gen_forward_pallas.1} parent=47 // pred_fallthru
          _
        %p5107 = scmp.eq.s32.totalorder %s31, 3
        %p5108 = pnand %p422, %p5107
        %p5109 = pneg %p5108
        // Predicated region
        $region89: #{gen_forward_pallas.1} parent=47 // pred_check
          _
        $region90: #{gen_forward_pallas.1} parent=47 // pred_check_branch
          %5111 = sbr.rel (%p5108) target = $region92
        $region91: #{gen_forward_pallas.1} parent=47 // pred_region
          %5112 = vst [vmem:[#allocation3 + $0x60] sm:$0xff] %v5079
          %5113 = vst [vmem:[#allocation3 + $0x68] sm:$0xff] %v5080
          %5114 = vst [vmem:[#allocation3 + $0x70] sm:$0xff] %v5081
          %5115 = vst [vmem:[#allocation3 + $0x78] sm:$0xff] %v5082
        $region92: #{gen_forward_pallas.1} parent=47 // pred_fallthru
          _
        %p5116 = scmp.eq.s32.totalorder %s30, 1
        %p5117 = pnand %p5116, %p423
        %p5118 = pneg %p5117
        // Predicated region
        $region93: #{gen_forward_pallas.1} parent=47 // pred_check
          _
        $region94: #{gen_forward_pallas.1} parent=47 // pred_check_branch
          %5120 = sbr.rel (%p5117) target = $region96
        $region95: #{gen_forward_pallas.1} parent=47 // pred_region
          %5121 = vst [vmem:[#allocation2] sm:$0xff] %v5079
          %5122 = vst [vmem:[#allocation2 + $0x8] sm:$0xff] %v5080
          %5123 = vst [vmem:[#allocation2 + $0x10] sm:$0xff] %v5081
          %5124 = vst [vmem:[#allocation2 + $0x18] sm:$0xff] %v5082
        $region96: #{gen_forward_pallas.1} parent=47 // pred_fallthru
          _
        %p5125 = pnand %p5116, %p5089
        %p5126 = pneg %p5125
        // Predicated region
        $region97: #{gen_forward_pallas.1} parent=47 // pred_check
          _
        $region98: #{gen_forward_pallas.1} parent=47 // pred_check_branch
          %5128 = sbr.rel (%p5125) target = $region100
        $region99: #{gen_forward_pallas.1} parent=47 // pred_region
          %5129 = vst [vmem:[#allocation2 + $0x20] sm:$0xff] %v5079
          %5130 = vst [vmem:[#allocation2 + $0x28] sm:$0xff] %v5080
          %5131 = vst [vmem:[#allocation2 + $0x30] sm:$0xff] %v5081
          %5132 = vst [vmem:[#allocation2 + $0x38] sm:$0xff] %v5082
        $region100: #{gen_forward_pallas.1} parent=47 // pred_fallthru
          _
        %p5133 = pnand %p5116, %p5098
        %p5134 = pneg %p5133
        // Predicated region
        $region101: #{gen_forward_pallas.1} parent=47 // pred_check
          _
        $region102: #{gen_forward_pallas.1} parent=47 // pred_check_branch
          %5136 = sbr.rel (%p5133) target = $region104
        $region103: #{gen_forward_pallas.1} parent=47 // pred_region
          %5137 = vst [vmem:[#allocation2 + $0x40] sm:$0xff] %v5079
          %5138 = vst [vmem:[#allocation2 + $0x48] sm:$0xff] %v5080
          %5139 = vst [vmem:[#allocation2 + $0x50] sm:$0xff] %v5081
          %5140 = vst [vmem:[#allocation2 + $0x58] sm:$0xff] %v5082
        $region104: #{gen_forward_pallas.1} parent=47 // pred_fallthru
          _
        %p5141 = pnand %p5116, %p5107
        %p5142 = pneg %p5141
        // Predicated region
        $region105: #{gen_forward_pallas.1} parent=47 // pred_check
          _
        $region106: #{gen_forward_pallas.1} parent=47 // pred_check_branch
          %5144 = sbr.rel (%p5141) target = $region108
        $region107: #{gen_forward_pallas.1} parent=47 // pred_region
          %5145 = vst [vmem:[#allocation2 + $0x60] sm:$0xff] %v5079
          %5146 = vst [vmem:[#allocation2 + $0x68] sm:$0xff] %v5080
          %5147 = vst [vmem:[#allocation2 + $0x70] sm:$0xff] %v5081
          %5148 = vst [vmem:[#allocation2 + $0x78] sm:$0xff] %v5082
          %v5149 = vld [vmem:[#allocation2] sm:$0xff]
          %v5150 = vld [vmem:[#allocation2 + $0x8] sm:$0xff]
          %v5151 = vld [vmem:[#allocation2 + $0x10] sm:$0xff]
          %v5152 = vld [vmem:[#allocation2 + $0x18] sm:$0xff]
          %v5153 = vld [vmem:[#allocation2 + $0x20] sm:$0xff]
          %v5154 = vld [vmem:[#allocation2 + $0x28] sm:$0xff]
          %v5155 = vld [vmem:[#allocation2 + $0x30] sm:$0xff]
          %v5156 = vld [vmem:[#allocation2 + $0x38] sm:$0xff]
          %v5157 = vld [vmem:[#allocation2 + $0x40] sm:$0xff]
          %v5158 = vld [vmem:[#allocation2 + $0x48] sm:$0xff]
          %v5159 = vld [vmem:[#allocation2 + $0x50] sm:$0xff]
          %v5160 = vld [vmem:[#allocation2 + $0x58] sm:$0xff]
          %v5161 = vld [vmem:[#allocation2 + $0x60] sm:$0xff]
          %v5162 = vld [vmem:[#allocation2 + $0x68] sm:$0xff]
          %v5163 = vld [vmem:[#allocation2 + $0x70] sm:$0xff]
          %v5164 = vld [vmem:[#allocation2 + $0x78] sm:$0xff]
          %v5165 = vpack.c.bf16 %v5149, %v5149
          %v5166 = vpack.c.bf16 %v5150, %v5150
          %v5167 = vpack.c.bf16 %v5151, %v5151
          %v5168 = vpack.c.bf16 %v5152, %v5152
          %v5169 = vpack.c.bf16 %v5153, %v5153
          %v5170 = vpack.c.bf16 %v5154, %v5154
          %v5171 = vpack.c.bf16 %v5155, %v5155
          %v5172 = vpack.c.bf16 %v5156, %v5156
          %v5173 = vpack.c.bf16 %v5157, %v5157
          %v5174 = vpack.c.bf16 %v5158, %v5158
          %v5175 = vpack.c.bf16 %v5159, %v5159
          %v5176 = vpack.c.bf16 %v5160, %v5160
          %v5177 = vpack.c.bf16 %v5161, %v5161
          %v5178 = vpack.c.bf16 %v5162, %v5162
          %v5179 = vpack.c.bf16 %v5163, %v5163
          %v5180 = vpack.c.bf16 %v5164, %v5164
          %v5181 = vld [vmem:[%s5] sm:$0xf]
          %v5182 = vld [vmem:[%s5 + $0x4] sm:$0xf]
          %v5183 = vld [vmem:[%s5 + $0x8] sm:$0xf]
          %v5184 = vld [vmem:[%s5 + $0xc] sm:$0xf]
          %v5185 = vld [vmem:[%s5 + $0x10] sm:$0xf]
          %v5186 = vld [vmem:[%s5 + $0x14] sm:$0xf]
          %v5187 = vld [vmem:[%s5 + $0x18] sm:$0xf]
          %v5188 = vld [vmem:[%s5 + $0x1c] sm:$0xf]
          %v5189 = vld [vmem:[%s5 + $0x20] sm:$0xf]
          %v5190 = vld [vmem:[%s5 + $0x24] sm:$0xf]
          %v5191 = vld [vmem:[%s5 + $0x28] sm:$0xf]
          %v5192 = vld [vmem:[%s5 + $0x2c] sm:$0xf]
          %v5193 = vld [vmem:[%s5 + $0x30] sm:$0xf]
          %v5194 = vld [vmem:[%s5 + $0x34] sm:$0xf]
          %v5195 = vld [vmem:[%s5 + $0x38] sm:$0xf]
          %v5196 = vld [vmem:[%s5 + $0x3c] sm:$0xf]
          %v5197 = vld [vmem:[%s5 + $0x40] sm:$0xf]
          %v5198 = vld [vmem:[%s5 + $0x44] sm:$0xf]
          %v5199 = vld [vmem:[%s5 + $0x48] sm:$0xf]
          %v5200 = vld [vmem:[%s5 + $0x4c] sm:$0xf]
          %v5201 = vld [vmem:[%s5 + $0x50] sm:$0xf]
          %v5202 = vld [vmem:[%s5 + $0x54] sm:$0xf]
          %v5203 = vld [vmem:[%s5 + $0x58] sm:$0xf]
          %v5204 = vld [vmem:[%s5 + $0x5c] sm:$0xf]
          %v5205 = vld [vmem:[%s5 + $0x60] sm:$0xf]
          %v5206 = vld [vmem:[%s5 + $0x64] sm:$0xf]
          %v5207 = vld [vmem:[%s5 + $0x68] sm:$0xf]
          %v5208 = vld [vmem:[%s5 + $0x6c] sm:$0xf]
          %v5209 = vld [vmem:[%s5 + $0x70] sm:$0xf]
          %v5210 = vld [vmem:[%s5 + $0x74] sm:$0xf]
          %v5211 = vld [vmem:[%s5 + $0x78] sm:$0xf]
          %v5212 = vld [vmem:[%s5 + $0x7c] sm:$0xf]
          %v5213 = vld [vmem:[%s5 + $0x80] sm:$0xf]
          %v5214 = vld [vmem:[%s5 + $0x84] sm:$0xf]
          %v5215 = vld [vmem:[%s5 + $0x88] sm:$0xf]
          %v5216 = vld [vmem:[%s5 + $0x8c] sm:$0xf]
          %v5217 = vld [vmem:[%s5 + $0x90] sm:$0xf]
          %v5218 = vld [vmem:[%s5 + $0x94] sm:$0xf]
          %v5219 = vld [vmem:[%s5 + $0x98] sm:$0xf]
          %v5220 = vld [vmem:[%s5 + $0x9c] sm:$0xf]
          %v5221 = vld [vmem:[%s5 + $0xa0] sm:$0xf]
          %v5222 = vld [vmem:[%s5 + $0xa4] sm:$0xf]
          %v5223 = vld [vmem:[%s5 + $0xa8] sm:$0xf]
          %v5224 = vld [vmem:[%s5 + $0xac] sm:$0xf]
          %v5225 = vld [vmem:[%s5 + $0xb0] sm:$0xf]
          %v5226 = vld [vmem:[%s5 + $0xb4] sm:$0xf]
          %v5227 = vld [vmem:[%s5 + $0xb8] sm:$0xf]
          %v5228 = vld [vmem:[%s5 + $0xbc] sm:$0xf]
          %v5229 = vld [vmem:[%s5 + $0xc0] sm:$0xf]
          %v5230 = vld [vmem:[%s5 + $0xc4] sm:$0xf]
          %v5231 = vld [vmem:[%s5 + $0xc8] sm:$0xf]
          %v5232 = vld [vmem:[%s5 + $0xcc] sm:$0xf]
          %v5233 = vld [vmem:[%s5 + $0xd0] sm:$0xf]
          %v5234 = vld [vmem:[%s5 + $0xd4] sm:$0xf]
          %v5235 = vld [vmem:[%s5 + $0xd8] sm:$0xf]
          %v5236 = vld [vmem:[%s5 + $0xdc] sm:$0xf]
          %v5237 = vld [vmem:[%s5 + $0xe0] sm:$0xf]
          %v5238 = vld [vmem:[%s5 + $0xe4] sm:$0xf]
          %v5239 = vld [vmem:[%s5 + $0xe8] sm:$0xf]
          %v5240 = vld [vmem:[%s5 + $0xec] sm:$0xf]
          %v5241 = vld [vmem:[%s5 + $0xf0] sm:$0xf]
          %v5242 = vld [vmem:[%s5 + $0xf4] sm:$0xf]
          %v5243 = vld [vmem:[%s5 + $0xf8] sm:$0xf]
          %v5244 = vld [vmem:[%s5 + $0xfc] sm:$0xf]
          %v5245 = vld [vmem:[%s5 + $0x100] sm:$0xf]
          %v5246 = vld [vmem:[%s5 + $0x104] sm:$0xf]
          %v5247 = vld [vmem:[%s5 + $0x108] sm:$0xf]
          %v5248 = vld [vmem:[%s5 + $0x10c] sm:$0xf]
          %v5249 = vld [vmem:[%s5 + $0x110] sm:$0xf]
          %v5250 = vld [vmem:[%s5 + $0x114] sm:$0xf]
          %v5251 = vld [vmem:[%s5 + $0x118] sm:$0xf]
          %v5252 = vld [vmem:[%s5 + $0x11c] sm:$0xf]
          %v5253 = vld [vmem:[%s5 + $0x120] sm:$0xf]
          %v5254 = vld [vmem:[%s5 + $0x124] sm:$0xf]
          %v5255 = vld [vmem:[%s5 + $0x128] sm:$0xf]
          %v5256 = vld [vmem:[%s5 + $0x12c] sm:$0xf]
          %v5257 = vld [vmem:[%s5 + $0x130] sm:$0xf]
          %v5258 = vld [vmem:[%s5 + $0x134] sm:$0xf]
          %v5259 = vld [vmem:[%s5 + $0x138] sm:$0xf]
          %v5260 = vld [vmem:[%s5 + $0x13c] sm:$0xf]
          %v5261 = vld [vmem:[%s5 + $0x140] sm:$0xf]
          %v5262 = vld [vmem:[%s5 + $0x144] sm:$0xf]
          %v5263 = vld [vmem:[%s5 + $0x148] sm:$0xf]
          %v5264 = vld [vmem:[%s5 + $0x14c] sm:$0xf]
          %v5265 = vld [vmem:[%s5 + $0x150] sm:$0xf]
          %v5266 = vld [vmem:[%s5 + $0x154] sm:$0xf]
          %v5267 = vld [vmem:[%s5 + $0x158] sm:$0xf]
          %v5268 = vld [vmem:[%s5 + $0x15c] sm:$0xf]
          %v5269 = vld [vmem:[%s5 + $0x160] sm:$0xf]
          %v5270 = vld [vmem:[%s5 + $0x164] sm:$0xf]
          %v5271 = vld [vmem:[%s5 + $0x168] sm:$0xf]
          %v5272 = vld [vmem:[%s5 + $0x16c] sm:$0xf]
          %v5273 = vld [vmem:[%s5 + $0x170] sm:$0xf]
          %v5274 = vld [vmem:[%s5 + $0x174] sm:$0xf]
          %v5275 = vld [vmem:[%s5 + $0x178] sm:$0xf]
          %v5276 = vld [vmem:[%s5 + $0x17c] sm:$0xf]
          %v5277 = vld [vmem:[%s5 + $0x180] sm:$0xf]
          %v5278 = vld [vmem:[%s5 + $0x184] sm:$0xf]
          %v5279 = vld [vmem:[%s5 + $0x188] sm:$0xf]
          %v5280 = vld [vmem:[%s5 + $0x18c] sm:$0xf]
          %v5281 = vld [vmem:[%s5 + $0x190] sm:$0xf]
          %v5282 = vld [vmem:[%s5 + $0x194] sm:$0xf]
          %v5283 = vld [vmem:[%s5 + $0x198] sm:$0xf]
          %v5284 = vld [vmem:[%s5 + $0x19c] sm:$0xf]
          %v5285 = vld [vmem:[%s5 + $0x1a0] sm:$0xf]
          %v5286 = vld [vmem:[%s5 + $0x1a4] sm:$0xf]
          %v5287 = vld [vmem:[%s5 + $0x1a8] sm:$0xf]
          %v5288 = vld [vmem:[%s5 + $0x1ac] sm:$0xf]
          %v5289 = vld [vmem:[%s5 + $0x1b0] sm:$0xf]
          %v5290 = vld [vmem:[%s5 + $0x1b4] sm:$0xf]
          %v5291 = vld [vmem:[%s5 + $0x1b8] sm:$0xf]
          %v5292 = vld [vmem:[%s5 + $0x1bc] sm:$0xf]
          %v5293 = vld [vmem:[%s5 + $0x1c0] sm:$0xf]
          %v5294 = vld [vmem:[%s5 + $0x1c4] sm:$0xf]
          %v5295 = vld [vmem:[%s5 + $0x1c8] sm:$0xf]
          %v5296 = vld [vmem:[%s5 + $0x1cc] sm:$0xf]
          %v5297 = vld [vmem:[%s5 + $0x1d0] sm:$0xf]
          %v5298 = vld [vmem:[%s5 + $0x1d4] sm:$0xf]
          %v5299 = vld [vmem:[%s5 + $0x1d8] sm:$0xf]
          %v5300 = vld [vmem:[%s5 + $0x1dc] sm:$0xf]
          %v5301 = vld [vmem:[%s5 + $0x1e0] sm:$0xf]
          %v5302 = vld [vmem:[%s5 + $0x1e4] sm:$0xf]
          %v5303 = vld [vmem:[%s5 + $0x1e8] sm:$0xf]
          %v5304 = vld [vmem:[%s5 + $0x1ec] sm:$0xf]
          %v5305 = vld [vmem:[%s5 + $0x1f0] sm:$0xf]
          %v5306 = vld [vmem:[%s5 + $0x1f4] sm:$0xf]
          %v5307 = vld [vmem:[%s5 + $0x1f8] sm:$0xf]
          %v5308 = vld [vmem:[%s5 + $0x1fc] sm:$0xf]
          %v5309 = vld [vmem:[%s5 + $0x200] sm:$0xf]
          %v5310 = vld [vmem:[%s5 + $0x204] sm:$0xf]
          %v5311 = vld [vmem:[%s5 + $0x208] sm:$0xf]
          %v5312 = vld [vmem:[%s5 + $0x20c] sm:$0xf]
          %v5313 = vld [vmem:[%s5 + $0x210] sm:$0xf]
          %v5314 = vld [vmem:[%s5 + $0x214] sm:$0xf]
          %v5315 = vld [vmem:[%s5 + $0x218] sm:$0xf]
          %v5316 = vld [vmem:[%s5 + $0x21c] sm:$0xf]
          %v5317 = vld [vmem:[%s5 + $0x220] sm:$0xf]
          %v5318 = vld [vmem:[%s5 + $0x224] sm:$0xf]
          %v5319 = vld [vmem:[%s5 + $0x228] sm:$0xf]
          %v5320 = vld [vmem:[%s5 + $0x22c] sm:$0xf]
          %v5321 = vld [vmem:[%s5 + $0x230] sm:$0xf]
          %v5322 = vld [vmem:[%s5 + $0x234] sm:$0xf]
          %v5323 = vld [vmem:[%s5 + $0x238] sm:$0xf]
          %v5324 = vld [vmem:[%s5 + $0x23c] sm:$0xf]
          %v5325 = vld [vmem:[%s5 + $0x240] sm:$0xf]
          %v5326 = vld [vmem:[%s5 + $0x244] sm:$0xf]
          %v5327 = vld [vmem:[%s5 + $0x248] sm:$0xf]
          %v5328 = vld [vmem:[%s5 + $0x24c] sm:$0xf]
          %v5329 = vld [vmem:[%s5 + $0x250] sm:$0xf]
          %v5330 = vld [vmem:[%s5 + $0x254] sm:$0xf]
          %v5331 = vld [vmem:[%s5 + $0x258] sm:$0xf]
          %v5332 = vld [vmem:[%s5 + $0x25c] sm:$0xf]
          %v5333 = vld [vmem:[%s5 + $0x260] sm:$0xf]
          %v5334 = vld [vmem:[%s5 + $0x264] sm:$0xf]
          %v5335 = vld [vmem:[%s5 + $0x268] sm:$0xf]
          %v5336 = vld [vmem:[%s5 + $0x26c] sm:$0xf]
          %v5337 = vld [vmem:[%s5 + $0x270] sm:$0xf]
          %v5338 = vld [vmem:[%s5 + $0x274] sm:$0xf]
          %v5339 = vld [vmem:[%s5 + $0x278] sm:$0xf]
          %v5340 = vld [vmem:[%s5 + $0x27c] sm:$0xf]
          %v5341 = vld [vmem:[%s5 + $0x280] sm:$0xf]
          %v5342 = vld [vmem:[%s5 + $0x284] sm:$0xf]
          %v5343 = vld [vmem:[%s5 + $0x288] sm:$0xf]
          %v5344 = vld [vmem:[%s5 + $0x28c] sm:$0xf]
          %v5345 = vld [vmem:[%s5 + $0x290] sm:$0xf]
          %v5346 = vld [vmem:[%s5 + $0x294] sm:$0xf]
          %v5347 = vld [vmem:[%s5 + $0x298] sm:$0xf]
          %v5348 = vld [vmem:[%s5 + $0x29c] sm:$0xf]
          %v5349 = vld [vmem:[%s5 + $0x2a0] sm:$0xf]
          %v5350 = vld [vmem:[%s5 + $0x2a4] sm:$0xf]
          %v5351 = vld [vmem:[%s5 + $0x2a8] sm:$0xf]
          %v5352 = vld [vmem:[%s5 + $0x2ac] sm:$0xf]
          %v5353 = vld [vmem:[%s5 + $0x2b0] sm:$0xf]
          %v5354 = vld [vmem:[%s5 + $0x2b4] sm:$0xf]
          %v5355 = vld [vmem:[%s5 + $0x2b8] sm:$0xf]
          %v5356 = vld [vmem:[%s5 + $0x2bc] sm:$0xf]
          %v5357 = vld [vmem:[%s5 + $0x2c0] sm:$0xf]
          %v5358 = vld [vmem:[%s5 + $0x2c4] sm:$0xf]
          %v5359 = vld [vmem:[%s5 + $0x2c8] sm:$0xf]
          %v5360 = vld [vmem:[%s5 + $0x2cc] sm:$0xf]
          %v5361 = vld [vmem:[%s5 + $0x2d0] sm:$0xf]
          %v5362 = vld [vmem:[%s5 + $0x2d4] sm:$0xf]
          %v5363 = vld [vmem:[%s5 + $0x2d8] sm:$0xf]
          %v5364 = vld [vmem:[%s5 + $0x2dc] sm:$0xf]
          %v5365 = vld [vmem:[%s5 + $0x2e0] sm:$0xf]
          %v5366 = vld [vmem:[%s5 + $0x2e4] sm:$0xf]
          %v5367 = vld [vmem:[%s5 + $0x2e8] sm:$0xf]
          %v5368 = vld [vmem:[%s5 + $0x2ec] sm:$0xf]
          %v5369 = vld [vmem:[%s5 + $0x2f0] sm:$0xf]
          %v5370 = vld [vmem:[%s5 + $0x2f4] sm:$0xf]
          %v5371 = vld [vmem:[%s5 + $0x2f8] sm:$0xf]
          %v5372 = vld [vmem:[%s5 + $0x2fc] sm:$0xf]
          %v5373 = vld [vmem:[%s5 + $0x300] sm:$0xf]
          %v5374 = vld [vmem:[%s5 + $0x304] sm:$0xf]
          %v5375 = vld [vmem:[%s5 + $0x308] sm:$0xf]
          %v5376 = vld [vmem:[%s5 + $0x30c] sm:$0xf]
          %v5377 = vld [vmem:[%s5 + $0x310] sm:$0xf]
          %v5378 = vld [vmem:[%s5 + $0x314] sm:$0xf]
          %v5379 = vld [vmem:[%s5 + $0x318] sm:$0xf]
          %v5380 = vld [vmem:[%s5 + $0x31c] sm:$0xf]
          %v5381 = vld [vmem:[%s5 + $0x320] sm:$0xf]
          %v5382 = vld [vmem:[%s5 + $0x324] sm:$0xf]
          %v5383 = vld [vmem:[%s5 + $0x328] sm:$0xf]
          %v5384 = vld [vmem:[%s5 + $0x32c] sm:$0xf]
          %v5385 = vld [vmem:[%s5 + $0x330] sm:$0xf]
          %v5386 = vld [vmem:[%s5 + $0x334] sm:$0xf]
          %v5387 = vld [vmem:[%s5 + $0x338] sm:$0xf]
          %v5388 = vld [vmem:[%s5 + $0x33c] sm:$0xf]
          %v5389 = vld [vmem:[%s5 + $0x340] sm:$0xf]
          %v5390 = vld [vmem:[%s5 + $0x344] sm:$0xf]
          %v5391 = vld [vmem:[%s5 + $0x348] sm:$0xf]
          %v5392 = vld [vmem:[%s5 + $0x34c] sm:$0xf]
          %v5393 = vld [vmem:[%s5 + $0x350] sm:$0xf]
          %v5394 = vld [vmem:[%s5 + $0x354] sm:$0xf]
          %v5395 = vld [vmem:[%s5 + $0x358] sm:$0xf]
          %v5396 = vld [vmem:[%s5 + $0x35c] sm:$0xf]
          %v5397 = vld [vmem:[%s5 + $0x360] sm:$0xf]
          %v5398 = vld [vmem:[%s5 + $0x364] sm:$0xf]
          %v5399 = vld [vmem:[%s5 + $0x368] sm:$0xf]
          %v5400 = vld [vmem:[%s5 + $0x36c] sm:$0xf]
          %v5401 = vld [vmem:[%s5 + $0x370] sm:$0xf]
          %v5402 = vld [vmem:[%s5 + $0x374] sm:$0xf]
          %v5403 = vld [vmem:[%s5 + $0x378] sm:$0xf]
          %v5404 = vld [vmem:[%s5 + $0x37c] sm:$0xf]
          %v5405 = vld [vmem:[%s5 + $0x380] sm:$0xf]
          %v5406 = vld [vmem:[%s5 + $0x384] sm:$0xf]
          %v5407 = vld [vmem:[%s5 + $0x388] sm:$0xf]
          %v5408 = vld [vmem:[%s5 + $0x38c] sm:$0xf]
          %v5409 = vld [vmem:[%s5 + $0x390] sm:$0xf]
          %v5410 = vld [vmem:[%s5 + $0x394] sm:$0xf]
          %v5411 = vld [vmem:[%s5 + $0x398] sm:$0xf]
          %v5412 = vld [vmem:[%s5 + $0x39c] sm:$0xf]
          %v5413 = vld [vmem:[%s5 + $0x3a0] sm:$0xf]
          %v5414 = vld [vmem:[%s5 + $0x3a4] sm:$0xf]
          %v5415 = vld [vmem:[%s5 + $0x3a8] sm:$0xf]
          %v5416 = vld [vmem:[%s5 + $0x3ac] sm:$0xf]
          %v5417 = vld [vmem:[%s5 + $0x3b0] sm:$0xf]
          %v5418 = vld [vmem:[%s5 + $0x3b4] sm:$0xf]
          %v5419 = vld [vmem:[%s5 + $0x3b8] sm:$0xf]
          %v5420 = vld [vmem:[%s5 + $0x3bc] sm:$0xf]
          %v5421 = vld [vmem:[%s5 + $0x3c0] sm:$0xf]
          %v5422 = vld [vmem:[%s5 + $0x3c4] sm:$0xf]
          %v5423 = vld [vmem:[%s5 + $0x3c8] sm:$0xf]
          %v5424 = vld [vmem:[%s5 + $0x3cc] sm:$0xf]
          %v5425 = vld [vmem:[%s5 + $0x3d0] sm:$0xf]
          %v5426 = vld [vmem:[%s5 + $0x3d4] sm:$0xf]
          %v5427 = vld [vmem:[%s5 + $0x3d8] sm:$0xf]
          %v5428 = vld [vmem:[%s5 + $0x3dc] sm:$0xf]
          %v5429 = vld [vmem:[%s5 + $0x3e0] sm:$0xf]
          %v5430 = vld [vmem:[%s5 + $0x3e4] sm:$0xf]
          %v5431 = vld [vmem:[%s5 + $0x3e8] sm:$0xf]
          %v5432 = vld [vmem:[%s5 + $0x3ec] sm:$0xf]
          %v5433 = vld [vmem:[%s5 + $0x3f0] sm:$0xf]
          %v5434 = vld [vmem:[%s5 + $0x3f4] sm:$0xf]
          %v5435 = vld [vmem:[%s5 + $0x3f8] sm:$0xf]
          %v5436 = vld [vmem:[%s5 + $0x3fc] sm:$0xf]
          %v5437 = vld [vmem:[#allocation12] sm:$0x1]
          %v5439 = vlaneseq
          %v5440 = vshrl.u32 %v5439, 7
          %v5441 = vsub.s32 0, %v5440
          %v5442 = vrot.slane %v5437, %v5441
          %v5700 = vunpack.c.l.b16 %v5181
          %v5701 = vunpack.c.l.b16 %v5182
          %v5702 = vunpack.c.l.b16 %v5183
          %v5703 = vunpack.c.l.b16 %v5184
          %v5704 = vunpack.c.l.b16 %v5185
          %v5705 = vunpack.c.l.b16 %v5186
          %v5706 = vunpack.c.l.b16 %v5187
          %v5707 = vunpack.c.l.b16 %v5188
          %v5708 = vunpack.c.l.b16 %v5189
          %v5709 = vunpack.c.l.b16 %v5190
          %v5710 = vunpack.c.l.b16 %v5191
          %v5711 = vunpack.c.l.b16 %v5192
          %v5712 = vunpack.c.l.b16 %v5193
          %v5713 = vunpack.c.l.b16 %v5194
          %v5714 = vunpack.c.l.b16 %v5195
          %v5715 = vunpack.c.l.b16 %v5196
          %v5716 = vunpack.c.l.b16 %v5197
          %v5717 = vunpack.c.l.b16 %v5198
          %v5718 = vunpack.c.l.b16 %v5199
          %v5719 = vunpack.c.l.b16 %v5200
          %v5720 = vunpack.c.l.b16 %v5201
          %v5721 = vunpack.c.l.b16 %v5202
          %v5722 = vunpack.c.l.b16 %v5203
          %v5723 = vunpack.c.l.b16 %v5204
          %v5724 = vunpack.c.l.b16 %v5205
          %v5725 = vunpack.c.l.b16 %v5206
          %v5726 = vunpack.c.l.b16 %v5207
          %v5727 = vunpack.c.l.b16 %v5208
          %v5728 = vunpack.c.l.b16 %v5209
          %v5729 = vunpack.c.l.b16 %v5210
          %v5730 = vunpack.c.l.b16 %v5211
          %v5731 = vunpack.c.l.b16 %v5212
          %v5732 = vunpack.c.l.b16 %v5213
          %v5733 = vunpack.c.l.b16 %v5214
          %v5734 = vunpack.c.l.b16 %v5215
          %v5735 = vunpack.c.l.b16 %v5216
          %v5736 = vunpack.c.l.b16 %v5217
          %v5737 = vunpack.c.l.b16 %v5218
          %v5738 = vunpack.c.l.b16 %v5219
          %v5739 = vunpack.c.l.b16 %v5220
          %v5740 = vunpack.c.l.b16 %v5221
          %v5741 = vunpack.c.l.b16 %v5222
          %v5742 = vunpack.c.l.b16 %v5223
          %v5743 = vunpack.c.l.b16 %v5224
          %v5744 = vunpack.c.l.b16 %v5225
          %v5745 = vunpack.c.l.b16 %v5226
          %v5746 = vunpack.c.l.b16 %v5227
          %v5747 = vunpack.c.l.b16 %v5228
          %v5748 = vunpack.c.l.b16 %v5229
          %v5749 = vunpack.c.l.b16 %v5230
          %v5750 = vunpack.c.l.b16 %v5231
          %v5751 = vunpack.c.l.b16 %v5232
          %v5752 = vunpack.c.l.b16 %v5233
          %v5753 = vunpack.c.l.b16 %v5234
          %v5754 = vunpack.c.l.b16 %v5235
          %v5755 = vunpack.c.l.b16 %v5236
          %v5756 = vunpack.c.l.b16 %v5237
          %v5757 = vunpack.c.l.b16 %v5238
          %v5758 = vunpack.c.l.b16 %v5239
          %v5759 = vunpack.c.l.b16 %v5240
          %v5760 = vunpack.c.l.b16 %v5241
          %v5761 = vunpack.c.l.b16 %v5242
          %v5762 = vunpack.c.l.b16 %v5243
          %v5763 = vunpack.c.l.b16 %v5244
          %v5764 = vunpack.c.l.b16 %v5245
          %v5765 = vunpack.c.l.b16 %v5246
          %v5766 = vunpack.c.l.b16 %v5247
          %v5767 = vunpack.c.l.b16 %v5248
          %v5768 = vunpack.c.l.b16 %v5249
          %v5769 = vunpack.c.l.b16 %v5250
          %v5770 = vunpack.c.l.b16 %v5251
          %v5771 = vunpack.c.l.b16 %v5252
          %v5772 = vunpack.c.l.b16 %v5253
          %v5773 = vunpack.c.l.b16 %v5254
          %v5774 = vunpack.c.l.b16 %v5255
          %v5775 = vunpack.c.l.b16 %v5256
          %v5776 = vunpack.c.l.b16 %v5257
          %v5777 = vunpack.c.l.b16 %v5258
          %v5778 = vunpack.c.l.b16 %v5259
          %v5779 = vunpack.c.l.b16 %v5260
          %v5780 = vunpack.c.l.b16 %v5261
          %v5781 = vunpack.c.l.b16 %v5262
          %v5782 = vunpack.c.l.b16 %v5263
          %v5783 = vunpack.c.l.b16 %v5264
          %v5784 = vunpack.c.l.b16 %v5265
          %v5785 = vunpack.c.l.b16 %v5266
          %v5786 = vunpack.c.l.b16 %v5267
          %v5787 = vunpack.c.l.b16 %v5268
          %v5788 = vunpack.c.l.b16 %v5269
          %v5789 = vunpack.c.l.b16 %v5270
          %v5790 = vunpack.c.l.b16 %v5271
          %v5791 = vunpack.c.l.b16 %v5272
          %v5792 = vunpack.c.l.b16 %v5273
          %v5793 = vunpack.c.l.b16 %v5274
          %v5794 = vunpack.c.l.b16 %v5275
          %v5795 = vunpack.c.l.b16 %v5276
          %v5796 = vunpack.c.l.b16 %v5277
          %v5797 = vunpack.c.l.b16 %v5278
          %v5798 = vunpack.c.l.b16 %v5279
          %v5799 = vunpack.c.l.b16 %v5280
          %v5800 = vunpack.c.l.b16 %v5281
          %v5801 = vunpack.c.l.b16 %v5282
          %v5802 = vunpack.c.l.b16 %v5283
          %v5803 = vunpack.c.l.b16 %v5284
          %v5804 = vunpack.c.l.b16 %v5285
          %v5805 = vunpack.c.l.b16 %v5286
          %v5806 = vunpack.c.l.b16 %v5287
          %v5807 = vunpack.c.l.b16 %v5288
          %v5808 = vunpack.c.l.b16 %v5289
          %v5809 = vunpack.c.l.b16 %v5290
          %v5810 = vunpack.c.l.b16 %v5291
          %v5811 = vunpack.c.l.b16 %v5292
          %v5812 = vunpack.c.l.b16 %v5293
          %v5813 = vunpack.c.l.b16 %v5294
          %v5814 = vunpack.c.l.b16 %v5295
          %v5815 = vunpack.c.l.b16 %v5296
          %v5816 = vunpack.c.l.b16 %v5297
          %v5817 = vunpack.c.l.b16 %v5298
          %v5818 = vunpack.c.l.b16 %v5299
          %v5819 = vunpack.c.l.b16 %v5300
          %v5820 = vunpack.c.l.b16 %v5301
          %v5821 = vunpack.c.l.b16 %v5302
          %v5822 = vunpack.c.l.b16 %v5303
          %v5823 = vunpack.c.l.b16 %v5304
          %v5824 = vunpack.c.l.b16 %v5305
          %v5825 = vunpack.c.l.b16 %v5306
          %v5826 = vunpack.c.l.b16 %v5307
          %v5827 = vunpack.c.l.b16 %v5308
          %v5828 = vunpack.c.l.b16 %v5309
          %v5829 = vunpack.c.l.b16 %v5310
          %v5830 = vunpack.c.l.b16 %v5311
          %v5831 = vunpack.c.l.b16 %v5312
          %v5832 = vunpack.c.l.b16 %v5313
          %v5833 = vunpack.c.l.b16 %v5314
          %v5834 = vunpack.c.l.b16 %v5315
          %v5835 = vunpack.c.l.b16 %v5316
          %v5836 = vunpack.c.l.b16 %v5317
          %v5837 = vunpack.c.l.b16 %v5318
          %v5838 = vunpack.c.l.b16 %v5319
          %v5839 = vunpack.c.l.b16 %v5320
          %v5840 = vunpack.c.l.b16 %v5321
          %v5841 = vunpack.c.l.b16 %v5322
          %v5842 = vunpack.c.l.b16 %v5323
          %v5843 = vunpack.c.l.b16 %v5324
          %v5844 = vunpack.c.l.b16 %v5325
          %v5845 = vunpack.c.l.b16 %v5326
          %v5846 = vunpack.c.l.b16 %v5327
          %v5847 = vunpack.c.l.b16 %v5328
          %v5848 = vunpack.c.l.b16 %v5329
          %v5849 = vunpack.c.l.b16 %v5330
          %v5850 = vunpack.c.l.b16 %v5331
          %v5851 = vunpack.c.l.b16 %v5332
          %v5852 = vunpack.c.l.b16 %v5333
          %v5853 = vunpack.c.l.b16 %v5334
          %v5854 = vunpack.c.l.b16 %v5335
          %v5855 = vunpack.c.l.b16 %v5336
          %v5856 = vunpack.c.l.b16 %v5337
          %v5857 = vunpack.c.l.b16 %v5338
          %v5858 = vunpack.c.l.b16 %v5339
          %v5859 = vunpack.c.l.b16 %v5340
          %v5860 = vunpack.c.l.b16 %v5341
          %v5861 = vunpack.c.l.b16 %v5342
          %v5862 = vunpack.c.l.b16 %v5343
          %v5863 = vunpack.c.l.b16 %v5344
          %v5864 = vunpack.c.l.b16 %v5345
          %v5865 = vunpack.c.l.b16 %v5346
          %v5866 = vunpack.c.l.b16 %v5347
          %v5867 = vunpack.c.l.b16 %v5348
          %v5868 = vunpack.c.l.b16 %v5349
          %v5869 = vunpack.c.l.b16 %v5350
          %v5870 = vunpack.c.l.b16 %v5351
          %v5871 = vunpack.c.l.b16 %v5352
          %v5872 = vunpack.c.l.b16 %v5353
          %v5873 = vunpack.c.l.b16 %v5354
          %v5874 = vunpack.c.l.b16 %v5355
          %v5875 = vunpack.c.l.b16 %v5356
          %v5876 = vunpack.c.l.b16 %v5357
          %v5877 = vunpack.c.l.b16 %v5358
          %v5878 = vunpack.c.l.b16 %v5359
          %v5879 = vunpack.c.l.b16 %v5360
          %v5880 = vunpack.c.l.b16 %v5361
          %v5881 = vunpack.c.l.b16 %v5362
          %v5882 = vunpack.c.l.b16 %v5363
          %v5883 = vunpack.c.l.b16 %v5364
          %v5884 = vunpack.c.l.b16 %v5365
          %v5885 = vunpack.c.l.b16 %v5366
          %v5886 = vunpack.c.l.b16 %v5367
          %v5887 = vunpack.c.l.b16 %v5368
          %v5888 = vunpack.c.l.b16 %v5369
          %v5889 = vunpack.c.l.b16 %v5370
          %v5890 = vunpack.c.l.b16 %v5371
          %v5891 = vunpack.c.l.b16 %v5372
          %v5892 = vunpack.c.l.b16 %v5373
          %v5893 = vunpack.c.l.b16 %v5374
          %v5894 = vunpack.c.l.b16 %v5375
          %v5895 = vunpack.c.l.b16 %v5376
          %v5896 = vunpack.c.l.b16 %v5377
          %v5897 = vunpack.c.l.b16 %v5378
          %v5898 = vunpack.c.l.b16 %v5379
          %v5899 = vunpack.c.l.b16 %v5380
          %v5900 = vunpack.c.l.b16 %v5381
          %v5901 = vunpack.c.l.b16 %v5382
          %v5902 = vunpack.c.l.b16 %v5383
          %v5903 = vunpack.c.l.b16 %v5384
          %v5904 = vunpack.c.l.b16 %v5385
          %v5905 = vunpack.c.l.b16 %v5386
          %v5906 = vunpack.c.l.b16 %v5387
          %v5907 = vunpack.c.l.b16 %v5388
          %v5908 = vunpack.c.l.b16 %v5389
          %v5909 = vunpack.c.l.b16 %v5390
          %v5910 = vunpack.c.l.b16 %v5391
          %v5911 = vunpack.c.l.b16 %v5392
          %v5912 = vunpack.c.l.b16 %v5393
          %v5913 = vunpack.c.l.b16 %v5394
          %v5914 = vunpack.c.l.b16 %v5395
          %v5915 = vunpack.c.l.b16 %v5396
          %v5916 = vunpack.c.l.b16 %v5397
          %v5917 = vunpack.c.l.b16 %v5398
          %v5918 = vunpack.c.l.b16 %v5399
          %v5919 = vunpack.c.l.b16 %v5400
          %v5920 = vunpack.c.l.b16 %v5401
          %v5921 = vunpack.c.l.b16 %v5402
          %v5922 = vunpack.c.l.b16 %v5403
          %v5923 = vunpack.c.l.b16 %v5404
          %v5924 = vunpack.c.l.b16 %v5405
          %v5925 = vunpack.c.l.b16 %v5406
          %v5926 = vunpack.c.l.b16 %v5407
          %v5927 = vunpack.c.l.b16 %v5408
          %v5928 = vunpack.c.l.b16 %v5409
          %v5929 = vunpack.c.l.b16 %v5410
          %v5930 = vunpack.c.l.b16 %v5411
          %v5931 = vunpack.c.l.b16 %v5412
          %v5932 = vunpack.c.l.b16 %v5413
          %v5933 = vunpack.c.l.b16 %v5414
          %v5934 = vunpack.c.l.b16 %v5415
          %v5935 = vunpack.c.l.b16 %v5416
          %v5936 = vunpack.c.l.b16 %v5417
          %v5937 = vunpack.c.l.b16 %v5418
          %v5938 = vunpack.c.l.b16 %v5419
          %v5939 = vunpack.c.l.b16 %v5420
          %v5940 = vunpack.c.l.b16 %v5421
          %v5941 = vunpack.c.l.b16 %v5422
          %v5942 = vunpack.c.l.b16 %v5423
          %v5943 = vunpack.c.l.b16 %v5424
          %v5944 = vunpack.c.l.b16 %v5425
          %v5945 = vunpack.c.l.b16 %v5426
          %v5946 = vunpack.c.l.b16 %v5427
          %v5947 = vunpack.c.l.b16 %v5428
          %v5948 = vunpack.c.l.b16 %v5429
          %v5949 = vunpack.c.l.b16 %v5430
          %v5950 = vunpack.c.l.b16 %v5431
          %v5951 = vunpack.c.l.b16 %v5432
          %v5952 = vunpack.c.l.b16 %v5433
          %v5953 = vunpack.c.l.b16 %v5434
          %v5954 = vunpack.c.l.b16 %v5435
          %v5955 = vunpack.c.l.b16 %v5436
          %v5956 = vpack.c.b16 %v5701, %v5700
          %v5957 = vpack.c.b16 %v5703, %v5702
          %v5958 = vpack.c.b16 %v5705, %v5704
          %v5959 = vpack.c.b16 %v5707, %v5706
          %v5960 = vpack.c.b16 %v5709, %v5708
          %v5961 = vpack.c.b16 %v5711, %v5710
          %v5962 = vpack.c.b16 %v5713, %v5712
          %v5963 = vpack.c.b16 %v5715, %v5714
          %v5964 = vpack.c.b16 %v5717, %v5716
          %v5965 = vpack.c.b16 %v5719, %v5718
          %v5966 = vpack.c.b16 %v5721, %v5720
          %v5967 = vpack.c.b16 %v5723, %v5722
          %v5968 = vpack.c.b16 %v5725, %v5724
          %v5969 = vpack.c.b16 %v5727, %v5726
          %v5970 = vpack.c.b16 %v5729, %v5728
          %v5971 = vpack.c.b16 %v5731, %v5730
          %v5972 = vpack.c.b16 %v5733, %v5732
          %v5973 = vpack.c.b16 %v5735, %v5734
          %v5974 = vpack.c.b16 %v5737, %v5736
          %v5975 = vpack.c.b16 %v5739, %v5738
          %v5976 = vpack.c.b16 %v5741, %v5740
          %v5977 = vpack.c.b16 %v5743, %v5742
          %v5978 = vpack.c.b16 %v5745, %v5744
          %v5979 = vpack.c.b16 %v5747, %v5746
          %v5980 = vpack.c.b16 %v5749, %v5748
          %v5981 = vpack.c.b16 %v5751, %v5750
          %v5982 = vpack.c.b16 %v5753, %v5752
          %v5983 = vpack.c.b16 %v5755, %v5754
          %v5984 = vpack.c.b16 %v5757, %v5756
          %v5985 = vpack.c.b16 %v5759, %v5758
          %v5986 = vpack.c.b16 %v5761, %v5760
          %v5987 = vpack.c.b16 %v5763, %v5762
          %v5988 = vpack.c.b16 %v5765, %v5764
          %v5989 = vpack.c.b16 %v5767, %v5766
          %v5990 = vpack.c.b16 %v5769, %v5768
          %v5991 = vpack.c.b16 %v5771, %v5770
          %v5992 = vpack.c.b16 %v5773, %v5772
          %v5993 = vpack.c.b16 %v5775, %v5774
          %v5994 = vpack.c.b16 %v5777, %v5776
          %v5995 = vpack.c.b16 %v5779, %v5778
          %v5996 = vpack.c.b16 %v5781, %v5780
          %v5997 = vpack.c.b16 %v5783, %v5782
          %v5998 = vpack.c.b16 %v5785, %v5784
          %v5999 = vpack.c.b16 %v5787, %v5786
          %v6000 = vpack.c.b16 %v5789, %v5788
          %v6001 = vpack.c.b16 %v5791, %v5790
          %v6002 = vpack.c.b16 %v5793, %v5792
          %v6003 = vpack.c.b16 %v5795, %v5794
          %v6004 = vpack.c.b16 %v5797, %v5796
          %v6005 = vpack.c.b16 %v5799, %v5798
          %v6006 = vpack.c.b16 %v5801, %v5800
          %v6007 = vpack.c.b16 %v5803, %v5802
          %v6008 = vpack.c.b16 %v5805, %v5804
          %v6009 = vpack.c.b16 %v5807, %v5806
          %v6010 = vpack.c.b16 %v5809, %v5808
          %v6011 = vpack.c.b16 %v5811, %v5810
          %v6012 = vpack.c.b16 %v5813, %v5812
          %v6013 = vpack.c.b16 %v5815, %v5814
          %v6014 = vpack.c.b16 %v5817, %v5816
          %v6015 = vpack.c.b16 %v5819, %v5818
          %v6016 = vpack.c.b16 %v5821, %v5820
          %v6017 = vpack.c.b16 %v5823, %v5822
          %v6018 = vpack.c.b16 %v5825, %v5824
          %v6019 = vpack.c.b16 %v5827, %v5826
          %v6020 = vpack.c.b16 %v5829, %v5828
          %v6021 = vpack.c.b16 %v5831, %v5830
          %v6022 = vpack.c.b16 %v5833, %v5832
          %v6023 = vpack.c.b16 %v5835, %v5834
          %v6024 = vpack.c.b16 %v5837, %v5836
          %v6025 = vpack.c.b16 %v5839, %v5838
          %v6026 = vpack.c.b16 %v5841, %v5840
          %v6027 = vpack.c.b16 %v5843, %v5842
          %v6028 = vpack.c.b16 %v5845, %v5844
          %v6029 = vpack.c.b16 %v5847, %v5846
          %v6030 = vpack.c.b16 %v5849, %v5848
          %v6031 = vpack.c.b16 %v5851, %v5850
          %v6032 = vpack.c.b16 %v5853, %v5852
          %v6033 = vpack.c.b16 %v5855, %v5854
          %v6034 = vpack.c.b16 %v5857, %v5856
          %v6035 = vpack.c.b16 %v5859, %v5858
          %v6036 = vpack.c.b16 %v5861, %v5860
          %v6037 = vpack.c.b16 %v5863, %v5862
          %v6038 = vpack.c.b16 %v5865, %v5864
          %v6039 = vpack.c.b16 %v5867, %v5866
          %v6040 = vpack.c.b16 %v5869, %v5868
          %v6041 = vpack.c.b16 %v5871, %v5870
          %v6042 = vpack.c.b16 %v5873, %v5872
          %v6043 = vpack.c.b16 %v5875, %v5874
          %v6044 = vpack.c.b16 %v5877, %v5876
          %v6045 = vpack.c.b16 %v5879, %v5878
          %v6046 = vpack.c.b16 %v5881, %v5880
          %v6047 = vpack.c.b16 %v5883, %v5882
          %v6048 = vpack.c.b16 %v5885, %v5884
          %v6049 = vpack.c.b16 %v5887, %v5886
          %v6050 = vpack.c.b16 %v5889, %v5888
          %v6051 = vpack.c.b16 %v5891, %v5890
          %v6052 = vpack.c.b16 %v5893, %v5892
          %v6053 = vpack.c.b16 %v5895, %v5894
          %v6054 = vpack.c.b16 %v5897, %v5896
          %v6055 = vpack.c.b16 %v5899, %v5898
          %v6056 = vpack.c.b16 %v5901, %v5900
          %v6057 = vpack.c.b16 %v5903, %v5902
          %v6058 = vpack.c.b16 %v5905, %v5904
          %v6059 = vpack.c.b16 %v5907, %v5906
          %v6060 = vpack.c.b16 %v5909, %v5908
          %v6061 = vpack.c.b16 %v5911, %v5910
          %v6062 = vpack.c.b16 %v5913, %v5912
          %v6063 = vpack.c.b16 %v5915, %v5914
          %v6064 = vpack.c.b16 %v5917, %v5916
          %v6065 = vpack.c.b16 %v5919, %v5918
          %v6066 = vpack.c.b16 %v5921, %v5920
          %v6067 = vpack.c.b16 %v5923, %v5922
          %v6068 = vpack.c.b16 %v5925, %v5924
          %v6069 = vpack.c.b16 %v5927, %v5926
          %v6070 = vpack.c.b16 %v5929, %v5928
          %v6071 = vpack.c.b16 %v5931, %v5930
          %v6072 = vpack.c.b16 %v5933, %v5932
          %v6073 = vpack.c.b16 %v5935, %v5934
          %v6074 = vpack.c.b16 %v5937, %v5936
          %v6075 = vpack.c.b16 %v5939, %v5938
          %v6076 = vpack.c.b16 %v5941, %v5940
          %v6077 = vpack.c.b16 %v5943, %v5942
          %v6078 = vpack.c.b16 %v5945, %v5944
          %v6079 = vpack.c.b16 %v5947, %v5946
          %v6080 = vpack.c.b16 %v5949, %v5948
          %v6081 = vpack.c.b16 %v5951, %v5950
          %v6082 = vpack.c.b16 %v5953, %v5952
          %v6083 = vpack.c.b16 %v5955, %v5954
          %6212 = vmatprep.subr.bf16.mxu0 0
          %6213 = vmatpush1.bf16.msra.mxu0 %v5963
          %6214 = vmatprep.subr.bf16.mxu0 0
          %6215 = vmatpush1.bf16.msra.mxu0 %v5962
          %6216 = vmatprep.subr.bf16.mxu0 0
          %6217 = vmatpush1.bf16.msra.mxu0 %v5961
          %6218 = vmatprep.subr.bf16.mxu0 0
          %6219 = vmatpush1.bf16.msra.mxu0 %v5960
          %6220 = vmatprep.subr.bf16.mxu0 0
          %6221 = vmatpush1.bf16.msra.mxu0 %v5959
          %6222 = vmatprep.subr.bf16.mxu0 0
          %6223 = vmatpush1.bf16.msra.mxu0 %v5958
          %6224 = vmatprep.subr.bf16.mxu0 0
          %6225 = vmatpush1.bf16.msra.mxu0 %v5957
          %6226 = vmatprep.subr.bf16.mxu0 0
          %6227 = vmatpush1.bf16.msra.mxu0 %v5956
          %6228 = vmatprep.subr.bf16.mxu0 0
          %6229 = vmatpush2.bf16.msra.mxu0 %v5971
          %6230 = vmatprep.subr.bf16.mxu0 0
          %6231 = vmatpush2.bf16.msra.mxu0 %v5970
          %6232 = vmatprep.subr.bf16.mxu0 0
          %6233 = vmatpush2.bf16.msra.mxu0 %v5969
          %6234 = vmatprep.subr.bf16.mxu0 0
          %6235 = vmatpush2.bf16.msra.mxu0 %v5968
          %6236 = vmatprep.subr.bf16.mxu0 0
          %6237 = vmatpush2.bf16.msra.mxu0 %v5967
          %6238 = vmatprep.subr.bf16.mxu0 0
          %6239 = vmatpush2.bf16.msra.mxu0 %v5966
          %6240 = vmatprep.subr.bf16.mxu0 0
          %6241 = vmatpush2.bf16.msra.mxu0 %v5965
          %6242 = vmatprep.subr.bf16.mxu0 0
          %6243 = vmatpush2.bf16.msra.mxu0 %v5964
          %6244 = vmatprep.mubr.bf16.mxu0 %v5166
          %6245 = vmatmul.mubr.bf16.gmra.mxu0 %v5165
          %v6246 = vpop.f32.mrf.mxu0
          %v6247 = vadd.f32 %v5442, %v6246
          %v6248 = vpop.f32.mrf.mxu0
          %v6249 = vpop.f32.mrf.mxu0
          %v6250 = vpop.f32.mrf.mxu0
          %6251 = vdwg.mxu0
          %6252 = vmatprep.subr.bf16.mxu0 0
          %6253 = vmatpush1.bf16.msra.mxu0 %v5979
          %6254 = vmatprep.subr.bf16.mxu0 0
          %6255 = vmatpush1.bf16.msra.mxu0 %v5978
          %6256 = vmatprep.subr.bf16.mxu0 0
          %6257 = vmatpush1.bf16.msra.mxu0 %v5977
          %6258 = vmatprep.subr.bf16.mxu0 0
          %6259 = vmatpush1.bf16.msra.mxu0 %v5976
          %6260 = vmatprep.subr.bf16.mxu0 0
          %6261 = vmatpush1.bf16.msra.mxu0 %v5975
          %6262 = vmatprep.subr.bf16.mxu0 0
          %6263 = vmatpush1.bf16.msra.mxu0 %v5974
          %6264 = vmatprep.subr.bf16.mxu0 0
          %6265 = vmatpush1.bf16.msra.mxu0 %v5973
          %6266 = vmatprep.subr.bf16.mxu0 0
          %6267 = vmatpush1.bf16.msra.mxu0 %v5972
          %6268 = vmatprep.subr.bf16.mxu0 0
          %6269 = vmatpush2.bf16.msra.mxu0 %v5987
          %6270 = vmatprep.subr.bf16.mxu0 0
          %6271 = vmatpush2.bf16.msra.mxu0 %v5986
          %6272 = vmatprep.subr.bf16.mxu0 0
          %6273 = vmatpush2.bf16.msra.mxu0 %v5985
          %6274 = vmatprep.subr.bf16.mxu0 0
          %6275 = vmatpush2.bf16.msra.mxu0 %v5984
          %6276 = vmatprep.subr.bf16.mxu0 0
          %6277 = vmatpush2.bf16.msra.mxu0 %v5983
          %6278 = vmatprep.subr.bf16.mxu0 0
          %6279 = vmatpush2.bf16.msra.mxu0 %v5982
          %6280 = vmatprep.subr.bf16.mxu0 0
          %6281 = vmatpush2.bf16.msra.mxu0 %v5981
          %6282 = vmatprep.subr.bf16.mxu0 0
          %6283 = vmatpush2.bf16.msra.mxu0 %v5980
          %6284 = vmatprep.mubr.bf16.mxu0 %v5168
          %6285 = vmatmul.mubr.bf16.gmra.mxu0 %v5167
          %v6286 = vpop.f32.mrf.mxu0
          %v6287 = vadd.f32 %v6247, %v6286
          %v6288 = vpop.f32.mrf.mxu0
          %v6289 = vpop.f32.mrf.mxu0
          %v6290 = vpop.f32.mrf.mxu0
          %6291 = vdwg.mxu0
          %6292 = vmatprep.subr.bf16.mxu0 0
          %6293 = vmatpush1.bf16.msra.mxu0 %v5995
          %6294 = vmatprep.subr.bf16.mxu0 0
          %6295 = vmatpush1.bf16.msra.mxu0 %v5994
          %6296 = vmatprep.subr.bf16.mxu0 0
          %6297 = vmatpush1.bf16.msra.mxu0 %v5993
          %6298 = vmatprep.subr.bf16.mxu0 0
          %6299 = vmatpush1.bf16.msra.mxu0 %v5992
          %6300 = vmatprep.subr.bf16.mxu0 0
          %6301 = vmatpush1.bf16.msra.mxu0 %v5991
          %6302 = vmatprep.subr.bf16.mxu0 0
          %6303 = vmatpush1.bf16.msra.mxu0 %v5990
          %6304 = vmatprep.subr.bf16.mxu0 0
          %6305 = vmatpush1.bf16.msra.mxu0 %v5989
          %6306 = vmatprep.subr.bf16.mxu0 0
          %6307 = vmatpush1.bf16.msra.mxu0 %v5988
          %6308 = vmatprep.subr.bf16.mxu0 0
          %6309 = vmatpush2.bf16.msra.mxu0 %v6003
          %6310 = vmatprep.subr.bf16.mxu0 0
          %6311 = vmatpush2.bf16.msra.mxu0 %v6002
          %6312 = vmatprep.subr.bf16.mxu0 0
          %6313 = vmatpush2.bf16.msra.mxu0 %v6001
          %6314 = vmatprep.subr.bf16.mxu0 0
          %6315 = vmatpush2.bf16.msra.mxu0 %v6000
          %6316 = vmatprep.subr.bf16.mxu0 0
          %6317 = vmatpush2.bf16.msra.mxu0 %v5999
          %6318 = vmatprep.subr.bf16.mxu0 0
          %6319 = vmatpush2.bf16.msra.mxu0 %v5998
          %6320 = vmatprep.subr.bf16.mxu0 0
          %6321 = vmatpush2.bf16.msra.mxu0 %v5997
          %6322 = vmatprep.subr.bf16.mxu0 0
          %6323 = vmatpush2.bf16.msra.mxu0 %v5996
          %6324 = vmatprep.mubr.bf16.mxu0 %v5170
          %6325 = vmatmul.mubr.bf16.gmra.mxu0 %v5169
          %v6326 = vpop.f32.mrf.mxu0
          %v6327 = vadd.f32 %v6287, %v6326
          %v6328 = vpop.f32.mrf.mxu0
          %v6329 = vpop.f32.mrf.mxu0
          %v6330 = vpop.f32.mrf.mxu0
          %6331 = vdwg.mxu0
          %6332 = vmatprep.subr.bf16.mxu0 0
          %6333 = vmatpush1.bf16.msra.mxu0 %v6011
          %6334 = vmatprep.subr.bf16.mxu0 0
          %6335 = vmatpush1.bf16.msra.mxu0 %v6010
          %6336 = vmatprep.subr.bf16.mxu0 0
          %6337 = vmatpush1.bf16.msra.mxu0 %v6009
          %6338 = vmatprep.subr.bf16.mxu0 0
          %6339 = vmatpush1.bf16.msra.mxu0 %v6008
          %6340 = vmatprep.subr.bf16.mxu0 0
          %6341 = vmatpush1.bf16.msra.mxu0 %v6007
          %6342 = vmatprep.subr.bf16.mxu0 0
          %6343 = vmatpush1.bf16.msra.mxu0 %v6006
          %6344 = vmatprep.subr.bf16.mxu0 0
          %6345 = vmatpush1.bf16.msra.mxu0 %v6005
          %6346 = vmatprep.subr.bf16.mxu0 0
          %6347 = vmatpush1.bf16.msra.mxu0 %v6004
          %6348 = vmatprep.subr.bf16.mxu0 0
          %6349 = vmatpush2.bf16.msra.mxu0 %v6019
          %6350 = vmatprep.subr.bf16.mxu0 0
          %6351 = vmatpush2.bf16.msra.mxu0 %v6018
          %6352 = vmatprep.subr.bf16.mxu0 0
          %6353 = vmatpush2.bf16.msra.mxu0 %v6017
          %6354 = vmatprep.subr.bf16.mxu0 0
          %6355 = vmatpush2.bf16.msra.mxu0 %v6016
          %6356 = vmatprep.subr.bf16.mxu0 0
          %6357 = vmatpush2.bf16.msra.mxu0 %v6015
          %6358 = vmatprep.subr.bf16.mxu0 0
          %6359 = vmatpush2.bf16.msra.mxu0 %v6014
          %6360 = vmatprep.subr.bf16.mxu0 0
          %6361 = vmatpush2.bf16.msra.mxu0 %v6013
          %6362 = vmatprep.subr.bf16.mxu0 0
          %6363 = vmatpush2.bf16.msra.mxu0 %v6012
          %6364 = vmatprep.mubr.bf16.mxu0 %v5172
          %6365 = vmatmul.mubr.bf16.gmra.mxu0 %v5171
          %v6366 = vpop.f32.mrf.mxu0
          %v6367 = vadd.f32 %v6327, %v6366
          %v6368 = vpop.f32.mrf.mxu0
          %v6369 = vpop.f32.mrf.mxu0
          %v6370 = vpop.f32.mrf.mxu0
          %6371 = vdwg.mxu0
          %6372 = vmatprep.subr.bf16.mxu0 0
          %6373 = vmatpush1.bf16.msra.mxu0 %v6027
          %6374 = vmatprep.subr.bf16.mxu0 0
          %6375 = vmatpush1.bf16.msra.mxu0 %v6026
          %6376 = vmatprep.subr.bf16.mxu0 0
          %6377 = vmatpush1.bf16.msra.mxu0 %v6025
          %6378 = vmatprep.subr.bf16.mxu0 0
          %6379 = vmatpush1.bf16.msra.mxu0 %v6024
          %6380 = vmatprep.subr.bf16.mxu0 0
          %6381 = vmatpush1.bf16.msra.mxu0 %v6023
          %6382 = vmatprep.subr.bf16.mxu0 0
          %6383 = vmatpush1.bf16.msra.mxu0 %v6022
          %6384 = vmatprep.subr.bf16.mxu0 0
          %6385 = vmatpush1.bf16.msra.mxu0 %v6021
          %6386 = vmatprep.subr.bf16.mxu0 0
          %6387 = vmatpush1.bf16.msra.mxu0 %v6020
          %6388 = vmatprep.subr.bf16.mxu0 0
          %6389 = vmatpush2.bf16.msra.mxu0 %v6035
          %6390 = vmatprep.subr.bf16.mxu0 0
          %6391 = vmatpush2.bf16.msra.mxu0 %v6034
          %6392 = vmatprep.subr.bf16.mxu0 0
          %6393 = vmatpush2.bf16.msra.mxu0 %v6033
          %6394 = vmatprep.subr.bf16.mxu0 0
          %6395 = vmatpush2.bf16.msra.mxu0 %v6032
          %6396 = vmatprep.subr.bf16.mxu0 0
          %6397 = vmatpush2.bf16.msra.mxu0 %v6031
          %6398 = vmatprep.subr.bf16.mxu0 0
          %6399 = vmatpush2.bf16.msra.mxu0 %v6030
          %6400 = vmatprep.subr.bf16.mxu0 0
          %6401 = vmatpush2.bf16.msra.mxu0 %v6029
          %6402 = vmatprep.subr.bf16.mxu0 0
          %6403 = vmatpush2.bf16.msra.mxu0 %v6028
          %6404 = vmatprep.mubr.bf16.mxu0 %v5174
          %6405 = vmatmul.mubr.bf16.gmra.mxu0 %v5173
          %v6406 = vpop.f32.mrf.mxu0
          %v6407 = vadd.f32 %v6367, %v6406
          %v6408 = vpop.f32.mrf.mxu0
          %v6409 = vpop.f32.mrf.mxu0
          %v6410 = vpop.f32.mrf.mxu0
          %6411 = vdwg.mxu0
          %6412 = vmatprep.subr.bf16.mxu0 0
          %6413 = vmatpush1.bf16.msra.mxu0 %v6043
          %6414 = vmatprep.subr.bf16.mxu0 0
          %6415 = vmatpush1.bf16.msra.mxu0 %v6042
          %6416 = vmatprep.subr.bf16.mxu0 0
          %6417 = vmatpush1.bf16.msra.mxu0 %v6041
          %6418 = vmatprep.subr.bf16.mxu0 0
          %6419 = vmatpush1.bf16.msra.mxu0 %v6040
          %6420 = vmatprep.subr.bf16.mxu0 0
          %6421 = vmatpush1.bf16.msra.mxu0 %v6039
          %6422 = vmatprep.subr.bf16.mxu0 0
          %6423 = vmatpush1.bf16.msra.mxu0 %v6038
          %6424 = vmatprep.subr.bf16.mxu0 0
          %6425 = vmatpush1.bf16.msra.mxu0 %v6037
          %6426 = vmatprep.subr.bf16.mxu0 0
          %6427 = vmatpush1.bf16.msra.mxu0 %v6036
          %6428 = vmatprep.subr.bf16.mxu0 0
          %6429 = vmatpush2.bf16.msra.mxu0 %v6051
          %6430 = vmatprep.subr.bf16.mxu0 0
          %6431 = vmatpush2.bf16.msra.mxu0 %v6050
          %6432 = vmatprep.subr.bf16.mxu0 0
          %6433 = vmatpush2.bf16.msra.mxu0 %v6049
          %6434 = vmatprep.subr.bf16.mxu0 0
          %6435 = vmatpush2.bf16.msra.mxu0 %v6048
          %6436 = vmatprep.subr.bf16.mxu0 0
          %6437 = vmatpush2.bf16.msra.mxu0 %v6047
          %6438 = vmatprep.subr.bf16.mxu0 0
          %6439 = vmatpush2.bf16.msra.mxu0 %v6046
          %6440 = vmatprep.subr.bf16.mxu0 0
          %6441 = vmatpush2.bf16.msra.mxu0 %v6045
          %6442 = vmatprep.subr.bf16.mxu0 0
          %6443 = vmatpush2.bf16.msra.mxu0 %v6044
          %6444 = vmatprep.mubr.bf16.mxu0 %v5176
          %6445 = vmatmul.mubr.bf16.gmra.mxu0 %v5175
          %v6446 = vpop.f32.mrf.mxu0
          %v6447 = vadd.f32 %v6407, %v6446
          %v6448 = vpop.f32.mrf.mxu0
          %v6449 = vpop.f32.mrf.mxu0
          %v6450 = vpop.f32.mrf.mxu0
          %6451 = vdwg.mxu0
          %6452 = vmatprep.subr.bf16.mxu0 0
          %6453 = vmatpush1.bf16.msra.mxu0 %v6059
          %6454 = vmatprep.subr.bf16.mxu0 0
          %6455 = vmatpush1.bf16.msra.mxu0 %v6058
          %6456 = vmatprep.subr.bf16.mxu0 0
          %6457 = vmatpush1.bf16.msra.mxu0 %v6057
          %6458 = vmatprep.subr.bf16.mxu0 0
          %6459 = vmatpush1.bf16.msra.mxu0 %v6056
          %6460 = vmatprep.subr.bf16.mxu0 0
          %6461 = vmatpush1.bf16.msra.mxu0 %v6055
          %6462 = vmatprep.subr.bf16.mxu0 0
          %6463 = vmatpush1.bf16.msra.mxu0 %v6054
          %6464 = vmatprep.subr.bf16.mxu0 0
          %6465 = vmatpush1.bf16.msra.mxu0 %v6053
          %6466 = vmatprep.subr.bf16.mxu0 0
          %6467 = vmatpush1.bf16.msra.mxu0 %v6052
          %6468 = vmatprep.subr.bf16.mxu0 0
          %6469 = vmatpush2.bf16.msra.mxu0 %v6067
          %6470 = vmatprep.subr.bf16.mxu0 0
          %6471 = vmatpush2.bf16.msra.mxu0 %v6066
          %6472 = vmatprep.subr.bf16.mxu0 0
          %6473 = vmatpush2.bf16.msra.mxu0 %v6065
          %6474 = vmatprep.subr.bf16.mxu0 0
          %6475 = vmatpush2.bf16.msra.mxu0 %v6064
          %6476 = vmatprep.subr.bf16.mxu0 0
          %6477 = vmatpush2.bf16.msra.mxu0 %v6063
          %6478 = vmatprep.subr.bf16.mxu0 0
          %6479 = vmatpush2.bf16.msra.mxu0 %v6062
          %6480 = vmatprep.subr.bf16.mxu0 0
          %6481 = vmatpush2.bf16.msra.mxu0 %v6061
          %6482 = vmatprep.subr.bf16.mxu0 0
          %6483 = vmatpush2.bf16.msra.mxu0 %v6060
          %6484 = vmatprep.mubr.bf16.mxu0 %v5178
          %6485 = vmatmul.mubr.bf16.gmra.mxu0 %v5177
          %v6486 = vpop.f32.mrf.mxu0
          %v6487 = vadd.f32 %v6447, %v6486
          %v6488 = vpop.f32.mrf.mxu0
          %v6489 = vpop.f32.mrf.mxu0
          %v6490 = vpop.f32.mrf.mxu0
          %6491 = vdwg.mxu0
          %6492 = vmatprep.subr.bf16.mxu0 0
          %6493 = vmatpush1.bf16.msra.mxu0 %v6075
          %6494 = vmatprep.subr.bf16.mxu0 0
          %6495 = vmatpush1.bf16.msra.mxu0 %v6074
          %6496 = vmatprep.subr.bf16.mxu0 0
          %6497 = vmatpush1.bf16.msra.mxu0 %v6073
          %6498 = vmatprep.subr.bf16.mxu0 0
          %6499 = vmatpush1.bf16.msra.mxu0 %v6072
          %6500 = vmatprep.subr.bf16.mxu0 0
          %6501 = vmatpush1.bf16.msra.mxu0 %v6071
          %6502 = vmatprep.subr.bf16.mxu0 0
          %6503 = vmatpush1.bf16.msra.mxu0 %v6070
          %6504 = vmatprep.subr.bf16.mxu0 0
          %6505 = vmatpush1.bf16.msra.mxu0 %v6069
          %6506 = vmatprep.subr.bf16.mxu0 0
          %6507 = vmatpush1.bf16.msra.mxu0 %v6068
          %6508 = vmatprep.subr.bf16.mxu0 0
          %6509 = vmatpush2.bf16.msra.mxu0 %v6083
          %6510 = vmatprep.subr.bf16.mxu0 0
          %6511 = vmatpush2.bf16.msra.mxu0 %v6082
          %6512 = vmatprep.subr.bf16.mxu0 0
          %6513 = vmatpush2.bf16.msra.mxu0 %v6081
          %6514 = vmatprep.subr.bf16.mxu0 0
          %6515 = vmatpush2.bf16.msra.mxu0 %v6080
          %6516 = vmatprep.subr.bf16.mxu0 0
          %6517 = vmatpush2.bf16.msra.mxu0 %v6079
          %6518 = vmatprep.subr.bf16.mxu0 0
          %6519 = vmatpush2.bf16.msra.mxu0 %v6078
          %6520 = vmatprep.subr.bf16.mxu0 0
          %6521 = vmatpush2.bf16.msra.mxu0 %v6077
          %6522 = vmatprep.subr.bf16.mxu0 0
          %6523 = vmatpush2.bf16.msra.mxu0 %v6076
          %6524 = vmatprep.mubr.bf16.mxu0 %v5180
          %6525 = vmatmul.mubr.bf16.gmra.mxu0 %v5179
          %v6526 = vpop.f32.mrf.mxu0
          %v6527 = vadd.f32 %v6487, %v6526
          %v6528 = vpop.f32.mrf.mxu0
          %v6529 = vpop.f32.mrf.mxu0
          %v6530 = vpop.f32.mrf.mxu0
          %6531 = vdwg.mxu0
          %vm6532 = vcmask 64512
          %6533 = vst.msk [vmem:[%s420] sm:$0xff] %vm6532, %v6527
        $region108: #{gen_forward_pallas.1} parent=47 // pred_fallthru
          _
        %p6534 = scmp.lt.s32.totalorder %s29, 0
        %s6535 = scalar_select %p6534, %s29, 0
        %s6536 = smul.addr %s6535, 8
        %s6537 = scalar_lea.vmem %s7, %s6536
        // Predicated region
        $region109: #{gen_forward_pallas.1} parent=47 // pred_check
          %p6538 = pneg %p227
        $region110: #{gen_forward_pallas.1} parent=47 // pred_check_branch
          %6540 = sbr.rel (%p6538) target = $region112
        $region111: #{gen_forward_pallas.1} parent=47 // pred_region
          _
        $region112: #{gen_forward_pallas.1} parent=47 // pred_fallthru
          _
        // Predicated region
        $region113: #{gen_forward_pallas.1} parent=47 // pred_check
          %p6541 = pneg %p227
        $region114: #{gen_forward_pallas.1} parent=47 // pred_check_branch
          %6543 = sbr.rel (%p6541) target = $region116
        $region115: #{gen_forward_pallas.1} parent=47 // pred_region
          %p6544 = scmp.lt.s32.totalorder %s29, 0
          %s6545 = scalar_select %p6544, %s29, 0
          %s6546 = smul.addr %s6545, 8
          %s6547 = scalar_lea.vmem %s7, %s6546
        $region116: #{gen_forward_pallas.1} parent=47 // pred_fallthru
          _
      $region48: #{gen_forward_pallas.1} parent=5 // pred_fallthru
        _
      %p6548 = scmp.le.s32.totalorder 2, %s19
      // Predicated region
      $region117: #{gen_forward_pallas.1} parent=5 // pred_check
        %p6549 = pneg %p6548
      $region118: #{gen_forward_pallas.1} parent=5 // pred_check_branch
        %6551 = sbr.rel (%p6549) target = $region120
      $region119: #{gen_forward_pallas.1} parent=5 // pred_region
        %s6552 = ssub.s32 %s19, 2
      $region120: #{gen_forward_pallas.1} parent=5 // pred_fallthru
        _
    $region6: #{gen_forward_pallas.1} parent=1 // loop_footer
      %s23 = sadd.s32 1, %s19
    $region7: #{gen_forward_pallas.1} parent=1 // loop_footer_branch
      %18 = sbr.rel target = $region3
    $region8: #{gen_forward_pallas.1} parent=1 // loop_exit
      _
    %6553 = vsyncpa [#allocation5], 1
    %s6554 = scalar_lea.sflag [#allocation5], 1
    %6555 = vsyncpa %s6554, 1
    %6556 = vsyncpa [#allocation7], 1
    %6557 = vsyncpa [#allocation10], 1
    %s6558 = scalar_lea.sflag [#allocation10], 1
    %6559 = vsyncpa %s6558, 1
    %6560 = vsyncpa [#allocation13], 1

</llo_original>
